<compile_context>
chip_gen: v7x
topology: tpu7x:2x2x1
jax: 0.10.0
libtpu: 0.0.40
codegen_flags: <defaults>
</compile_context>

<pallas_src>
import numpy as np
import jax
import jax.numpy as jnp
from jax import lax
from jax.experimental import pallas as pl
from jax.experimental.pallas import tpu as pltpu


# ----------------------------------------------------------------------------
# Fused Pallas kernel: full InceptionBlock forward, one batch element per step
# ----------------------------------------------------------------------------
def _make_inception_block_kernel(L, C0, nf, ks_max):
    pad = (ks_max - 1) // 2
    nf4 = 4 * nf

    def module_branches(x_in, xb, wbr, wmp, shift, cin,
                        xbp_ref, im2col_ref, mpbuf_ref):
        """Fused 3-branch conv + maxpool/1x1 branch + BN-bias + ReLU.

        x_in : (L, cin) f32        module input (maxpool branch)
        xb   : (L, nf)  f32        bottleneck output (branch-conv input)
        wbr  : (ks_max*nf, 3*nf)   bf16, BN-scale folded, zero-padded filters
        wmp  : (cin, nf)           bf16, BN-scale folded 1x1-after-maxpool
        shift: (1, 4*nf) f32       BN shift
        """
        # --- im2col for the fused branch convs, built tap-by-tap into scratch
        xbp_ref[pl.ds(pad, L), :] = xb                           # pad rows stay zero
        for k in range(ks_max):
            im2col_ref[:, pl.ds(k * nf, nf)] = (
                xbp_ref[pl.ds(k, L), :].astype(jnp.bfloat16))
        y_br = jnp.dot(im2col_ref[...], wbr,
                       preferred_element_type=jnp.float32)       # (L, 3*nf)

        # --- MaxPool1d(kernel=3, stride=1, padding=1) + 1x1 conv branch
        mpbuf_ref[pl.ds(1, L), :cin] = x_in                      # pad rows stay -inf
        mp = jnp.maximum(
            jnp.maximum(mpbuf_ref[pl.ds(0, L), :cin],
                        mpbuf_ref[pl.ds(1, L), :cin]),
            mpbuf_ref[pl.ds(2, L), :cin])
        y_mp = jnp.dot(mp.astype(jnp.bfloat16), wmp,
                       preferred_element_type=jnp.float32)       # (L, nf)

        # BN scale already folded into the weights -> bias add + ReLU only
        y = jnp.concatenate([y_br, y_mp], axis=-1)               # (L, 4*nf)
        return jnp.maximum(y + shift, 0.0)

    def kernel(x_ref,
               wb1_ref, wbr1_ref, wmp1_ref, sh1_ref,
               wb2_ref, wbr2_ref, wmp2_ref, sh2_ref,
               wb3_ref, wbr3_ref, wmp3_ref, sh3_ref,
               scsh_ref,
               o_ref,
               xbp_ref, im2col_ref, mpbuf_ref):
        # (re)initialize the padded scratches every grid step (megacore-safe;
        # data rows are overwritten per module, pad rows must stay 0 / -inf)
        xbp_ref[...] = jnp.zeros(xbp_ref.shape, xbp_ref.dtype)
        mpbuf_ref[...] = jnp.full(mpbuf_ref.shape, -jnp.inf, mpbuf_ref.dtype)

        x = x_ref[0]                                             # (L, C0) f32
        x_bf = x.astype(jnp.bfloat16)

        # --- module 1; the residual-shortcut 1x1 conv is fused into this dot
        h0 = jnp.dot(x_bf, wb1_ref[...],
                     preferred_element_type=jnp.float32)         # (L, nf + 4*nf)
        xb = h0[:, :nf]                                          # bottleneck out
        sc = h0[:, nf:]                                          # shortcut (BN scale folded)
        h = module_branches(x, xb, wbr1_ref[...], wmp1_ref[...], sh1_ref[...],
                            C0, xbp_ref, im2col_ref, mpbuf_ref)

        # --- module 2
        xb = jnp.dot(h.astype(jnp.bfloat16), wb2_ref[...],
                     preferred_element_type=jnp.float32)
        h = module_branches(h, xb, wbr2_ref[...], wmp2_ref[...], sh2_ref[...],
                            nf4, xbp_ref, im2col_ref, mpbuf_ref)

        # --- module 3
        xb = jnp.dot(h.astype(jnp.bfloat16), wb3_ref[...],
                     preferred_element_type=jnp.float32)
        h = module_branches(h, xb, wbr3_ref[...], wmp3_ref[...], sh3_ref[...],
                            nf4, xbp_ref, im2col_ref, mpbuf_ref)

        # --- residual add + final ReLU
        o_ref[0] = jnp.maximum(h + sc + scsh_ref[...], 0.0).astype(o_ref.dtype)

    return kernel


# ----------------------------------------------------------------------------
# Wrapper: weight prep (BN folding, shortcut fusion, bf16 cast) + pallas_call
# ----------------------------------------------------------------------------
def _prep_branch_weights(w_convs, ks_max, bn_scale_branches):
    """Zero-pad each (k, nf, nf) filter to ks_max (centered), concat along Cout,
    fold the BN scale into the output columns, flatten for the im2col matmul."""
    mats = []
    for w in w_convs:
        k = w.shape[0]
        p = (ks_max - k) // 2
        mats.append(jnp.pad(w, ((p, p), (0, 0), (0, 0))))
    wbr = jnp.concatenate(mats, axis=-1)                       # (ks_max, nf, 3*nf)
    ks_, nf_, co = wbr.shape
    wbr = wbr.reshape(ks_ * nf_, co) * bn_scale_branches       # fold BN scale (f32)
    return wbr.astype(jnp.bfloat16)


def inception_block_pallas(x, params):
    """x: (N, L, C0) f32 -> (N, L, 4*nf) f32."""
    N, L, C0 = x.shape
    nf = params["modules"][0]["w_bottleneck"].shape[-1]
    nf3, nf4 = 3 * nf, 4 * nf
    ks_max = max(w.shape[0] for w in params["modules"][0]["w_convs"])
    pad = (ks_max - 1) // 2
    cmax = max(C0, nf4)

    # ---- wrapper-side weight prep: fold BN scales, fuse shortcut, cast bf16 ----
    inputs = [x]
    for m_idx, p in enumerate(params["modules"]):
        scale = p["bn_scale"]                                   # (1, 4*nf) f32
        wb = p["w_bottleneck"][0]                               # (Cin, nf)
        if m_idx == 0:
            # residual-shortcut 1x1 conv (BN scale folded) fused into module-1's
            # bottleneck matmul: one dot over x yields both results.
            wsc = params["w_shortcut"][0] * params["sc_scale"]  # (C0, 4*nf)
            wb = jnp.concatenate([wb, wsc], axis=-1)            # (C0, 5*nf)
        inputs += [wb.astype(jnp.bfloat16),
                   _prep_branch_weights(p["w_convs"], ks_max, scale[:, :nf3]),
                   (p["w_mp"] * scale[:, nf3:]).astype(jnp.bfloat16),
                   p["bn_shift"]]                               # (1, 4*nf) f32
    inputs += [params["sc_shift"]]                              # (1, 4*nf) f32

    def _resident(a):   # weights / shifts: constant block index -> stay in VMEM
        return pl.BlockSpec(a.shape, lambda i, _r=a.ndim: (0,) * _r)

    out = pl.pallas_call(
        _make_inception_block_kernel(L, C0, nf, ks_max),
        out_shape=jax.ShapeDtypeStruct((N, L, nf4), jnp.float32),
        grid=(N,),
        in_specs=[pl.BlockSpec((1, L, C0), lambda i: (i, 0, 0))]
                 + [_resident(a) for a in inputs[1:]],
        out_specs=pl.BlockSpec((1, L, nf4), lambda i: (i, 0, 0)),
        scratch_shapes=[
            pltpu.VMEM((L + 2 * pad, nf), jnp.float32),      # zero-padded bottleneck out
            pltpu.VMEM((L, ks_max * nf), jnp.bfloat16),      # im2col slab (tap-by-tap)
            pltpu.VMEM((L + 2, cmax), jnp.float32),          # -inf padded maxpool input
        ],
        compiler_params=pltpu.CompilerParams(
            dimension_semantics=("parallel",),
            vmem_limit_bytes=32 * 1024 * 1024),
    )(*inputs)
    return out


# ----------------------------------------------------------------------------
# Pure-JAX reference (correctness check only)
# ----------------------------------------------------------------------------
def _ref_conv1d_same(x, w):
    if w.ndim == 2:
        w = w[None]
    return lax.conv_general_dilated(
        x, w, window_strides=(1,), padding="SAME",
        dimension_numbers=("NWC", "WIO", "NWC"))


def _ref_maxpool3(x):
    xp = jnp.pad(x, ((0, 0), (1, 1), (0, 0)), constant_values=-jnp.inf)
    return jnp.maximum(jnp.maximum(xp[:, :-2], xp[:, 1:-1]), xp[:, 2:])


def _ref_inception_module(x, p):
    xb = _ref_conv1d_same(x, p["w_bottleneck"])
    ys = [_ref_conv1d_same(xb, w) for w in p["w_convs"]]
    y_mp = _ref_conv1d_same(_ref_maxpool3(x), p["w_mp"][None])
    y = jnp.concatenate(ys + [y_mp], axis=-1)
    return jnp.maximum(y * p["bn_scale"] + p["bn_shift"], 0.0)


def inception_block_ref(x, params):
    res = x
    h = x
    for p in params["modules"]:
        h = _ref_inception_module(h, p)
    sc = _ref_conv1d_same(res, params["w_shortcut"])
    return jnp.maximum(h + sc * params["sc_scale"] + params["sc_shift"], 0.0)


# ----------------------------------------------------------------------------
# Deterministic parameter init
# ----------------------------------------------------------------------------
def _conv_w(key, k, cin, cout):
    return jax.random.normal(key, (k, cin, cout), jnp.float32) / np.sqrt(k * cin)


def _bn_params(key, c, eps=1e-5):
    k1, k2, k3, k4 = jax.random.split(key, 4)
    gamma = 1.0 + 0.1 * jax.random.normal(k1, (c,), jnp.float32)
    beta = 0.1 * jax.random.normal(k2, (c,), jnp.float32)
    mean = 0.1 * jax.random.normal(k3, (c,), jnp.float32)
    var = 1.0 + 0.1 * jnp.abs(jax.random.normal(k4, (c,), jnp.float32))
    scale = gamma / jnp.sqrt(var + eps)
    shift = beta - mean * scale
    return scale[None, :], shift[None, :]


def init_module_params(key, ni, nf, kss):
    keys = jax.random.split(key, 6)
    w_bottleneck = _conv_w(keys[0], 1, ni, nf)                  # ks=1 bottleneck
    w_convs = [_conv_w(keys[1 + i], k, nf, nf) for i, k in enumerate(kss)]
    w_mp = _conv_w(keys[4], 1, ni, nf)[0]                       # (Cin, nf) 1x1 after maxpool
    bn_scale, bn_shift = _bn_params(keys[5], nf * 4)
    return dict(w_bottleneck=w_bottleneck, w_convs=w_convs, w_mp=w_mp,
                bn_scale=bn_scale, bn_shift=bn_shift)


def init_block_params(key, ni, nf, ks=40):
    kss = [ks // (2 ** i) for i in range(3)]
    kss = [k if k % 2 != 0 else k - 1 for k in kss]             # -> [39, 19, 9]
    k1, k2, k3, k4 = jax.random.split(key, 4)
    modules = [init_module_params(k1, ni, nf, kss),
               init_module_params(k2, nf * 4, nf, kss),
               init_module_params(k3, nf * 4, nf, kss)]
    k4a, k4b = jax.random.split(k4)
    w_shortcut = _conv_w(k4a, 1, ni, nf * 4)                    # ni != nf*4 -> ConvBlock (1x1+BN)
    sc_scale, sc_shift = _bn_params(k4b, nf * 4)
    return dict(modules=modules, w_shortcut=w_shortcut,
                sc_scale=sc_scale, sc_shift=sc_shift)


# ----------------------------------------------------------------------------
if __name__ == "__main__":
    key = jax.random.PRNGKey(0)
    kx, kp = jax.random.split(key)

    N, C, L = 2, 4, 16          # PyTorch input layout (N, C, L)
    nf = 8                      # hidden width; concat channels = 4*nf = 32

    x_ncl = jax.random.normal(kx, (N, C, L), jnp.float32)
    x = jnp.transpose(x_ncl, (0, 2, 1))                         # -> (N, L, C)

    params = init_block_params(kp, ni=C, nf=nf, ks=40)

    fwd = jax.jit(lambda xx: inception_block_pallas(xx, params))
    out = jax.block_until_ready(fwd(x))
    assert out.shape == (N, L, 4 * nf)

    ref = inception_block_ref(x, params)
    # bf16 MXU operands (f32 accumulation) -> looser tolerance than pure f32
    np.testing.assert_allclose(np.asarray(out), np.asarray(ref),
                               rtol=5e-2, atol=5e-2)

    print("KERNEL_OK")
</pallas_src>

<mosaic_0001>
module attributes {stable_mosaic.version = 11 : i64} {
  func.func @kernel(%arg0: i32, %arg1: memref<1x16x4xf32, #tpu.memory_space<vmem>>, %arg2: memref<4x40xbf16, #tpu.memory_space<vmem>>, %arg3: memref<312x24xbf16, #tpu.memory_space<vmem>>, %arg4: memref<4x8xbf16, #tpu.memory_space<vmem>>, %arg5: memref<1x32xf32, #tpu.memory_space<vmem>>, %arg6: memref<32x8xbf16, #tpu.memory_space<vmem>>, %arg7: memref<312x24xbf16, #tpu.memory_space<vmem>>, %arg8: memref<32x8xbf16, #tpu.memory_space<vmem>>, %arg9: memref<1x32xf32, #tpu.memory_space<vmem>>, %arg10: memref<32x8xbf16, #tpu.memory_space<vmem>>, %arg11: memref<312x24xbf16, #tpu.memory_space<vmem>>, %arg12: memref<32x8xbf16, #tpu.memory_space<vmem>>, %arg13: memref<1x32xf32, #tpu.memory_space<vmem>>, %arg14: memref<1x32xf32, #tpu.memory_space<vmem>>, %arg15: memref<1x16x32xf32, #tpu.memory_space<vmem>>, %arg16: memref<54x8xf32, #tpu.memory_space<vmem>>, %arg17: memref<16x312xbf16, #tpu.memory_space<vmem>>, %arg18: memref<18x32xf32, #tpu.memory_space<vmem>>) attributes {dimension_semantics = [#tpu.dimension_semantics<parallel>], iteration_bounds = array<i64: 2>, scalar_prefetch = 0 : i64, scratch_operands = 3 : i64, tpu.core_type = #tpu.core_type<tc>, window_params = [{transform_indices = @transform_0, window_bounds = array<i64: 1, 16, 4>}, {pipeline_mode = #tpu.pipeline_mode<synchronous>, transform_indices = @transform_1, window_bounds = array<i64: 4, 40>}, {pipeline_mode = #tpu.pipeline_mode<synchronous>, transform_indices = @transform_2, window_bounds = array<i64: 312, 24>}, {pipeline_mode = #tpu.pipeline_mode<synchronous>, transform_indices = @transform_3, window_bounds = array<i64: 4, 8>}, {pipeline_mode = #tpu.pipeline_mode<synchronous>, transform_indices = @transform_4, window_bounds = array<i64: 1, 32>}, {pipeline_mode = #tpu.pipeline_mode<synchronous>, transform_indices = @transform_5, window_bounds = array<i64: 32, 8>}, {pipeline_mode = #tpu.pipeline_mode<synchronous>, transform_indices = @transform_6, window_bounds = array<i64: 312, 24>}, {pipeline_mode = #tpu.pipeline_mode<synchronous>, transform_indices = @transform_7, window_bounds = array<i64: 32, 8>}, {pipeline_mode = #tpu.pipeline_mode<synchronous>, transform_indices = @transform_8, window_bounds = array<i64: 1, 32>}, {pipeline_mode = #tpu.pipeline_mode<synchronous>, transform_indices = @transform_9, window_bounds = array<i64: 32, 8>}, {pipeline_mode = #tpu.pipeline_mode<synchronous>, transform_indices = @transform_10, window_bounds = array<i64: 312, 24>}, {pipeline_mode = #tpu.pipeline_mode<synchronous>, transform_indices = @transform_11, window_bounds = array<i64: 32, 8>}, {pipeline_mode = #tpu.pipeline_mode<synchronous>, transform_indices = @transform_12, window_bounds = array<i64: 1, 32>}, {pipeline_mode = #tpu.pipeline_mode<synchronous>, transform_indices = @transform_13, window_bounds = array<i64: 1, 32>}, {transform_indices = @transform_14, window_bounds = array<i64: 1, 16, 32>}]} {
    %cst = arith.constant 0.000000e+00 : f32
    %0 = vector.broadcast %cst : f32 to vector<54x8xf32>
    %c0 = arith.constant 0 : index
    %c0_0 = arith.constant 0 : index
    %1 = vector.load %arg16[%c0, %c0_0] : memref<54x8xf32, #tpu.memory_space<vmem>>, vector<54x8xf32>
    tpu.vector_store %arg16[%c0, %c0_0], %0 {strides = array<i32>} : memref<54x8xf32, #tpu.memory_space<vmem>>, vector<54x8xf32>,
    %cst_1 = arith.constant 0xFF800000 : f32
    %2 = vector.broadcast %cst_1 : f32 to vector<18x32xf32>
    %c0_2 = arith.constant 0 : index
    %c0_3 = arith.constant 0 : index
    %3 = vector.load %arg18[%c0_2, %c0_3] : memref<18x32xf32, #tpu.memory_space<vmem>>, vector<18x32xf32>
    tpu.vector_store %arg18[%c0_2, %c0_3], %2 {strides = array<i32>} : memref<18x32xf32, #tpu.memory_space<vmem>>, vector<18x32xf32>,
    %c0_4 = arith.constant 0 : index
    %c0_5 = arith.constant 0 : index
    %c0_6 = arith.constant 0 : index
    %4 = vector.load %arg1[%c0_4, %c0_5, %c0_6] : memref<1x16x4xf32, #tpu.memory_space<vmem>>, vector<1x16x4xf32>
    %5 = vector.shape_cast %4 : vector<1x16x4xf32> to vector<16x4xf32>
    %6 = arith.truncf %5 : vector<16x4xf32> to vector<16x4xbf16>
    %c0_7 = arith.constant 0 : index
    %c0_8 = arith.constant 0 : index
    %7 = vector.load %arg2[%c0_7, %c0_8] : memref<4x40xbf16, #tpu.memory_space<vmem>>, vector<4x40xbf16>
    %cst_9 = arith.constant dense<0.000000e+00> : vector<16x40xf32>
    %8 = tpu.matmul %6, %7, %cst_9 {dimension_numbers = #tpu.dot_dimension_numbers<[1], [0], [0], [1], [0, 0, 1, 1], [], []>} : vector<16x4xbf16>, vector<4x40xbf16>, vector<16x40xf32> -> vector<16x40xf32>
    %9 = vector.extract_strided_slice %8 {offsets = [0, 0], sizes = [16, 8], strides = [1, 1]} : vector<16x40xf32> to vector<16x8xf32>
    %10 = vector.extract_strided_slice %8 {offsets = [0, 8], sizes = [16, 32], strides = [1, 1]} : vector<16x40xf32> to vector<16x32xf32>
    %c0_10 = arith.constant 0 : index
    %c0_11 = arith.constant 0 : index
    %11 = vector.load %arg3[%c0_10, %c0_11] : memref<312x24xbf16, #tpu.memory_space<vmem>>, vector<312x24xbf16>
    %c0_12 = arith.constant 0 : index
    %c0_13 = arith.constant 0 : index
    %12 = vector.load %arg4[%c0_12, %c0_13] : memref<4x8xbf16, #tpu.memory_space<vmem>>, vector<4x8xbf16>
    %c0_14 = arith.constant 0 : index
    %c0_15 = arith.constant 0 : index
    %13 = vector.load %arg5[%c0_14, %c0_15] : memref<1x32xf32, #tpu.memory_space<vmem>>, vector<1x32xf32>
    %c19 = arith.constant 19 : index
    %c0_16 = arith.constant 0 : index
    %14 = vector.load %arg16[%c19, %c0_16] : memref<54x8xf32, #tpu.memory_space<vmem>>, vector<16x8xf32>
    tpu.vector_store %arg16[%c19, %c0_16], %9 {strides = array<i32>} : memref<54x8xf32, #tpu.memory_space<vmem>>, vector<16x8xf32>,
    %c0_17 = arith.constant 0 : index
    %c0_18 = arith.constant 0 : index
    %15 = vector.load %arg16[%c0_17, %c0_18] : memref<54x8xf32, #tpu.memory_space<vmem>>, vector<16x8xf32>
    %16 = arith.truncf %15 : vector<16x8xf32> to vector<16x8xbf16>
    %c0_19 = arith.constant 0 : index
    %c0_20 = arith.constant 0 : index
    %17 = vector.load %arg17[%c0_19, %c0_20] : memref<16x312xbf16, #tpu.memory_space<vmem>>, vector<16x8xbf16>
    tpu.vector_store %arg17[%c0_19, %c0_20], %16 {strides = array<i32>} : memref<16x312xbf16, #tpu.memory_space<vmem>>, vector<16x8xbf16>,
    %c1 = arith.constant 1 : index
    %c0_21 = arith.constant 0 : index
    %18 = vector.load %arg16[%c1, %c0_21] : memref<54x8xf32, #tpu.memory_space<vmem>>, vector<16x8xf32>
    %19 = arith.truncf %18 : vector<16x8xf32> to vector<16x8xbf16>
    %c0_22 = arith.constant 0 : index
    %c8 = arith.constant 8 : index
    %20 = vector.load %arg17[%c0_22, %c8] : memref<16x312xbf16, #tpu.memory_space<vmem>>, vector<16x8xbf16>
    tpu.vector_store %arg17[%c0_22, %c8], %19 {strides = array<i32>} : memref<16x312xbf16, #tpu.memory_space<vmem>>, vector<16x8xbf16>,
    %c2 = arith.constant 2 : index
    %c0_23 = arith.constant 0 : index
    %21 = vector.load %arg16[%c2, %c0_23] : memref<54x8xf32, #tpu.memory_space<vmem>>, vector<16x8xf32>
    %22 = arith.truncf %21 : vector<16x8xf32> to vector<16x8xbf16>
    %c0_24 = arith.constant 0 : index
    %c16 = arith.constant 16 : index
    %23 = vector.load %arg17[%c0_24, %c16] : memref<16x312xbf16, #tpu.memory_space<vmem>>, vector<16x8xbf16>
    tpu.vector_store %arg17[%c0_24, %c16], %22 {strides = array<i32>} : memref<16x312xbf16, #tpu.memory_space<vmem>>, vector<16x8xbf16>,
    %c3 = arith.constant 3 : index
    %c0_25 = arith.constant 0 : index
    %24 = vector.load %arg16[%c3, %c0_25] : memref<54x8xf32, #tpu.memory_space<vmem>>, vector<16x8xf32>
    %25 = arith.truncf %24 : vector<16x8xf32> to vector<16x8xbf16>
    %c0_26 = arith.constant 0 : index
    %c24 = arith.constant 24 : index
    %26 = vector.load %arg17[%c0_26, %c24] : memref<16x312xbf16, #tpu.memory_space<vmem>>, vector<16x8xbf16>
    tpu.vector_store %arg17[%c0_26, %c24], %25 {strides = array<i32>} : memref<16x312xbf16, #tpu.memory_space<vmem>>, vector<16x8xbf16>,
    %c4 = arith.constant 4 : index
    %c0_27 = arith.constant 0 : index
    %27 = vector.load %arg16[%c4, %c0_27] : memref<54x8xf32, #tpu.memory_space<vmem>>, vector<16x8xf32>
    %28 = arith.truncf %27 : vector<16x8xf32> to vector<16x8xbf16>
    %c0_28 = arith.constant 0 : index
    %c32 = arith.constant 32 : index
    %29 = vector.load %arg17[%c0_28, %c32] : memref<16x312xbf16, #tpu.memory_space<vmem>>, vector<16x8xbf16>
    tpu.vector_store %arg17[%c0_28, %c32], %28 {strides = array<i32>} : memref<16x312xbf16, #tpu.memory_space<vmem>>, vector<16x8xbf16>,
    %c5 = arith.constant 5 : index
    %c0_29 = arith.constant 0 : index
    %30 = vector.load %arg16[%c5, %c0_29] : memref<54x8xf32, #tpu.memory_space<vmem>>, vector<16x8xf32>
    %31 = arith.truncf %30 : vector<16x8xf32> to vector<16x8xbf16>
    %c0_30 = arith.constant 0 : index
    %c40 = arith.constant 40 : index
    %32 = vector.load %arg17[%c0_30, %c40] : memref<16x312xbf16, #tpu.memory_space<vmem>>, vector<16x8xbf16>
    tpu.vector_store %arg17[%c0_30, %c40], %31 {strides = array<i32>} : memref<16x312xbf16, #tpu.memory_space<vmem>>, vector<16x8xbf16>,
    %c6 = arith.constant 6 : index
    %c0_31 = arith.constant 0 : index
    %33 = vector.load %arg16[%c6, %c0_31] : memref<54x8xf32, #tpu.memory_space<vmem>>, vector<16x8xf32>
    %34 = arith.truncf %33 : vector<16x8xf32> to vector<16x8xbf16>
    %c0_32 = arith.constant 0 : index
    %c48 = arith.constant 48 : index
    %35 = vector.load %arg17[%c0_32, %c48] : memref<16x312xbf16, #tpu.memory_space<vmem>>, vector<16x8xbf16>
    tpu.vector_store %arg17[%c0_32, %c48], %34 {strides = array<i32>} : memref<16x312xbf16, #tpu.memory_space<vmem>>, vector<16x8xbf16>,
    %c7 = arith.constant 7 : index
    %c0_33 = arith.constant 0 : index
    %36 = vector.load %arg16[%c7, %c0_33] : memref<54x8xf32, #tpu.memory_space<vmem>>, vector<16x8xf32>
    %37 = arith.truncf %36 : vector<16x8xf32> to vector<16x8xbf16>
    %c0_34 = arith.constant 0 : index
    %c56 = arith.constant 56 : index
    %38 = vector.load %arg17[%c0_34, %c56] : memref<16x312xbf16, #tpu.memory_space<vmem>>, vector<16x8xbf16>
    tpu.vector_store %arg17[%c0_34, %c56], %37 {strides = array<i32>} : memref<16x312xbf16, #tpu.memory_space<vmem>>, vector<16x8xbf16>,
    %c8_35 = arith.constant 8 : index
    %c0_36 = arith.constant 0 : index
    %39 = vector.load %arg16[%c8_35, %c0_36] : memref<54x8xf32, #tpu.memory_space<vmem>>, vector<16x8xf32>
    %40 = arith.truncf %39 : vector<16x8xf32> to vector<16x8xbf16>
    %c0_37 = arith.constant 0 : index
    %c64 = arith.constant 64 : index
    %41 = vector.load %arg17[%c0_37, %c64] : memref<16x312xbf16, #tpu.memory_space<vmem>>, vector<16x8xbf16>
    tpu.vector_store %arg17[%c0_37, %c64], %40 {strides = array<i32>} : memref<16x312xbf16, #tpu.memory_space<vmem>>, vector<16x8xbf16>,
    %c9 = arith.constant 9 : index
    %c0_38 = arith.constant 0 : index
    %42 = vector.load %arg16[%c9, %c0_38] : memref<54x8xf32, #tpu.memory_space<vmem>>, vector<16x8xf32>
    %43 = arith.truncf %42 : vector<16x8xf32> to vector<16x8xbf16>
    %c0_39 = arith.constant 0 : index
    %c72 = arith.constant 72 : index
    %44 = vector.load %arg17[%c0_39, %c72] : memref<16x312xbf16, #tpu.memory_space<vmem>>, vector<16x8xbf16>
    tpu.vector_store %arg17[%c0_39, %c72], %43 {strides = array<i32>} : memref<16x312xbf16, #tpu.memory_space<vmem>>, vector<16x8xbf16>,
    %c10 = arith.constant 10 : index
    %c0_40 = arith.constant 0 : index
    %45 = vector.load %arg16[%c10, %c0_40] : memref<54x8xf32, #tpu.memory_space<vmem>>, vector<16x8xf32>
    %46 = arith.truncf %45 : vector<16x8xf32> to vector<16x8xbf16>
    %c0_41 = arith.constant 0 : index
    %c80 = arith.constant 80 : index
    %47 = vector.load %arg17[%c0_41, %c80] : memref<16x312xbf16, #tpu.memory_space<vmem>>, vector<16x8xbf16>
    tpu.vector_store %arg17[%c0_41, %c80], %46 {strides = array<i32>} : memref<16x312xbf16, #tpu.memory_space<vmem>>, vector<16x8xbf16>,
    %c11 = arith.constant 11 : index
    %c0_42 = arith.constant 0 : index
    %48 = vector.load %arg16[%c11, %c0_42] : memref<54x8xf32, #tpu.memory_space<vmem>>, vector<16x8xf32>
    %49 = arith.truncf %48 : vector<16x8xf32> to vector<16x8xbf16>
    %c0_43 = arith.constant 0 : index
    %c88 = arith.constant 88 : index
    %50 = vector.load %arg17[%c0_43, %c88] : memref<16x312xbf16, #tpu.memory_space<vmem>>, vector<16x8xbf16>
    tpu.vector_store %arg17[%c0_43, %c88], %49 {strides = array<i32>} : memref<16x312xbf16, #tpu.memory_space<vmem>>, vector<16x8xbf16>,
    %c12 = arith.constant 12 : index
    %c0_44 = arith.constant 0 : index
    %51 = vector.load %arg16[%c12, %c0_44] : memref<54x8xf32, #tpu.memory_space<vmem>>, vector<16x8xf32>
    %52 = arith.truncf %51 : vector<16x8xf32> to vector<16x8xbf16>
    %c0_45 = arith.constant 0 : index
    %c96 = arith.constant 96 : index
    %53 = vector.load %arg17[%c0_45, %c96] : memref<16x312xbf16, #tpu.memory_space<vmem>>, vector<16x8xbf16>
    tpu.vector_store %arg17[%c0_45, %c96], %52 {strides = array<i32>} : memref<16x312xbf16, #tpu.memory_space<vmem>>, vector<16x8xbf16>,
    %c13 = arith.constant 13 : index
    %c0_46 = arith.constant 0 : index
    %54 = vector.load %arg16[%c13, %c0_46] : memref<54x8xf32, #tpu.memory_space<vmem>>, vector<16x8xf32>
    %55 = arith.truncf %54 : vector<16x8xf32> to vector<16x8xbf16>
    %c0_47 = arith.constant 0 : index
    %c104 = arith.constant 104 : index
    %56 = vector.load %arg17[%c0_47, %c104] : memref<16x312xbf16, #tpu.memory_space<vmem>>, vector<16x8xbf16>
    tpu.vector_store %arg17[%c0_47, %c104], %55 {strides = array<i32>} : memref<16x312xbf16, #tpu.memory_space<vmem>>, vector<16x8xbf16>,
    %c14 = arith.constant 14 : index
    %c0_48 = arith.constant 0 : index
    %57 = vector.load %arg16[%c14, %c0_48] : memref<54x8xf32, #tpu.memory_space<vmem>>, vector<16x8xf32>
    %58 = arith.truncf %57 : vector<16x8xf32> to vector<16x8xbf16>
    %c0_49 = arith.constant 0 : index
    %c112 = arith.constant 112 : index
    %59 = vector.load %arg17[%c0_49, %c112] : memref<16x312xbf16, #tpu.memory_space<vmem>>, vector<16x8xbf16>
    tpu.vector_store %arg17[%c0_49, %c112], %58 {strides = array<i32>} : memref<16x312xbf16, #tpu.memory_space<vmem>>, vector<16x8xbf16>,
    %c15 = arith.constant 15 : index
    %c0_50 = arith.constant 0 : index
    %60 = vector.load %arg16[%c15, %c0_50] : memref<54x8xf32, #tpu.memory_space<vmem>>, vector<16x8xf32>
    %61 = arith.truncf %60 : vector<16x8xf32> to vector<16x8xbf16>
    %c0_51 = arith.constant 0 : index
    %c120 = arith.constant 120 : index
    %62 = vector.load %arg17[%c0_51, %c120] : memref<16x312xbf16, #tpu.memory_space<vmem>>, vector<16x8xbf16>
    tpu.vector_store %arg17[%c0_51, %c120], %61 {strides = array<i32>} : memref<16x312xbf16, #tpu.memory_space<vmem>>, vector<16x8xbf16>,
    %c16_52 = arith.constant 16 : index
    %c0_53 = arith.constant 0 : index
    %63 = vector.load %arg16[%c16_52, %c0_53] : memref<54x8xf32, #tpu.memory_space<vmem>>, vector<16x8xf32>
    %64 = arith.truncf %63 : vector<16x8xf32> to vector<16x8xbf16>
    %c0_54 = arith.constant 0 : index
    %c128 = arith.constant 128 : index
    %65 = vector.load %arg17[%c0_54, %c128] : memref<16x312xbf16, #tpu.memory_space<vmem>>, vector<16x8xbf16>
    tpu.vector_store %arg17[%c0_54, %c128], %64 {strides = array<i32>} : memref<16x312xbf16, #tpu.memory_space<vmem>>, vector<16x8xbf16>,
    %c17 = arith.constant 17 : index
    %c0_55 = arith.constant 0 : index
    %66 = vector.load %arg16[%c17, %c0_55] : memref<54x8xf32, #tpu.memory_space<vmem>>, vector<16x8xf32>
    %67 = arith.truncf %66 : vector<16x8xf32> to vector<16x8xbf16>
    %c0_56 = arith.constant 0 : index
    %c136 = arith.constant 136 : index
    %68 = vector.load %arg17[%c0_56, %c136] : memref<16x312xbf16, #tpu.memory_space<vmem>>, vector<16x8xbf16>
    tpu.vector_store %arg17[%c0_56, %c136], %67 {strides = array<i32>} : memref<16x312xbf16, #tpu.memory_space<vmem>>, vector<16x8xbf16>,
    %c18 = arith.constant 18 : index
    %c0_57 = arith.constant 0 : index
    %69 = vector.load %arg16[%c18, %c0_57] : memref<54x8xf32, #tpu.memory_space<vmem>>, vector<16x8xf32>
    %70 = arith.truncf %69 : vector<16x8xf32> to vector<16x8xbf16>
    %c0_58 = arith.constant 0 : index
    %c144 = arith.constant 144 : index
    %71 = vector.load %arg17[%c0_58, %c144] : memref<16x312xbf16, #tpu.memory_space<vmem>>, vector<16x8xbf16>
    tpu.vector_store %arg17[%c0_58, %c144], %70 {strides = array<i32>} : memref<16x312xbf16, #tpu.memory_space<vmem>>, vector<16x8xbf16>,
    %c19_59 = arith.constant 19 : index
    %c0_60 = arith.constant 0 : index
    %72 = vector.load %arg16[%c19_59, %c0_60] : memref<54x8xf32, #tpu.memory_space<vmem>>, vector<16x8xf32>
    %73 = arith.truncf %72 : vector<16x8xf32> to vector<16x8xbf16>
    %c0_61 = arith.constant 0 : index
    %c152 = arith.constant 152 : index
    %74 = vector.load %arg17[%c0_61, %c152] : memref<16x312xbf16, #tpu.memory_space<vmem>>, vector<16x8xbf16>
    tpu.vector_store %arg17[%c0_61, %c152], %73 {strides = array<i32>} : memref<16x312xbf16, #tpu.memory_space<vmem>>, vector<16x8xbf16>,
    %c20 = arith.constant 20 : index
    %c0_62 = arith.constant 0 : index
    %75 = vector.load %arg16[%c20, %c0_62] : memref<54x8xf32, #tpu.memory_space<vmem>>, vector<16x8xf32>
    %76 = arith.truncf %75 : vector<16x8xf32> to vector<16x8xbf16>
    %c0_63 = arith.constant 0 : index
    %c160 = arith.constant 160 : index
    %77 = vector.load %arg17[%c0_63, %c160] : memref<16x312xbf16, #tpu.memory_space<vmem>>, vector<16x8xbf16>
    tpu.vector_store %arg17[%c0_63, %c160], %76 {strides = array<i32>} : memref<16x312xbf16, #tpu.memory_space<vmem>>, vector<16x8xbf16>,
    %c21 = arith.constant 21 : index
    %c0_64 = arith.constant 0 : index
    %78 = vector.load %arg16[%c21, %c0_64] : memref<54x8xf32, #tpu.memory_space<vmem>>, vector<16x8xf32>
    %79 = arith.truncf %78 : vector<16x8xf32> to vector<16x8xbf16>
    %c0_65 = arith.constant 0 : index
    %c168 = arith.constant 168 : index
    %80 = vector.load %arg17[%c0_65, %c168] : memref<16x312xbf16, #tpu.memory_space<vmem>>, vector<16x8xbf16>
    tpu.vector_store %arg17[%c0_65, %c168], %79 {strides = array<i32>} : memref<16x312xbf16, #tpu.memory_space<vmem>>, vector<16x8xbf16>,
    %c22 = arith.constant 22 : index
    %c0_66 = arith.constant 0 : index
    %81 = vector.load %arg16[%c22, %c0_66] : memref<54x8xf32, #tpu.memory_space<vmem>>, vector<16x8xf32>
    %82 = arith.truncf %81 : vector<16x8xf32> to vector<16x8xbf16>
    %c0_67 = arith.constant 0 : index
    %c176 = arith.constant 176 : index
    %83 = vector.load %arg17[%c0_67, %c176] : memref<16x312xbf16, #tpu.memory_space<vmem>>, vector<16x8xbf16>
    tpu.vector_store %arg17[%c0_67, %c176], %82 {strides = array<i32>} : memref<16x312xbf16, #tpu.memory_space<vmem>>, vector<16x8xbf16>,
    %c23 = arith.constant 23 : index
    %c0_68 = arith.constant 0 : index
    %84 = vector.load %arg16[%c23, %c0_68] : memref<54x8xf32, #tpu.memory_space<vmem>>, vector<16x8xf32>
    %85 = arith.truncf %84 : vector<16x8xf32> to vector<16x8xbf16>
    %c0_69 = arith.constant 0 : index
    %c184 = arith.constant 184 : index
    %86 = vector.load %arg17[%c0_69, %c184] : memref<16x312xbf16, #tpu.memory_space<vmem>>, vector<16x8xbf16>
    tpu.vector_store %arg17[%c0_69, %c184], %85 {strides = array<i32>} : memref<16x312xbf16, #tpu.memory_space<vmem>>, vector<16x8xbf16>,
    %c24_70 = arith.constant 24 : index
    %c0_71 = arith.constant 0 : index
    %87 = vector.load %arg16[%c24_70, %c0_71] : memref<54x8xf32, #tpu.memory_space<vmem>>, vector<16x8xf32>
    %88 = arith.truncf %87 : vector<16x8xf32> to vector<16x8xbf16>
    %c0_72 = arith.constant 0 : index
    %c192 = arith.constant 192 : index
    %89 = vector.load %arg17[%c0_72, %c192] : memref<16x312xbf16, #tpu.memory_space<vmem>>, vector<16x8xbf16>
    tpu.vector_store %arg17[%c0_72, %c192], %88 {strides = array<i32>} : memref<16x312xbf16, #tpu.memory_space<vmem>>, vector<16x8xbf16>,
    %c25 = arith.constant 25 : index
    %c0_73 = arith.constant 0 : index
    %90 = vector.load %arg16[%c25, %c0_73] : memref<54x8xf32, #tpu.memory_space<vmem>>, vector<16x8xf32>
    %91 = arith.truncf %90 : vector<16x8xf32> to vector<16x8xbf16>
    %c0_74 = arith.constant 0 : index
    %c200 = arith.constant 200 : index
    %92 = vector.load %arg17[%c0_74, %c200] : memref<16x312xbf16, #tpu.memory_space<vmem>>, vector<16x8xbf16>
    tpu.vector_store %arg17[%c0_74, %c200], %91 {strides = array<i32>} : memref<16x312xbf16, #tpu.memory_space<vmem>>, vector<16x8xbf16>,
    %c26 = arith.constant 26 : index
    %c0_75 = arith.constant 0 : index
    %93 = vector.load %arg16[%c26, %c0_75] : memref<54x8xf32, #tpu.memory_space<vmem>>, vector<16x8xf32>
    %94 = arith.truncf %93 : vector<16x8xf32> to vector<16x8xbf16>
    %c0_76 = arith.constant 0 : index
    %c208 = arith.constant 208 : index
    %95 = vector.load %arg17[%c0_76, %c208] : memref<16x312xbf16, #tpu.memory_space<vmem>>, vector<16x8xbf16>
    tpu.vector_store %arg17[%c0_76, %c208], %94 {strides = array<i32>} : memref<16x312xbf16, #tpu.memory_space<vmem>>, vector<16x8xbf16>,
    %c27 = arith.constant 27 : index
    %c0_77 = arith.constant 0 : index
    %96 = vector.load %arg16[%c27, %c0_77] : memref<54x8xf32, #tpu.memory_space<vmem>>, vector<16x8xf32>
    %97 = arith.truncf %96 : vector<16x8xf32> to vector<16x8xbf16>
    %c0_78 = arith.constant 0 : index
    %c216 = arith.constant 216 : index
    %98 = vector.load %arg17[%c0_78, %c216] : memref<16x312xbf16, #tpu.memory_space<vmem>>, vector<16x8xbf16>
    tpu.vector_store %arg17[%c0_78, %c216], %97 {strides = array<i32>} : memref<16x312xbf16, #tpu.memory_space<vmem>>, vector<16x8xbf16>,
    %c28 = arith.constant 28 : index
    %c0_79 = arith.constant 0 : index
    %99 = vector.load %arg16[%c28, %c0_79] : memref<54x8xf32, #tpu.memory_space<vmem>>, vector<16x8xf32>
    %100 = arith.truncf %99 : vector<16x8xf32> to vector<16x8xbf16>
    %c0_80 = arith.constant 0 : index
    %c224 = arith.constant 224 : index
    %101 = vector.load %arg17[%c0_80, %c224] : memref<16x312xbf16, #tpu.memory_space<vmem>>, vector<16x8xbf16>
    tpu.vector_store %arg17[%c0_80, %c224], %100 {strides = array<i32>} : memref<16x312xbf16, #tpu.memory_space<vmem>>, vector<16x8xbf16>,
    %c29 = arith.constant 29 : index
    %c0_81 = arith.constant 0 : index
    %102 = vector.load %arg16[%c29, %c0_81] : memref<54x8xf32, #tpu.memory_space<vmem>>, vector<16x8xf32>
    %103 = arith.truncf %102 : vector<16x8xf32> to vector<16x8xbf16>
    %c0_82 = arith.constant 0 : index
    %c232 = arith.constant 232 : index
    %104 = vector.load %arg17[%c0_82, %c232] : memref<16x312xbf16, #tpu.memory_space<vmem>>, vector<16x8xbf16>
    tpu.vector_store %arg17[%c0_82, %c232], %103 {strides = array<i32>} : memref<16x312xbf16, #tpu.memory_space<vmem>>, vector<16x8xbf16>,
    %c30 = arith.constant 30 : index
    %c0_83 = arith.constant 0 : index
    %105 = vector.load %arg16[%c30, %c0_83] : memref<54x8xf32, #tpu.memory_space<vmem>>, vector<16x8xf32>
    %106 = arith.truncf %105 : vector<16x8xf32> to vector<16x8xbf16>
    %c0_84 = arith.constant 0 : index
    %c240 = arith.constant 240 : index
    %107 = vector.load %arg17[%c0_84, %c240] : memref<16x312xbf16, #tpu.memory_space<vmem>>, vector<16x8xbf16>
    tpu.vector_store %arg17[%c0_84, %c240], %106 {strides = array<i32>} : memref<16x312xbf16, #tpu.memory_space<vmem>>, vector<16x8xbf16>,
    %c31 = arith.constant 31 : index
    %c0_85 = arith.constant 0 : index
    %108 = vector.load %arg16[%c31, %c0_85] : memref<54x8xf32, #tpu.memory_space<vmem>>, vector<16x8xf32>
    %109 = arith.truncf %108 : vector<16x8xf32> to vector<16x8xbf16>
    %c0_86 = arith.constant 0 : index
    %c248 = arith.constant 248 : index
    %110 = vector.load %arg17[%c0_86, %c248] : memref<16x312xbf16, #tpu.memory_space<vmem>>, vector<16x8xbf16>
    tpu.vector_store %arg17[%c0_86, %c248], %109 {strides = array<i32>} : memref<16x312xbf16, #tpu.memory_space<vmem>>, vector<16x8xbf16>,
    %c32_87 = arith.constant 32 : index
    %c0_88 = arith.constant 0 : index
    %111 = vector.load %arg16[%c32_87, %c0_88] : memref<54x8xf32, #tpu.memory_space<vmem>>, vector<16x8xf32>
    %112 = arith.truncf %111 : vector<16x8xf32> to vector<16x8xbf16>
    %c0_89 = arith.constant 0 : index
    %c256 = arith.constant 256 : index
    %113 = vector.load %arg17[%c0_89, %c256] : memref<16x312xbf16, #tpu.memory_space<vmem>>, vector<16x8xbf16>
    tpu.vector_store %arg17[%c0_89, %c256], %112 {strides = array<i32>} : memref<16x312xbf16, #tpu.memory_space<vmem>>, vector<16x8xbf16>,
    %c33 = arith.constant 33 : index
    %c0_90 = arith.constant 0 : index
    %114 = vector.load %arg16[%c33, %c0_90] : memref<54x8xf32, #tpu.memory_space<vmem>>, vector<16x8xf32>
    %115 = arith.truncf %114 : vector<16x8xf32> to vector<16x8xbf16>
    %c0_91 = arith.constant 0 : index
    %c264 = arith.constant 264 : index
    %116 = vector.load %arg17[%c0_91, %c264] : memref<16x312xbf16, #tpu.memory_space<vmem>>, vector<16x8xbf16>
    tpu.vector_store %arg17[%c0_91, %c264], %115 {strides = array<i32>} : memref<16x312xbf16, #tpu.memory_space<vmem>>, vector<16x8xbf16>,
    %c34 = arith.constant 34 : index
    %c0_92 = arith.constant 0 : index
    %117 = vector.load %arg16[%c34, %c0_92] : memref<54x8xf32, #tpu.memory_space<vmem>>, vector<16x8xf32>
    %118 = arith.truncf %117 : vector<16x8xf32> to vector<16x8xbf16>
    %c0_93 = arith.constant 0 : index
    %c272 = arith.constant 272 : index
    %119 = vector.load %arg17[%c0_93, %c272] : memref<16x312xbf16, #tpu.memory_space<vmem>>, vector<16x8xbf16>
    tpu.vector_store %arg17[%c0_93, %c272], %118 {strides = array<i32>} : memref<16x312xbf16, #tpu.memory_space<vmem>>, vector<16x8xbf16>,
    %c35 = arith.constant 35 : index
    %c0_94 = arith.constant 0 : index
    %120 = vector.load %arg16[%c35, %c0_94] : memref<54x8xf32, #tpu.memory_space<vmem>>, vector<16x8xf32>
    %121 = arith.truncf %120 : vector<16x8xf32> to vector<16x8xbf16>
    %c0_95 = arith.constant 0 : index
    %c280 = arith.constant 280 : index
    %122 = vector.load %arg17[%c0_95, %c280] : memref<16x312xbf16, #tpu.memory_space<vmem>>, vector<16x8xbf16>
    tpu.vector_store %arg17[%c0_95, %c280], %121 {strides = array<i32>} : memref<16x312xbf16, #tpu.memory_space<vmem>>, vector<16x8xbf16>,
    %c36 = arith.constant 36 : index
    %c0_96 = arith.constant 0 : index
    %123 = vector.load %arg16[%c36, %c0_96] : memref<54x8xf32, #tpu.memory_space<vmem>>, vector<16x8xf32>
    %124 = arith.truncf %123 : vector<16x8xf32> to vector<16x8xbf16>
    %c0_97 = arith.constant 0 : index
    %c288 = arith.constant 288 : index
    %125 = vector.load %arg17[%c0_97, %c288] : memref<16x312xbf16, #tpu.memory_space<vmem>>, vector<16x8xbf16>
    tpu.vector_store %arg17[%c0_97, %c288], %124 {strides = array<i32>} : memref<16x312xbf16, #tpu.memory_space<vmem>>, vector<16x8xbf16>,
    %c37 = arith.constant 37 : index
    %c0_98 = arith.constant 0 : index
    %126 = vector.load %arg16[%c37, %c0_98] : memref<54x8xf32, #tpu.memory_space<vmem>>, vector<16x8xf32>
    %127 = arith.truncf %126 : vector<16x8xf32> to vector<16x8xbf16>
    %c0_99 = arith.constant 0 : index
    %c296 = arith.constant 296 : index
    %128 = vector.load %arg17[%c0_99, %c296] : memref<16x312xbf16, #tpu.memory_space<vmem>>, vector<16x8xbf16>
    tpu.vector_store %arg17[%c0_99, %c296], %127 {strides = array<i32>} : memref<16x312xbf16, #tpu.memory_space<vmem>>, vector<16x8xbf16>,
    %c38 = arith.constant 38 : index
    %c0_100 = arith.constant 0 : index
    %129 = vector.load %arg16[%c38, %c0_100] : memref<54x8xf32, #tpu.memory_space<vmem>>, vector<16x8xf32>
    %130 = arith.truncf %129 : vector<16x8xf32> to vector<16x8xbf16>
    %c0_101 = arith.constant 0 : index
    %c304 = arith.constant 304 : index
    %131 = vector.load %arg17[%c0_101, %c304] : memref<16x312xbf16, #tpu.memory_space<vmem>>, vector<16x8xbf16>
    tpu.vector_store %arg17[%c0_101, %c304], %130 {strides = array<i32>} : memref<16x312xbf16, #tpu.memory_space<vmem>>, vector<16x8xbf16>,
    %c0_102 = arith.constant 0 : index
    %c0_103 = arith.constant 0 : index
    %132 = vector.load %arg17[%c0_102, %c0_103] : memref<16x312xbf16, #tpu.memory_space<vmem>>, vector<16x312xbf16>
    %cst_104 = arith.constant dense<0.000000e+00> : vector<16x24xf32>
    %133 = tpu.matmul %132, %11, %cst_104 {dimension_numbers = #tpu.dot_dimension_numbers<[1], [0], [0], [1], [0, 0, 1, 1], [], []>} : vector<16x312xbf16>, vector<312x24xbf16>, vector<16x24xf32> -> vector<16x24xf32>
    %c1_105 = arith.constant 1 : index
    %c0_106 = arith.constant 0 : index
    %134 = vector.load %arg18[%c1_105, %c0_106] : memref<18x32xf32, #tpu.memory_space<vmem>>, vector<16x4xf32>
    tpu.vector_store %arg18[%c1_105, %c0_106], %5 {strides = array<i32>} : memref<18x32xf32, #tpu.memory_space<vmem>>, vector<16x4xf32>,
    %c0_107 = arith.constant 0 : index
    %c0_108 = arith.constant 0 : index
    %135 = vector.load %arg18[%c0_107, %c0_108] : memref<18x32xf32, #tpu.memory_space<vmem>>, vector<16x4xf32>
    %c1_109 = arith.constant 1 : index
    %c0_110 = arith.constant 0 : index
    %136 = vector.load %arg18[%c1_109, %c0_110] : memref<18x32xf32, #tpu.memory_space<vmem>>, vector<16x4xf32>
    %137 = arith.maximumf %135, %136 : vector<16x4xf32>
    %c2_111 = arith.constant 2 : index
    %c0_112 = arith.constant 0 : index
    %138 = vector.load %arg18[%c2_111, %c0_112] : memref<18x32xf32, #tpu.memory_space<vmem>>, vector<16x4xf32>
    %139 = arith.maximumf %137, %138 : vector<16x4xf32>
    %140 = arith.truncf %139 : vector<16x4xf32> to vector<16x4xbf16>
    %cst_113 = arith.constant dense<0.000000e+00> : vector<16x8xf32>
    %141 = tpu.matmul %140, %12, %cst_113 {dimension_numbers = #tpu.dot_dimension_numbers<[1], [0], [0], [1], [0, 0, 1, 1], [], []>} : vector<16x4xbf16>, vector<4x8xbf16>, vector<16x8xf32> -> vector<16x8xf32>
    %142 = tpu.concatenate %133, %141 in 1 : vector<16x24xf32>, vector<16x8xf32> -> vector<16x32xf32>
    %143 = vector.broadcast %13 : vector<1x32xf32> to vector<16x32xf32>
    %144 = arith.addf %142, %143 : vector<16x32xf32>
    %cst_114 = arith.constant 0.000000e+00 : f32
    %145 = vector.broadcast %cst_114 : f32 to vector<16x32xf32>
    %146 = arith.maximumf %144, %145 : vector<16x32xf32>
    %147 = arith.truncf %146 : vector<16x32xf32> to vector<16x32xbf16>
    %c0_115 = arith.constant 0 : index
    %c0_116 = arith.constant 0 : index
    %148 = vector.load %arg6[%c0_115, %c0_116] : memref<32x8xbf16, #tpu.memory_space<vmem>>, vector<32x8xbf16>
    %cst_117 = arith.constant dense<0.000000e+00> : vector<16x8xf32>
    %149 = tpu.matmul %147, %148, %cst_117 {dimension_numbers = #tpu.dot_dimension_numbers<[1], [0], [0], [1], [0, 0, 1, 1], [], []>} : vector<16x32xbf16>, vector<32x8xbf16>, vector<16x8xf32> -> vector<16x8xf32>
    %c0_118 = arith.constant 0 : index
    %c0_119 = arith.constant 0 : index
    %150 = vector.load %arg7[%c0_118, %c0_119] : memref<312x24xbf16, #tpu.memory_space<vmem>>, vector<312x24xbf16>
    %c0_120 = arith.constant 0 : index
    %c0_121 = arith.constant 0 : index
    %151 = vector.load %arg8[%c0_120, %c0_121] : memref<32x8xbf16, #tpu.memory_space<vmem>>, vector<32x8xbf16>
    %c0_122 = arith.constant 0 : index
    %c0_123 = arith.constant 0 : index
    %152 = vector.load %arg9[%c0_122, %c0_123] : memref<1x32xf32, #tpu.memory_space<vmem>>, vector<1x32xf32>
    %c19_124 = arith.constant 19 : index
    %c0_125 = arith.constant 0 : index
    %153 = vector.load %arg16[%c19_124, %c0_125] : memref<54x8xf32, #tpu.memory_space<vmem>>, vector<16x8xf32>
    tpu.vector_store %arg16[%c19_124, %c0_125], %149 {strides = array<i32>} : memref<54x8xf32, #tpu.memory_space<vmem>>, vector<16x8xf32>,
    %c0_126 = arith.constant 0 : index
    %c0_127 = arith.constant 0 : index
    %154 = vector.load %arg16[%c0_126, %c0_127] : memref<54x8xf32, #tpu.memory_space<vmem>>, vector<16x8xf32>
    %155 = arith.truncf %154 : vector<16x8xf32> to vector<16x8xbf16>
    %c0_128 = arith.constant 0 : index
    %c0_129 = arith.constant 0 : index
    %156 = vector.load %arg17[%c0_128, %c0_129] : memref<16x312xbf16, #tpu.memory_space<vmem>>, vector<16x8xbf16>
    tpu.vector_store %arg17[%c0_128, %c0_129], %155 {strides = array<i32>} : memref<16x312xbf16, #tpu.memory_space<vmem>>, vector<16x8xbf16>,
    %c1_130 = arith.constant 1 : index
    %c0_131 = arith.constant 0 : index
    %157 = vector.load %arg16[%c1_130, %c0_131] : memref<54x8xf32, #tpu.memory_space<vmem>>, vector<16x8xf32>
    %158 = arith.truncf %157 : vector<16x8xf32> to vector<16x8xbf16>
    %c0_132 = arith.constant 0 : index
    %c8_133 = arith.constant 8 : index
    %159 = vector.load %arg17[%c0_132, %c8_133] : memref<16x312xbf16, #tpu.memory_space<vmem>>, vector<16x8xbf16>
    tpu.vector_store %arg17[%c0_132, %c8_133], %158 {strides = array<i32>} : memref<16x312xbf16, #tpu.memory_space<vmem>>, vector<16x8xbf16>,
    %c2_134 = arith.constant 2 : index
    %c0_135 = arith.constant 0 : index
    %160 = vector.load %arg16[%c2_134, %c0_135] : memref<54x8xf32, #tpu.memory_space<vmem>>, vector<16x8xf32>
    %161 = arith.truncf %160 : vector<16x8xf32> to vector<16x8xbf16>
    %c0_136 = arith.constant 0 : index
    %c16_137 = arith.constant 16 : index
    %162 = vector.load %arg17[%c0_136, %c16_137] : memref<16x312xbf16, #tpu.memory_space<vmem>>, vector<16x8xbf16>
    tpu.vector_store %arg17[%c0_136, %c16_137], %161 {strides = array<i32>} : memref<16x312xbf16, #tpu.memory_space<vmem>>, vector<16x8xbf16>,
    %c3_138 = arith.constant 3 : index
    %c0_139 = arith.constant 0 : index
    %163 = vector.load %arg16[%c3_138, %c0_139] : memref<54x8xf32, #tpu.memory_space<vmem>>, vector<16x8xf32>
    %164 = arith.truncf %163 : vector<16x8xf32> to vector<16x8xbf16>
    %c0_140 = arith.constant 0 : index
    %c24_141 = arith.constant 24 : index
    %165 = vector.load %arg17[%c0_140, %c24_141] : memref<16x312xbf16, #tpu.memory_space<vmem>>, vector<16x8xbf16>
    tpu.vector_store %arg17[%c0_140, %c24_141], %164 {strides = array<i32>} : memref<16x312xbf16, #tpu.memory_space<vmem>>, vector<16x8xbf16>,
    %c4_142 = arith.constant 4 : index
    %c0_143 = arith.constant 0 : index
    %166 = vector.load %arg16[%c4_142, %c0_143] : memref<54x8xf32, #tpu.memory_space<vmem>>, vector<16x8xf32>
    %167 = arith.truncf %166 : vector<16x8xf32> to vector<16x8xbf16>
    %c0_144 = arith.constant 0 : index
    %c32_145 = arith.constant 32 : index
    %168 = vector.load %arg17[%c0_144, %c32_145] : memref<16x312xbf16, #tpu.memory_space<vmem>>, vector<16x8xbf16>
    tpu.vector_store %arg17[%c0_144, %c32_145], %167 {strides = array<i32>} : memref<16x312xbf16, #tpu.memory_space<vmem>>, vector<16x8xbf16>,
    %c5_146 = arith.constant 5 : index
    %c0_147 = arith.constant 0 : index
    %169 = vector.load %arg16[%c5_146, %c0_147] : memref<54x8xf32, #tpu.memory_space<vmem>>, vector<16x8xf32>
    %170 = arith.truncf %169 : vector<16x8xf32> to vector<16x8xbf16>
    %c0_148 = arith.constant 0 : index
    %c40_149 = arith.constant 40 : index
    %171 = vector.load %arg17[%c0_148, %c40_149] : memref<16x312xbf16, #tpu.memory_space<vmem>>, vector<16x8xbf16>
    tpu.vector_store %arg17[%c0_148, %c40_149], %170 {strides = array<i32>} : memref<16x312xbf16, #tpu.memory_space<vmem>>, vector<16x8xbf16>,
    %c6_150 = arith.constant 6 : index
    %c0_151 = arith.constant 0 : index
    %172 = vector.load %arg16[%c6_150, %c0_151] : memref<54x8xf32, #tpu.memory_space<vmem>>, vector<16x8xf32>
    %173 = arith.truncf %172 : vector<16x8xf32> to vector<16x8xbf16>
    %c0_152 = arith.constant 0 : index
    %c48_153 = arith.constant 48 : index
    %174 = vector.load %arg17[%c0_152, %c48_153] : memref<16x312xbf16, #tpu.memory_space<vmem>>, vector<16x8xbf16>
    tpu.vector_store %arg17[%c0_152, %c48_153], %173 {strides = array<i32>} : memref<16x312xbf16, #tpu.memory_space<vmem>>, vector<16x8xbf16>,
    %c7_154 = arith.constant 7 : index
    %c0_155 = arith.constant 0 : index
    %175 = vector.load %arg16[%c7_154, %c0_155] : memref<54x8xf32, #tpu.memory_space<vmem>>, vector<16x8xf32>
    %176 = arith.truncf %175 : vector<16x8xf32> to vector<16x8xbf16>
    %c0_156 = arith.constant 0 : index
    %c56_157 = arith.constant 56 : index
    %177 = vector.load %arg17[%c0_156, %c56_157] : memref<16x312xbf16, #tpu.memory_space<vmem>>, vector<16x8xbf16>
    tpu.vector_store %arg17[%c0_156, %c56_157], %176 {strides = array<i32>} : memref<16x312xbf16, #tpu.memory_space<vmem>>, vector<16x8xbf16>,
    %c8_158 = arith.constant 8 : index
    %c0_159 = arith.constant 0 : index
    %178 = vector.load %arg16[%c8_158, %c0_159] : memref<54x8xf32, #tpu.memory_space<vmem>>, vector<16x8xf32>
    %179 = arith.truncf %178 : vector<16x8xf32> to vector<16x8xbf16>
    %c0_160 = arith.constant 0 : index
    %c64_161 = arith.constant 64 : index
    %180 = vector.load %arg17[%c0_160, %c64_161] : memref<16x312xbf16, #tpu.memory_space<vmem>>, vector<16x8xbf16>
    tpu.vector_store %arg17[%c0_160, %c64_161], %179 {strides = array<i32>} : memref<16x312xbf16, #tpu.memory_space<vmem>>, vector<16x8xbf16>,
    %c9_162 = arith.constant 9 : index
    %c0_163 = arith.constant 0 : index
    %181 = vector.load %arg16[%c9_162, %c0_163] : memref<54x8xf32, #tpu.memory_space<vmem>>, vector<16x8xf32>
    %182 = arith.truncf %181 : vector<16x8xf32> to vector<16x8xbf16>
    %c0_164 = arith.constant 0 : index
    %c72_165 = arith.constant 72 : index
    %183 = vector.load %arg17[%c0_164, %c72_165] : memref<16x312xbf16, #tpu.memory_space<vmem>>, vector<16x8xbf16>
    tpu.vector_store %arg17[%c0_164, %c72_165], %182 {strides = array<i32>} : memref<16x312xbf16, #tpu.memory_space<vmem>>, vector<16x8xbf16>,
    %c10_166 = arith.constant 10 : index
    %c0_167 = arith.constant 0 : index
    %184 = vector.load %arg16[%c10_166, %c0_167] : memref<54x8xf32, #tpu.memory_space<vmem>>, vector<16x8xf32>
    %185 = arith.truncf %184 : vector<16x8xf32> to vector<16x8xbf16>
    %c0_168 = arith.constant 0 : index
    %c80_169 = arith.constant 80 : index
    %186 = vector.load %arg17[%c0_168, %c80_169] : memref<16x312xbf16, #tpu.memory_space<vmem>>, vector<16x8xbf16>
    tpu.vector_store %arg17[%c0_168, %c80_169], %185 {strides = array<i32>} : memref<16x312xbf16, #tpu.memory_space<vmem>>, vector<16x8xbf16>,
    %c11_170 = arith.constant 11 : index
    %c0_171 = arith.constant 0 : index
    %187 = vector.load %arg16[%c11_170, %c0_171] : memref<54x8xf32, #tpu.memory_space<vmem>>, vector<16x8xf32>
    %188 = arith.truncf %187 : vector<16x8xf32> to vector<16x8xbf16>
    %c0_172 = arith.constant 0 : index
    %c88_173 = arith.constant 88 : index
    %189 = vector.load %arg17[%c0_172, %c88_173] : memref<16x312xbf16, #tpu.memory_space<vmem>>, vector<16x8xbf16>
    tpu.vector_store %arg17[%c0_172, %c88_173], %188 {strides = array<i32>} : memref<16x312xbf16, #tpu.memory_space<vmem>>, vector<16x8xbf16>,
    %c12_174 = arith.constant 12 : index
    %c0_175 = arith.constant 0 : index
    %190 = vector.load %arg16[%c12_174, %c0_175] : memref<54x8xf32, #tpu.memory_space<vmem>>, vector<16x8xf32>
    %191 = arith.truncf %190 : vector<16x8xf32> to vector<16x8xbf16>
    %c0_176 = arith.constant 0 : index
    %c96_177 = arith.constant 96 : index
    %192 = vector.load %arg17[%c0_176, %c96_177] : memref<16x312xbf16, #tpu.memory_space<vmem>>, vector<16x8xbf16>
    tpu.vector_store %arg17[%c0_176, %c96_177], %191 {strides = array<i32>} : memref<16x312xbf16, #tpu.memory_space<vmem>>, vector<16x8xbf16>,
    %c13_178 = arith.constant 13 : index
    %c0_179 = arith.constant 0 : index
    %193 = vector.load %arg16[%c13_178, %c0_179] : memref<54x8xf32, #tpu.memory_space<vmem>>, vector<16x8xf32>
    %194 = arith.truncf %193 : vector<16x8xf32> to vector<16x8xbf16>
    %c0_180 = arith.constant 0 : index
    %c104_181 = arith.constant 104 : index
    %195 = vector.load %arg17[%c0_180, %c104_181] : memref<16x312xbf16, #tpu.memory_space<vmem>>, vector<16x8xbf16>
    tpu.vector_store %arg17[%c0_180, %c104_181], %194 {strides = array<i32>} : memref<16x312xbf16, #tpu.memory_space<vmem>>, vector<16x8xbf16>,
    %c14_182 = arith.constant 14 : index
    %c0_183 = arith.constant 0 : index
    %196 = vector.load %arg16[%c14_182, %c0_183] : memref<54x8xf32, #tpu.memory_space<vmem>>, vector<16x8xf32>
    %197 = arith.truncf %196 : vector<16x8xf32> to vector<16x8xbf16>
    %c0_184 = arith.constant 0 : index
    %c112_185 = arith.constant 112 : index
    %198 = vector.load %arg17[%c0_184, %c112_185] : memref<16x312xbf16, #tpu.memory_space<vmem>>, vector<16x8xbf16>
    tpu.vector_store %arg17[%c0_184, %c112_185], %197 {strides = array<i32>} : memref<16x312xbf16, #tpu.memory_space<vmem>>, vector<16x8xbf16>,
    %c15_186 = arith.constant 15 : index
    %c0_187 = arith.constant 0 : index
    %199 = vector.load %arg16[%c15_186, %c0_187] : memref<54x8xf32, #tpu.memory_space<vmem>>, vector<16x8xf32>
    %200 = arith.truncf %199 : vector<16x8xf32> to vector<16x8xbf16>
    %c0_188 = arith.constant 0 : index
    %c120_189 = arith.constant 120 : index
    %201 = vector.load %arg17[%c0_188, %c120_189] : memref<16x312xbf16, #tpu.memory_space<vmem>>, vector<16x8xbf16>
    tpu.vector_store %arg17[%c0_188, %c120_189], %200 {strides = array<i32>} : memref<16x312xbf16, #tpu.memory_space<vmem>>, vector<16x8xbf16>,
    %c16_190 = arith.constant 16 : index
    %c0_191 = arith.constant 0 : index
    %202 = vector.load %arg16[%c16_190, %c0_191] : memref<54x8xf32, #tpu.memory_space<vmem>>, vector<16x8xf32>
    %203 = arith.truncf %202 : vector<16x8xf32> to vector<16x8xbf16>
    %c0_192 = arith.constant 0 : index
    %c128_193 = arith.constant 128 : index
    %204 = vector.load %arg17[%c0_192, %c128_193] : memref<16x312xbf16, #tpu.memory_space<vmem>>, vector<16x8xbf16>
    tpu.vector_store %arg17[%c0_192, %c128_193], %203 {strides = array<i32>} : memref<16x312xbf16, #tpu.memory_space<vmem>>, vector<16x8xbf16>,
    %c17_194 = arith.constant 17 : index
    %c0_195 = arith.constant 0 : index
    %205 = vector.load %arg16[%c17_194, %c0_195] : memref<54x8xf32, #tpu.memory_space<vmem>>, vector<16x8xf32>
    %206 = arith.truncf %205 : vector<16x8xf32> to vector<16x8xbf16>
    %c0_196 = arith.constant 0 : index
    %c136_197 = arith.constant 136 : index
    %207 = vector.load %arg17[%c0_196, %c136_197] : memref<16x312xbf16, #tpu.memory_space<vmem>>, vector<16x8xbf16>
    tpu.vector_store %arg17[%c0_196, %c136_197], %206 {strides = array<i32>} : memref<16x312xbf16, #tpu.memory_space<vmem>>, vector<16x8xbf16>,
    %c18_198 = arith.constant 18 : index
    %c0_199 = arith.constant 0 : index
    %208 = vector.load %arg16[%c18_198, %c0_199] : memref<54x8xf32, #tpu.memory_space<vmem>>, vector<16x8xf32>
    %209 = arith.truncf %208 : vector<16x8xf32> to vector<16x8xbf16>
    %c0_200 = arith.constant 0 : index
    %c144_201 = arith.constant 144 : index
    %210 = vector.load %arg17[%c0_200, %c144_201] : memref<16x312xbf16, #tpu.memory_space<vmem>>, vector<16x8xbf16>
    tpu.vector_store %arg17[%c0_200, %c144_201], %209 {strides = array<i32>} : memref<16x312xbf16, #tpu.memory_space<vmem>>, vector<16x8xbf16>,
    %c19_202 = arith.constant 19 : index
    %c0_203 = arith.constant 0 : index
    %211 = vector.load %arg16[%c19_202, %c0_203] : memref<54x8xf32, #tpu.memory_space<vmem>>, vector<16x8xf32>
    %212 = arith.truncf %211 : vector<16x8xf32> to vector<16x8xbf16>
    %c0_204 = arith.constant 0 : index
    %c152_205 = arith.constant 152 : index
    %213 = vector.load %arg17[%c0_204, %c152_205] : memref<16x312xbf16, #tpu.memory_space<vmem>>, vector<16x8xbf16>
    tpu.vector_store %arg17[%c0_204, %c152_205], %212 {strides = array<i32>} : memref<16x312xbf16, #tpu.memory_space<vmem>>, vector<16x8xbf16>,
    %c20_206 = arith.constant 20 : index
    %c0_207 = arith.constant 0 : index
    %214 = vector.load %arg16[%c20_206, %c0_207] : memref<54x8xf32, #tpu.memory_space<vmem>>, vector<16x8xf32>
    %215 = arith.truncf %214 : vector<16x8xf32> to vector<16x8xbf16>
    %c0_208 = arith.constant 0 : index
    %c160_209 = arith.constant 160 : index
    %216 = vector.load %arg17[%c0_208, %c160_209] : memref<16x312xbf16, #tpu.memory_space<vmem>>, vector<16x8xbf16>
    tpu.vector_store %arg17[%c0_208, %c160_209], %215 {strides = array<i32>} : memref<16x312xbf16, #tpu.memory_space<vmem>>, vector<16x8xbf16>,
    %c21_210 = arith.constant 21 : index
    %c0_211 = arith.constant 0 : index
    %217 = vector.load %arg16[%c21_210, %c0_211] : memref<54x8xf32, #tpu.memory_space<vmem>>, vector<16x8xf32>
    %218 = arith.truncf %217 : vector<16x8xf32> to vector<16x8xbf16>
    %c0_212 = arith.constant 0 : index
    %c168_213 = arith.constant 168 : index
    %219 = vector.load %arg17[%c0_212, %c168_213] : memref<16x312xbf16, #tpu.memory_space<vmem>>, vector<16x8xbf16>
    tpu.vector_store %arg17[%c0_212, %c168_213], %218 {strides = array<i32>} : memref<16x312xbf16, #tpu.memory_space<vmem>>, vector<16x8xbf16>,
    %c22_214 = arith.constant 22 : index
    %c0_215 = arith.constant 0 : index
    %220 = vector.load %arg16[%c22_214, %c0_215] : memref<54x8xf32, #tpu.memory_space<vmem>>, vector<16x8xf32>
    %221 = arith.truncf %220 : vector<16x8xf32> to vector<16x8xbf16>
    %c0_216 = arith.constant 0 : index
    %c176_217 = arith.constant 176 : index
    %222 = vector.load %arg17[%c0_216, %c176_217] : memref<16x312xbf16, #tpu.memory_space<vmem>>, vector<16x8xbf16>
    tpu.vector_store %arg17[%c0_216, %c176_217], %221 {strides = array<i32>} : memref<16x312xbf16, #tpu.memory_space<vmem>>, vector<16x8xbf16>,
    %c23_218 = arith.constant 23 : index
    %c0_219 = arith.constant 0 : index
    %223 = vector.load %arg16[%c23_218, %c0_219] : memref<54x8xf32, #tpu.memory_space<vmem>>, vector<16x8xf32>
    %224 = arith.truncf %223 : vector<16x8xf32> to vector<16x8xbf16>
    %c0_220 = arith.constant 0 : index
    %c184_221 = arith.constant 184 : index
    %225 = vector.load %arg17[%c0_220, %c184_221] : memref<16x312xbf16, #tpu.memory_space<vmem>>, vector<16x8xbf16>
    tpu.vector_store %arg17[%c0_220, %c184_221], %224 {strides = array<i32>} : memref<16x312xbf16, #tpu.memory_space<vmem>>, vector<16x8xbf16>,
    %c24_222 = arith.constant 24 : index
    %c0_223 = arith.constant 0 : index
    %226 = vector.load %arg16[%c24_222, %c0_223] : memref<54x8xf32, #tpu.memory_space<vmem>>, vector<16x8xf32>
    %227 = arith.truncf %226 : vector<16x8xf32> to vector<16x8xbf16>
    %c0_224 = arith.constant 0 : index
    %c192_225 = arith.constant 192 : index
    %228 = vector.load %arg17[%c0_224, %c192_225] : memref<16x312xbf16, #tpu.memory_space<vmem>>, vector<16x8xbf16>
    tpu.vector_store %arg17[%c0_224, %c192_225], %227 {strides = array<i32>} : memref<16x312xbf16, #tpu.memory_space<vmem>>, vector<16x8xbf16>,
    %c25_226 = arith.constant 25 : index
    %c0_227 = arith.constant 0 : index
    %229 = vector.load %arg16[%c25_226, %c0_227] : memref<54x8xf32, #tpu.memory_space<vmem>>, vector<16x8xf32>
    %230 = arith.truncf %229 : vector<16x8xf32> to vector<16x8xbf16>
    %c0_228 = arith.constant 0 : index
    %c200_229 = arith.constant 200 : index
    %231 = vector.load %arg17[%c0_228, %c200_229] : memref<16x312xbf16, #tpu.memory_space<vmem>>, vector<16x8xbf16>
    tpu.vector_store %arg17[%c0_228, %c200_229], %230 {strides = array<i32>} : memref<16x312xbf16, #tpu.memory_space<vmem>>, vector<16x8xbf16>,
    %c26_230 = arith.constant 26 : index
    %c0_231 = arith.constant 0 : index
    %232 = vector.load %arg16[%c26_230, %c0_231] : memref<54x8xf32, #tpu.memory_space<vmem>>, vector<16x8xf32>
    %233 = arith.truncf %232 : vector<16x8xf32> to vector<16x8xbf16>
    %c0_232 = arith.constant 0 : index
    %c208_233 = arith.constant 208 : index
    %234 = vector.load %arg17[%c0_232, %c208_233] : memref<16x312xbf16, #tpu.memory_space<vmem>>, vector<16x8xbf16>
    tpu.vector_store %arg17[%c0_232, %c208_233], %233 {strides = array<i32>} : memref<16x312xbf16, #tpu.memory_space<vmem>>, vector<16x8xbf16>,
    %c27_234 = arith.constant 27 : index
    %c0_235 = arith.constant 0 : index
    %235 = vector.load %arg16[%c27_234, %c0_235] : memref<54x8xf32, #tpu.memory_space<vmem>>, vector<16x8xf32>
    %236 = arith.truncf %235 : vector<16x8xf32> to vector<16x8xbf16>
    %c0_236 = arith.constant 0 : index
    %c216_237 = arith.constant 216 : index
    %237 = vector.load %arg17[%c0_236, %c216_237] : memref<16x312xbf16, #tpu.memory_space<vmem>>, vector<16x8xbf16>
    tpu.vector_store %arg17[%c0_236, %c216_237], %236 {strides = array<i32>} : memref<16x312xbf16, #tpu.memory_space<vmem>>, vector<16x8xbf16>,
    %c28_238 = arith.constant 28 : index
    %c0_239 = arith.constant 0 : index
    %238 = vector.load %arg16[%c28_238, %c0_239] : memref<54x8xf32, #tpu.memory_space<vmem>>, vector<16x8xf32>
    %239 = arith.truncf %238 : vector<16x8xf32> to vector<16x8xbf16>
    %c0_240 = arith.constant 0 : index
    %c224_241 = arith.constant 224 : index
    %240 = vector.load %arg17[%c0_240, %c224_241] : memref<16x312xbf16, #tpu.memory_space<vmem>>, vector<16x8xbf16>
    tpu.vector_store %arg17[%c0_240, %c224_241], %239 {strides = array<i32>} : memref<16x312xbf16, #tpu.memory_space<vmem>>, vector<16x8xbf16>,
    %c29_242 = arith.constant 29 : index
    %c0_243 = arith.constant 0 : index
    %241 = vector.load %arg16[%c29_242, %c0_243] : memref<54x8xf32, #tpu.memory_space<vmem>>, vector<16x8xf32>
    %242 = arith.truncf %241 : vector<16x8xf32> to vector<16x8xbf16>
    %c0_244 = arith.constant 0 : index
    %c232_245 = arith.constant 232 : index
    %243 = vector.load %arg17[%c0_244, %c232_245] : memref<16x312xbf16, #tpu.memory_space<vmem>>, vector<16x8xbf16>
    tpu.vector_store %arg17[%c0_244, %c232_245], %242 {strides = array<i32>} : memref<16x312xbf16, #tpu.memory_space<vmem>>, vector<16x8xbf16>,
    %c30_246 = arith.constant 30 : index
    %c0_247 = arith.constant 0 : index
    %244 = vector.load %arg16[%c30_246, %c0_247] : memref<54x8xf32, #tpu.memory_space<vmem>>, vector<16x8xf32>
    %245 = arith.truncf %244 : vector<16x8xf32> to vector<16x8xbf16>
    %c0_248 = arith.constant 0 : index
    %c240_249 = arith.constant 240 : index
    %246 = vector.load %arg17[%c0_248, %c240_249] : memref<16x312xbf16, #tpu.memory_space<vmem>>, vector<16x8xbf16>
    tpu.vector_store %arg17[%c0_248, %c240_249], %245 {strides = array<i32>} : memref<16x312xbf16, #tpu.memory_space<vmem>>, vector<16x8xbf16>,
    %c31_250 = arith.constant 31 : index
    %c0_251 = arith.constant 0 : index
    %247 = vector.load %arg16[%c31_250, %c0_251] : memref<54x8xf32, #tpu.memory_space<vmem>>, vector<16x8xf32>
    %248 = arith.truncf %247 : vector<16x8xf32> to vector<16x8xbf16>
    %c0_252 = arith.constant 0 : index
    %c248_253 = arith.constant 248 : index
    %249 = vector.load %arg17[%c0_252, %c248_253] : memref<16x312xbf16, #tpu.memory_space<vmem>>, vector<16x8xbf16>
    tpu.vector_store %arg17[%c0_252, %c248_253], %248 {strides = array<i32>} : memref<16x312xbf16, #tpu.memory_space<vmem>>, vector<16x8xbf16>,
    %c32_254 = arith.constant 32 : index
    %c0_255 = arith.constant 0 : index
    %250 = vector.load %arg16[%c32_254, %c0_255] : memref<54x8xf32, #tpu.memory_space<vmem>>, vector<16x8xf32>
    %251 = arith.truncf %250 : vector<16x8xf32> to vector<16x8xbf16>
    %c0_256 = arith.constant 0 : index
    %c256_257 = arith.constant 256 : index
    %252 = vector.load %arg17[%c0_256, %c256_257] : memref<16x312xbf16, #tpu.memory_space<vmem>>, vector<16x8xbf16>
    tpu.vector_store %arg17[%c0_256, %c256_257], %251 {strides = array<i32>} : memref<16x312xbf16, #tpu.memory_space<vmem>>, vector<16x8xbf16>,
    %c33_258 = arith.constant 33 : index
    %c0_259 = arith.constant 0 : index
    %253 = vector.load %arg16[%c33_258, %c0_259] : memref<54x8xf32, #tpu.memory_space<vmem>>, vector<16x8xf32>
    %254 = arith.truncf %253 : vector<16x8xf32> to vector<16x8xbf16>
    %c0_260 = arith.constant 0 : index
    %c264_261 = arith.constant 264 : index
    %255 = vector.load %arg17[%c0_260, %c264_261] : memref<16x312xbf16, #tpu.memory_space<vmem>>, vector<16x8xbf16>
    tpu.vector_store %arg17[%c0_260, %c264_261], %254 {strides = array<i32>} : memref<16x312xbf16, #tpu.memory_space<vmem>>, vector<16x8xbf16>,
    %c34_262 = arith.constant 34 : index
    %c0_263 = arith.constant 0 : index
    %256 = vector.load %arg16[%c34_262, %c0_263] : memref<54x8xf32, #tpu.memory_space<vmem>>, vector<16x8xf32>
    %257 = arith.truncf %256 : vector<16x8xf32> to vector<16x8xbf16>
    %c0_264 = arith.constant 0 : index
    %c272_265 = arith.constant 272 : index
    %258 = vector.load %arg17[%c0_264, %c272_265] : memref<16x312xbf16, #tpu.memory_space<vmem>>, vector<16x8xbf16>
    tpu.vector_store %arg17[%c0_264, %c272_265], %257 {strides = array<i32>} : memref<16x312xbf16, #tpu.memory_space<vmem>>, vector<16x8xbf16>,
    %c35_266 = arith.constant 35 : index
    %c0_267 = arith.constant 0 : index
    %259 = vector.load %arg16[%c35_266, %c0_267] : memref<54x8xf32, #tpu.memory_space<vmem>>, vector<16x8xf32>
    %260 = arith.truncf %259 : vector<16x8xf32> to vector<16x8xbf16>
    %c0_268 = arith.constant 0 : index
    %c280_269 = arith.constant 280 : index
    %261 = vector.load %arg17[%c0_268, %c280_269] : memref<16x312xbf16, #tpu.memory_space<vmem>>, vector<16x8xbf16>
    tpu.vector_store %arg17[%c0_268, %c280_269], %260 {strides = array<i32>} : memref<16x312xbf16, #tpu.memory_space<vmem>>, vector<16x8xbf16>,
    %c36_270 = arith.constant 36 : index
    %c0_271 = arith.constant 0 : index
    %262 = vector.load %arg16[%c36_270, %c0_271] : memref<54x8xf32, #tpu.memory_space<vmem>>, vector<16x8xf32>
    %263 = arith.truncf %262 : vector<16x8xf32> to vector<16x8xbf16>
    %c0_272 = arith.constant 0 : index
    %c288_273 = arith.constant 288 : index
    %264 = vector.load %arg17[%c0_272, %c288_273] : memref<16x312xbf16, #tpu.memory_space<vmem>>, vector<16x8xbf16>
    tpu.vector_store %arg17[%c0_272, %c288_273], %263 {strides = array<i32>} : memref<16x312xbf16, #tpu.memory_space<vmem>>, vector<16x8xbf16>,
    %c37_274 = arith.constant 37 : index
    %c0_275 = arith.constant 0 : index
    %265 = vector.load %arg16[%c37_274, %c0_275] : memref<54x8xf32, #tpu.memory_space<vmem>>, vector<16x8xf32>
    %266 = arith.truncf %265 : vector<16x8xf32> to vector<16x8xbf16>
    %c0_276 = arith.constant 0 : index
    %c296_277 = arith.constant 296 : index
    %267 = vector.load %arg17[%c0_276, %c296_277] : memref<16x312xbf16, #tpu.memory_space<vmem>>, vector<16x8xbf16>
    tpu.vector_store %arg17[%c0_276, %c296_277], %266 {strides = array<i32>} : memref<16x312xbf16, #tpu.memory_space<vmem>>, vector<16x8xbf16>,
    %c38_278 = arith.constant 38 : index
    %c0_279 = arith.constant 0 : index
    %268 = vector.load %arg16[%c38_278, %c0_279] : memref<54x8xf32, #tpu.memory_space<vmem>>, vector<16x8xf32>
    %269 = arith.truncf %268 : vector<16x8xf32> to vector<16x8xbf16>
    %c0_280 = arith.constant 0 : index
    %c304_281 = arith.constant 304 : index
    %270 = vector.load %arg17[%c0_280, %c304_281] : memref<16x312xbf16, #tpu.memory_space<vmem>>, vector<16x8xbf16>
    tpu.vector_store %arg17[%c0_280, %c304_281], %269 {strides = array<i32>} : memref<16x312xbf16, #tpu.memory_space<vmem>>, vector<16x8xbf16>,
    %c0_282 = arith.constant 0 : index
    %c0_283 = arith.constant 0 : index
    %271 = vector.load %arg17[%c0_282, %c0_283] : memref<16x312xbf16, #tpu.memory_space<vmem>>, vector<16x312xbf16>
    %cst_284 = arith.constant dense<0.000000e+00> : vector<16x24xf32>
    %272 = tpu.matmul %271, %150, %cst_284 {dimension_numbers = #tpu.dot_dimension_numbers<[1], [0], [0], [1], [0, 0, 1, 1], [], []>} : vector<16x312xbf16>, vector<312x24xbf16>, vector<16x24xf32> -> vector<16x24xf32>
    %c1_285 = arith.constant 1 : index
    %c0_286 = arith.constant 0 : index
    %273 = vector.load %arg18[%c1_285, %c0_286] : memref<18x32xf32, #tpu.memory_space<vmem>>, vector<16x32xf32>
    tpu.vector_store %arg18[%c1_285, %c0_286], %146 {strides = array<i32>} : memref<18x32xf32, #tpu.memory_space<vmem>>, vector<16x32xf32>,
    %c0_287 = arith.constant 0 : index
    %c0_288 = arith.constant 0 : index
    %274 = vector.load %arg18[%c0_287, %c0_288] : memref<18x32xf32, #tpu.memory_space<vmem>>, vector<16x32xf32>
    %c1_289 = arith.constant 1 : index
    %c0_290 = arith.constant 0 : index
    %275 = vector.load %arg18[%c1_289, %c0_290] : memref<18x32xf32, #tpu.memory_space<vmem>>, vector<16x32xf32>
    %276 = arith.maximumf %274, %275 : vector<16x32xf32>
    %c2_291 = arith.constant 2 : index
    %c0_292 = arith.constant 0 : index
    %277 = vector.load %arg18[%c2_291, %c0_292] : memref<18x32xf32, #tpu.memory_space<vmem>>, vector<16x32xf32>
    %278 = arith.maximumf %276, %277 : vector<16x32xf32>
    %279 = arith.truncf %278 : vector<16x32xf32> to vector<16x32xbf16>
    %cst_293 = arith.constant dense<0.000000e+00> : vector<16x8xf32>
    %280 = tpu.matmul %279, %151, %cst_293 {dimension_numbers = #tpu.dot_dimension_numbers<[1], [0], [0], [1], [0, 0, 1, 1], [], []>} : vector<16x32xbf16>, vector<32x8xbf16>, vector<16x8xf32> -> vector<16x8xf32>
    %281 = tpu.concatenate %272, %280 in 1 : vector<16x24xf32>, vector<16x8xf32> -> vector<16x32xf32>
    %282 = vector.broadcast %152 : vector<1x32xf32> to vector<16x32xf32>
    %283 = arith.addf %281, %282 : vector<16x32xf32>
    %cst_294 = arith.constant 0.000000e+00 : f32
    %284 = vector.broadcast %cst_294 : f32 to vector<16x32xf32>
    %285 = arith.maximumf %283, %284 : vector<16x32xf32>
    %286 = arith.truncf %285 : vector<16x32xf32> to vector<16x32xbf16>
    %c0_295 = arith.constant 0 : index
    %c0_296 = arith.constant 0 : index
    %287 = vector.load %arg10[%c0_295, %c0_296] : memref<32x8xbf16, #tpu.memory_space<vmem>>, vector<32x8xbf16>
    %cst_297 = arith.constant dense<0.000000e+00> : vector<16x8xf32>
    %288 = tpu.matmul %286, %287, %cst_297 {dimension_numbers = #tpu.dot_dimension_numbers<[1], [0], [0], [1], [0, 0, 1, 1], [], []>} : vector<16x32xbf16>, vector<32x8xbf16>, vector<16x8xf32> -> vector<16x8xf32>
    %c0_298 = arith.constant 0 : index
    %c0_299 = arith.constant 0 : index
    %289 = vector.load %arg11[%c0_298, %c0_299] : memref<312x24xbf16, #tpu.memory_space<vmem>>, vector<312x24xbf16>
    %c0_300 = arith.constant 0 : index
    %c0_301 = arith.constant 0 : index
    %290 = vector.load %arg12[%c0_300, %c0_301] : memref<32x8xbf16, #tpu.memory_space<vmem>>, vector<32x8xbf16>
    %c0_302 = arith.constant 0 : index
    %c0_303 = arith.constant 0 : index
    %291 = vector.load %arg13[%c0_302, %c0_303] : memref<1x32xf32, #tpu.memory_space<vmem>>, vector<1x32xf32>
    %c19_304 = arith.constant 19 : index
    %c0_305 = arith.constant 0 : index
    %292 = vector.load %arg16[%c19_304, %c0_305] : memref<54x8xf32, #tpu.memory_space<vmem>>, vector<16x8xf32>
    tpu.vector_store %arg16[%c19_304, %c0_305], %288 {strides = array<i32>} : memref<54x8xf32, #tpu.memory_space<vmem>>, vector<16x8xf32>,
    %c0_306 = arith.constant 0 : index
    %c0_307 = arith.constant 0 : index
    %293 = vector.load %arg16[%c0_306, %c0_307] : memref<54x8xf32, #tpu.memory_space<vmem>>, vector<16x8xf32>
    %294 = arith.truncf %293 : vector<16x8xf32> to vector<16x8xbf16>
    %c0_308 = arith.constant 0 : index
    %c0_309 = arith.constant 0 : index
    %295 = vector.load %arg17[%c0_308, %c0_309] : memref<16x312xbf16, #tpu.memory_space<vmem>>, vector<16x8xbf16>
    tpu.vector_store %arg17[%c0_308, %c0_309], %294 {strides = array<i32>} : memref<16x312xbf16, #tpu.memory_space<vmem>>, vector<16x8xbf16>,
    %c1_310 = arith.constant 1 : index
    %c0_311 = arith.constant 0 : index
    %296 = vector.load %arg16[%c1_310, %c0_311] : memref<54x8xf32, #tpu.memory_space<vmem>>, vector<16x8xf32>
    %297 = arith.truncf %296 : vector<16x8xf32> to vector<16x8xbf16>
    %c0_312 = arith.constant 0 : index
    %c8_313 = arith.constant 8 : index
    %298 = vector.load %arg17[%c0_312, %c8_313] : memref<16x312xbf16, #tpu.memory_space<vmem>>, vector<16x8xbf16>
    tpu.vector_store %arg17[%c0_312, %c8_313], %297 {strides = array<i32>} : memref<16x312xbf16, #tpu.memory_space<vmem>>, vector<16x8xbf16>,
    %c2_314 = arith.constant 2 : index
    %c0_315 = arith.constant 0 : index
    %299 = vector.load %arg16[%c2_314, %c0_315] : memref<54x8xf32, #tpu.memory_space<vmem>>, vector<16x8xf32>
    %300 = arith.truncf %299 : vector<16x8xf32> to vector<16x8xbf16>
    %c0_316 = arith.constant 0 : index
    %c16_317 = arith.constant 16 : index
    %301 = vector.load %arg17[%c0_316, %c16_317] : memref<16x312xbf16, #tpu.memory_space<vmem>>, vector<16x8xbf16>
    tpu.vector_store %arg17[%c0_316, %c16_317], %300 {strides = array<i32>} : memref<16x312xbf16, #tpu.memory_space<vmem>>, vector<16x8xbf16>,
    %c3_318 = arith.constant 3 : index
    %c0_319 = arith.constant 0 : index
    %302 = vector.load %arg16[%c3_318, %c0_319] : memref<54x8xf32, #tpu.memory_space<vmem>>, vector<16x8xf32>
    %303 = arith.truncf %302 : vector<16x8xf32> to vector<16x8xbf16>
    %c0_320 = arith.constant 0 : index
    %c24_321 = arith.constant 24 : index
    %304 = vector.load %arg17[%c0_320, %c24_321] : memref<16x312xbf16, #tpu.memory_space<vmem>>, vector<16x8xbf16>
    tpu.vector_store %arg17[%c0_320, %c24_321], %303 {strides = array<i32>} : memref<16x312xbf16, #tpu.memory_space<vmem>>, vector<16x8xbf16>,
    %c4_322 = arith.constant 4 : index
    %c0_323 = arith.constant 0 : index
    %305 = vector.load %arg16[%c4_322, %c0_323] : memref<54x8xf32, #tpu.memory_space<vmem>>, vector<16x8xf32>
    %306 = arith.truncf %305 : vector<16x8xf32> to vector<16x8xbf16>
    %c0_324 = arith.constant 0 : index
    %c32_325 = arith.constant 32 : index
    %307 = vector.load %arg17[%c0_324, %c32_325] : memref<16x312xbf16, #tpu.memory_space<vmem>>, vector<16x8xbf16>
    tpu.vector_store %arg17[%c0_324, %c32_325], %306 {strides = array<i32>} : memref<16x312xbf16, #tpu.memory_space<vmem>>, vector<16x8xbf16>,
    %c5_326 = arith.constant 5 : index
    %c0_327 = arith.constant 0 : index
    %308 = vector.load %arg16[%c5_326, %c0_327] : memref<54x8xf32, #tpu.memory_space<vmem>>, vector<16x8xf32>
    %309 = arith.truncf %308 : vector<16x8xf32> to vector<16x8xbf16>
    %c0_328 = arith.constant 0 : index
    %c40_329 = arith.constant 40 : index
    %310 = vector.load %arg17[%c0_328, %c40_329] : memref<16x312xbf16, #tpu.memory_space<vmem>>, vector<16x8xbf16>
    tpu.vector_store %arg17[%c0_328, %c40_329], %309 {strides = array<i32>} : memref<16x312xbf16, #tpu.memory_space<vmem>>, vector<16x8xbf16>,
    %c6_330 = arith.constant 6 : index
    %c0_331 = arith.constant 0 : index
    %311 = vector.load %arg16[%c6_330, %c0_331] : memref<54x8xf32, #tpu.memory_space<vmem>>, vector<16x8xf32>
    %312 = arith.truncf %311 : vector<16x8xf32> to vector<16x8xbf16>
    %c0_332 = arith.constant 0 : index
    %c48_333 = arith.constant 48 : index
    %313 = vector.load %arg17[%c0_332, %c48_333] : memref<16x312xbf16, #tpu.memory_space<vmem>>, vector<16x8xbf16>
    tpu.vector_store %arg17[%c0_332, %c48_333], %312 {strides = array<i32>} : memref<16x312xbf16, #tpu.memory_space<vmem>>, vector<16x8xbf16>,
    %c7_334 = arith.constant 7 : index
    %c0_335 = arith.constant 0 : index
    %314 = vector.load %arg16[%c7_334, %c0_335] : memref<54x8xf32, #tpu.memory_space<vmem>>, vector<16x8xf32>
    %315 = arith.truncf %314 : vector<16x8xf32> to vector<16x8xbf16>
    %c0_336 = arith.constant 0 : index
    %c56_337 = arith.constant 56 : index
    %316 = vector.load %arg17[%c0_336, %c56_337] : memref<16x312xbf16, #tpu.memory_space<vmem>>, vector<16x8xbf16>
    tpu.vector_store %arg17[%c0_336, %c56_337], %315 {strides = array<i32>} : memref<16x312xbf16, #tpu.memory_space<vmem>>, vector<16x8xbf16>,
    %c8_338 = arith.constant 8 : index
    %c0_339 = arith.constant 0 : index
    %317 = vector.load %arg16[%c8_338, %c0_339] : memref<54x8xf32, #tpu.memory_space<vmem>>, vector<16x8xf32>
    %318 = arith.truncf %317 : vector<16x8xf32> to vector<16x8xbf16>
    %c0_340 = arith.constant 0 : index
    %c64_341 = arith.constant 64 : index
    %319 = vector.load %arg17[%c0_340, %c64_341] : memref<16x312xbf16, #tpu.memory_space<vmem>>, vector<16x8xbf16>
    tpu.vector_store %arg17[%c0_340, %c64_341], %318 {strides = array<i32>} : memref<16x312xbf16, #tpu.memory_space<vmem>>, vector<16x8xbf16>,
    %c9_342 = arith.constant 9 : index
    %c0_343 = arith.constant 0 : index
    %320 = vector.load %arg16[%c9_342, %c0_343] : memref<54x8xf32, #tpu.memory_space<vmem>>, vector<16x8xf32>
    %321 = arith.truncf %320 : vector<16x8xf32> to vector<16x8xbf16>
    %c0_344 = arith.constant 0 : index
    %c72_345 = arith.constant 72 : index
    %322 = vector.load %arg17[%c0_344, %c72_345] : memref<16x312xbf16, #tpu.memory_space<vmem>>, vector<16x8xbf16>
    tpu.vector_store %arg17[%c0_344, %c72_345], %321 {strides = array<i32>} : memref<16x312xbf16, #tpu.memory_space<vmem>>, vector<16x8xbf16>,
    %c10_346 = arith.constant 10 : index
    %c0_347 = arith.constant 0 : index
    %323 = vector.load %arg16[%c10_346, %c0_347] : memref<54x8xf32, #tpu.memory_space<vmem>>, vector<16x8xf32>
    %324 = arith.truncf %323 : vector<16x8xf32> to vector<16x8xbf16>
    %c0_348 = arith.constant 0 : index
    %c80_349 = arith.constant 80 : index
    %325 = vector.load %arg17[%c0_348, %c80_349] : memref<16x312xbf16, #tpu.memory_space<vmem>>, vector<16x8xbf16>
    tpu.vector_store %arg17[%c0_348, %c80_349], %324 {strides = array<i32>} : memref<16x312xbf16, #tpu.memory_space<vmem>>, vector<16x8xbf16>,
    %c11_350 = arith.constant 11 : index
    %c0_351 = arith.constant 0 : index
    %326 = vector.load %arg16[%c11_350, %c0_351] : memref<54x8xf32, #tpu.memory_space<vmem>>, vector<16x8xf32>
    %327 = arith.truncf %326 : vector<16x8xf32> to vector<16x8xbf16>
    %c0_352 = arith.constant 0 : index
    %c88_353 = arith.constant 88 : index
    %328 = vector.load %arg17[%c0_352, %c88_353] : memref<16x312xbf16, #tpu.memory_space<vmem>>, vector<16x8xbf16>
    tpu.vector_store %arg17[%c0_352, %c88_353], %327 {strides = array<i32>} : memref<16x312xbf16, #tpu.memory_space<vmem>>, vector<16x8xbf16>,
    %c12_354 = arith.constant 12 : index
    %c0_355 = arith.constant 0 : index
    %329 = vector.load %arg16[%c12_354, %c0_355] : memref<54x8xf32, #tpu.memory_space<vmem>>, vector<16x8xf32>
    %330 = arith.truncf %329 : vector<16x8xf32> to vector<16x8xbf16>
    %c0_356 = arith.constant 0 : index
    %c96_357 = arith.constant 96 : index
    %331 = vector.load %arg17[%c0_356, %c96_357] : memref<16x312xbf16, #tpu.memory_space<vmem>>, vector<16x8xbf16>
    tpu.vector_store %arg17[%c0_356, %c96_357], %330 {strides = array<i32>} : memref<16x312xbf16, #tpu.memory_space<vmem>>, vector<16x8xbf16>,
    %c13_358 = arith.constant 13 : index
    %c0_359 = arith.constant 0 : index
    %332 = vector.load %arg16[%c13_358, %c0_359] : memref<54x8xf32, #tpu.memory_space<vmem>>, vector<16x8xf32>
    %333 = arith.truncf %332 : vector<16x8xf32> to vector<16x8xbf16>
    %c0_360 = arith.constant 0 : index
    %c104_361 = arith.constant 104 : index
    %334 = vector.load %arg17[%c0_360, %c104_361] : memref<16x312xbf16, #tpu.memory_space<vmem>>, vector<16x8xbf16>
    tpu.vector_store %arg17[%c0_360, %c104_361], %333 {strides = array<i32>} : memref<16x312xbf16, #tpu.memory_space<vmem>>, vector<16x8xbf16>,
    %c14_362 = arith.constant 14 : index
    %c0_363 = arith.constant 0 : index
    %335 = vector.load %arg16[%c14_362, %c0_363] : memref<54x8xf32, #tpu.memory_space<vmem>>, vector<16x8xf32>
    %336 = arith.truncf %335 : vector<16x8xf32> to vector<16x8xbf16>
    %c0_364 = arith.constant 0 : index
    %c112_365 = arith.constant 112 : index
    %337 = vector.load %arg17[%c0_364, %c112_365] : memref<16x312xbf16, #tpu.memory_space<vmem>>, vector<16x8xbf16>
    tpu.vector_store %arg17[%c0_364, %c112_365], %336 {strides = array<i32>} : memref<16x312xbf16, #tpu.memory_space<vmem>>, vector<16x8xbf16>,
    %c15_366 = arith.constant 15 : index
    %c0_367 = arith.constant 0 : index
    %338 = vector.load %arg16[%c15_366, %c0_367] : memref<54x8xf32, #tpu.memory_space<vmem>>, vector<16x8xf32>
    %339 = arith.truncf %338 : vector<16x8xf32> to vector<16x8xbf16>
    %c0_368 = arith.constant 0 : index
    %c120_369 = arith.constant 120 : index
    %340 = vector.load %arg17[%c0_368, %c120_369] : memref<16x312xbf16, #tpu.memory_space<vmem>>, vector<16x8xbf16>
    tpu.vector_store %arg17[%c0_368, %c120_369], %339 {strides = array<i32>} : memref<16x312xbf16, #tpu.memory_space<vmem>>, vector<16x8xbf16>,
    %c16_370 = arith.constant 16 : index
    %c0_371 = arith.constant 0 : index
    %341 = vector.load %arg16[%c16_370, %c0_371] : memref<54x8xf32, #tpu.memory_space<vmem>>, vector<16x8xf32>
    %342 = arith.truncf %341 : vector<16x8xf32> to vector<16x8xbf16>
    %c0_372 = arith.constant 0 : index
    %c128_373 = arith.constant 128 : index
    %343 = vector.load %arg17[%c0_372, %c128_373] : memref<16x312xbf16, #tpu.memory_space<vmem>>, vector<16x8xbf16>
    tpu.vector_store %arg17[%c0_372, %c128_373], %342 {strides = array<i32>} : memref<16x312xbf16, #tpu.memory_space<vmem>>, vector<16x8xbf16>,
    %c17_374 = arith.constant 17 : index
    %c0_375 = arith.constant 0 : index
    %344 = vector.load %arg16[%c17_374, %c0_375] : memref<54x8xf32, #tpu.memory_space<vmem>>, vector<16x8xf32>
    %345 = arith.truncf %344 : vector<16x8xf32> to vector<16x8xbf16>
    %c0_376 = arith.constant 0 : index
    %c136_377 = arith.constant 136 : index
    %346 = vector.load %arg17[%c0_376, %c136_377] : memref<16x312xbf16, #tpu.memory_space<vmem>>, vector<16x8xbf16>
    tpu.vector_store %arg17[%c0_376, %c136_377], %345 {strides = array<i32>} : memref<16x312xbf16, #tpu.memory_space<vmem>>, vector<16x8xbf16>,
    %c18_378 = arith.constant 18 : index
    %c0_379 = arith.constant 0 : index
    %347 = vector.load %arg16[%c18_378, %c0_379] : memref<54x8xf32, #tpu.memory_space<vmem>>, vector<16x8xf32>
    %348 = arith.truncf %347 : vector<16x8xf32> to vector<16x8xbf16>
    %c0_380 = arith.constant 0 : index
    %c144_381 = arith.constant 144 : index
    %349 = vector.load %arg17[%c0_380, %c144_381] : memref<16x312xbf16, #tpu.memory_space<vmem>>, vector<16x8xbf16>
    tpu.vector_store %arg17[%c0_380, %c144_381], %348 {strides = array<i32>} : memref<16x312xbf16, #tpu.memory_space<vmem>>, vector<16x8xbf16>,
    %c19_382 = arith.constant 19 : index
    %c0_383 = arith.constant 0 : index
    %350 = vector.load %arg16[%c19_382, %c0_383] : memref<54x8xf32, #tpu.memory_space<vmem>>, vector<16x8xf32>
    %351 = arith.truncf %350 : vector<16x8xf32> to vector<16x8xbf16>
    %c0_384 = arith.constant 0 : index
    %c152_385 = arith.constant 152 : index
    %352 = vector.load %arg17[%c0_384, %c152_385] : memref<16x312xbf16, #tpu.memory_space<vmem>>, vector<16x8xbf16>
    tpu.vector_store %arg17[%c0_384, %c152_385], %351 {strides = array<i32>} : memref<16x312xbf16, #tpu.memory_space<vmem>>, vector<16x8xbf16>,
    %c20_386 = arith.constant 20 : index
    %c0_387 = arith.constant 0 : index
    %353 = vector.load %arg16[%c20_386, %c0_387] : memref<54x8xf32, #tpu.memory_space<vmem>>, vector<16x8xf32>
    %354 = arith.truncf %353 : vector<16x8xf32> to vector<16x8xbf16>
    %c0_388 = arith.constant 0 : index
    %c160_389 = arith.constant 160 : index
    %355 = vector.load %arg17[%c0_388, %c160_389] : memref<16x312xbf16, #tpu.memory_space<vmem>>, vector<16x8xbf16>
    tpu.vector_store %arg17[%c0_388, %c160_389], %354 {strides = array<i32>} : memref<16x312xbf16, #tpu.memory_space<vmem>>, vector<16x8xbf16>,
    %c21_390 = arith.constant 21 : index
    %c0_391 = arith.constant 0 : index
    %356 = vector.load %arg16[%c21_390, %c0_391] : memref<54x8xf32, #tpu.memory_space<vmem>>, vector<16x8xf32>
    %357 = arith.truncf %356 : vector<16x8xf32> to vector<16x8xbf16>
    %c0_392 = arith.constant 0 : index
    %c168_393 = arith.constant 168 : index
    %358 = vector.load %arg17[%c0_392, %c168_393] : memref<16x312xbf16, #tpu.memory_space<vmem>>, vector<16x8xbf16>
    tpu.vector_store %arg17[%c0_392, %c168_393], %357 {strides = array<i32>} : memref<16x312xbf16, #tpu.memory_space<vmem>>, vector<16x8xbf16>,
    %c22_394 = arith.constant 22 : index
    %c0_395 = arith.constant 0 : index
    %359 = vector.load %arg16[%c22_394, %c0_395] : memref<54x8xf32, #tpu.memory_space<vmem>>, vector<16x8xf32>
    %360 = arith.truncf %359 : vector<16x8xf32> to vector<16x8xbf16>
    %c0_396 = arith.constant 0 : index
    %c176_397 = arith.constant 176 : index
    %361 = vector.load %arg17[%c0_396, %c176_397] : memref<16x312xbf16, #tpu.memory_space<vmem>>, vector<16x8xbf16>
    tpu.vector_store %arg17[%c0_396, %c176_397], %360 {strides = array<i32>} : memref<16x312xbf16, #tpu.memory_space<vmem>>, vector<16x8xbf16>,
    %c23_398 = arith.constant 23 : index
    %c0_399 = arith.constant 0 : index
    %362 = vector.load %arg16[%c23_398, %c0_399] : memref<54x8xf32, #tpu.memory_space<vmem>>, vector<16x8xf32>
    %363 = arith.truncf %362 : vector<16x8xf32> to vector<16x8xbf16>
    %c0_400 = arith.constant 0 : index
    %c184_401 = arith.constant 184 : index
    %364 = vector.load %arg17[%c0_400, %c184_401] : memref<16x312xbf16, #tpu.memory_space<vmem>>, vector<16x8xbf16>
    tpu.vector_store %arg17[%c0_400, %c184_401], %363 {strides = array<i32>} : memref<16x312xbf16, #tpu.memory_space<vmem>>, vector<16x8xbf16>,
    %c24_402 = arith.constant 24 : index
    %c0_403 = arith.constant 0 : index
    %365 = vector.load %arg16[%c24_402, %c0_403] : memref<54x8xf32, #tpu.memory_space<vmem>>, vector<16x8xf32>
    %366 = arith.truncf %365 : vector<16x8xf32> to vector<16x8xbf16>
    %c0_404 = arith.constant 0 : index
    %c192_405 = arith.constant 192 : index
    %367 = vector.load %arg17[%c0_404, %c192_405] : memref<16x312xbf16, #tpu.memory_space<vmem>>, vector<16x8xbf16>
    tpu.vector_store %arg17[%c0_404, %c192_405], %366 {strides = array<i32>} : memref<16x312xbf16, #tpu.memory_space<vmem>>, vector<16x8xbf16>,
    %c25_406 = arith.constant 25 : index
    %c0_407 = arith.constant 0 : index
    %368 = vector.load %arg16[%c25_406, %c0_407] : memref<54x8xf32, #tpu.memory_space<vmem>>, vector<16x8xf32>
    %369 = arith.truncf %368 : vector<16x8xf32> to vector<16x8xbf16>
    %c0_408 = arith.constant 0 : index
    %c200_409 = arith.constant 200 : index
    %370 = vector.load %arg17[%c0_408, %c200_409] : memref<16x312xbf16, #tpu.memory_space<vmem>>, vector<16x8xbf16>
    tpu.vector_store %arg17[%c0_408, %c200_409], %369 {strides = array<i32>} : memref<16x312xbf16, #tpu.memory_space<vmem>>, vector<16x8xbf16>,
    %c26_410 = arith.constant 26 : index
    %c0_411 = arith.constant 0 : index
    %371 = vector.load %arg16[%c26_410, %c0_411] : memref<54x8xf32, #tpu.memory_space<vmem>>, vector<16x8xf32>
    %372 = arith.truncf %371 : vector<16x8xf32> to vector<16x8xbf16>
    %c0_412 = arith.constant 0 : index
    %c208_413 = arith.constant 208 : index
    %373 = vector.load %arg17[%c0_412, %c208_413] : memref<16x312xbf16, #tpu.memory_space<vmem>>, vector<16x8xbf16>
    tpu.vector_store %arg17[%c0_412, %c208_413], %372 {strides = array<i32>} : memref<16x312xbf16, #tpu.memory_space<vmem>>, vector<16x8xbf16>,
    %c27_414 = arith.constant 27 : index
    %c0_415 = arith.constant 0 : index
    %374 = vector.load %arg16[%c27_414, %c0_415] : memref<54x8xf32, #tpu.memory_space<vmem>>, vector<16x8xf32>
    %375 = arith.truncf %374 : vector<16x8xf32> to vector<16x8xbf16>
    %c0_416 = arith.constant 0 : index
    %c216_417 = arith.constant 216 : index
    %376 = vector.load %arg17[%c0_416, %c216_417] : memref<16x312xbf16, #tpu.memory_space<vmem>>, vector<16x8xbf16>
    tpu.vector_store %arg17[%c0_416, %c216_417], %375 {strides = array<i32>} : memref<16x312xbf16, #tpu.memory_space<vmem>>, vector<16x8xbf16>,
    %c28_418 = arith.constant 28 : index
    %c0_419 = arith.constant 0 : index
    %377 = vector.load %arg16[%c28_418, %c0_419] : memref<54x8xf32, #tpu.memory_space<vmem>>, vector<16x8xf32>
    %378 = arith.truncf %377 : vector<16x8xf32> to vector<16x8xbf16>
    %c0_420 = arith.constant 0 : index
    %c224_421 = arith.constant 224 : index
    %379 = vector.load %arg17[%c0_420, %c224_421] : memref<16x312xbf16, #tpu.memory_space<vmem>>, vector<16x8xbf16>
    tpu.vector_store %arg17[%c0_420, %c224_421], %378 {strides = array<i32>} : memref<16x312xbf16, #tpu.memory_space<vmem>>, vector<16x8xbf16>,
    %c29_422 = arith.constant 29 : index
    %c0_423 = arith.constant 0 : index
    %380 = vector.load %arg16[%c29_422, %c0_423] : memref<54x8xf32, #tpu.memory_space<vmem>>, vector<16x8xf32>
    %381 = arith.truncf %380 : vector<16x8xf32> to vector<16x8xbf16>
    %c0_424 = arith.constant 0 : index
    %c232_425 = arith.constant 232 : index
    %382 = vector.load %arg17[%c0_424, %c232_425] : memref<16x312xbf16, #tpu.memory_space<vmem>>, vector<16x8xbf16>
    tpu.vector_store %arg17[%c0_424, %c232_425], %381 {strides = array<i32>} : memref<16x312xbf16, #tpu.memory_space<vmem>>, vector<16x8xbf16>,
    %c30_426 = arith.constant 30 : index
    %c0_427 = arith.constant 0 : index
    %383 = vector.load %arg16[%c30_426, %c0_427] : memref<54x8xf32, #tpu.memory_space<vmem>>, vector<16x8xf32>
    %384 = arith.truncf %383 : vector<16x8xf32> to vector<16x8xbf16>
    %c0_428 = arith.constant 0 : index
    %c240_429 = arith.constant 240 : index
    %385 = vector.load %arg17[%c0_428, %c240_429] : memref<16x312xbf16, #tpu.memory_space<vmem>>, vector<16x8xbf16>
    tpu.vector_store %arg17[%c0_428, %c240_429], %384 {strides = array<i32>} : memref<16x312xbf16, #tpu.memory_space<vmem>>, vector<16x8xbf16>,
    %c31_430 = arith.constant 31 : index
    %c0_431 = arith.constant 0 : index
    %386 = vector.load %arg16[%c31_430, %c0_431] : memref<54x8xf32, #tpu.memory_space<vmem>>, vector<16x8xf32>
    %387 = arith.truncf %386 : vector<16x8xf32> to vector<16x8xbf16>
    %c0_432 = arith.constant 0 : index
    %c248_433 = arith.constant 248 : index
    %388 = vector.load %arg17[%c0_432, %c248_433] : memref<16x312xbf16, #tpu.memory_space<vmem>>, vector<16x8xbf16>
    tpu.vector_store %arg17[%c0_432, %c248_433], %387 {strides = array<i32>} : memref<16x312xbf16, #tpu.memory_space<vmem>>, vector<16x8xbf16>,
    %c32_434 = arith.constant 32 : index
    %c0_435 = arith.constant 0 : index
    %389 = vector.load %arg16[%c32_434, %c0_435] : memref<54x8xf32, #tpu.memory_space<vmem>>, vector<16x8xf32>
    %390 = arith.truncf %389 : vector<16x8xf32> to vector<16x8xbf16>
    %c0_436 = arith.constant 0 : index
    %c256_437 = arith.constant 256 : index
    %391 = vector.load %arg17[%c0_436, %c256_437] : memref<16x312xbf16, #tpu.memory_space<vmem>>, vector<16x8xbf16>
    tpu.vector_store %arg17[%c0_436, %c256_437], %390 {strides = array<i32>} : memref<16x312xbf16, #tpu.memory_space<vmem>>, vector<16x8xbf16>,
    %c33_438 = arith.constant 33 : index
    %c0_439 = arith.constant 0 : index
    %392 = vector.load %arg16[%c33_438, %c0_439] : memref<54x8xf32, #tpu.memory_space<vmem>>, vector<16x8xf32>
    %393 = arith.truncf %392 : vector<16x8xf32> to vector<16x8xbf16>
    %c0_440 = arith.constant 0 : index
    %c264_441 = arith.constant 264 : index
    %394 = vector.load %arg17[%c0_440, %c264_441] : memref<16x312xbf16, #tpu.memory_space<vmem>>, vector<16x8xbf16>
    tpu.vector_store %arg17[%c0_440, %c264_441], %393 {strides = array<i32>} : memref<16x312xbf16, #tpu.memory_space<vmem>>, vector<16x8xbf16>,
    %c34_442 = arith.constant 34 : index
    %c0_443 = arith.constant 0 : index
    %395 = vector.load %arg16[%c34_442, %c0_443] : memref<54x8xf32, #tpu.memory_space<vmem>>, vector<16x8xf32>
    %396 = arith.truncf %395 : vector<16x8xf32> to vector<16x8xbf16>
    %c0_444 = arith.constant 0 : index
    %c272_445 = arith.constant 272 : index
    %397 = vector.load %arg17[%c0_444, %c272_445] : memref<16x312xbf16, #tpu.memory_space<vmem>>, vector<16x8xbf16>
    tpu.vector_store %arg17[%c0_444, %c272_445], %396 {strides = array<i32>} : memref<16x312xbf16, #tpu.memory_space<vmem>>, vector<16x8xbf16>,
    %c35_446 = arith.constant 35 : index
    %c0_447 = arith.constant 0 : index
    %398 = vector.load %arg16[%c35_446, %c0_447] : memref<54x8xf32, #tpu.memory_space<vmem>>, vector<16x8xf32>
    %399 = arith.truncf %398 : vector<16x8xf32> to vector<16x8xbf16>
    %c0_448 = arith.constant 0 : index
    %c280_449 = arith.constant 280 : index
    %400 = vector.load %arg17[%c0_448, %c280_449] : memref<16x312xbf16, #tpu.memory_space<vmem>>, vector<16x8xbf16>
    tpu.vector_store %arg17[%c0_448, %c280_449], %399 {strides = array<i32>} : memref<16x312xbf16, #tpu.memory_space<vmem>>, vector<16x8xbf16>,
    %c36_450 = arith.constant 36 : index
    %c0_451 = arith.constant 0 : index
    %401 = vector.load %arg16[%c36_450, %c0_451] : memref<54x8xf32, #tpu.memory_space<vmem>>, vector<16x8xf32>
    %402 = arith.truncf %401 : vector<16x8xf32> to vector<16x8xbf16>
    %c0_452 = arith.constant 0 : index
    %c288_453 = arith.constant 288 : index
    %403 = vector.load %arg17[%c0_452, %c288_453] : memref<16x312xbf16, #tpu.memory_space<vmem>>, vector<16x8xbf16>
    tpu.vector_store %arg17[%c0_452, %c288_453], %402 {strides = array<i32>} : memref<16x312xbf16, #tpu.memory_space<vmem>>, vector<16x8xbf16>,
    %c37_454 = arith.constant 37 : index
    %c0_455 = arith.constant 0 : index
    %404 = vector.load %arg16[%c37_454, %c0_455] : memref<54x8xf32, #tpu.memory_space<vmem>>, vector<16x8xf32>
    %405 = arith.truncf %404 : vector<16x8xf32> to vector<16x8xbf16>
    %c0_456 = arith.constant 0 : index
    %c296_457 = arith.constant 296 : index
    %406 = vector.load %arg17[%c0_456, %c296_457] : memref<16x312xbf16, #tpu.memory_space<vmem>>, vector<16x8xbf16>
    tpu.vector_store %arg17[%c0_456, %c296_457], %405 {strides = array<i32>} : memref<16x312xbf16, #tpu.memory_space<vmem>>, vector<16x8xbf16>,
    %c38_458 = arith.constant 38 : index
    %c0_459 = arith.constant 0 : index
    %407 = vector.load %arg16[%c38_458, %c0_459] : memref<54x8xf32, #tpu.memory_space<vmem>>, vector<16x8xf32>
    %408 = arith.truncf %407 : vector<16x8xf32> to vector<16x8xbf16>
    %c0_460 = arith.constant 0 : index
    %c304_461 = arith.constant 304 : index
    %409 = vector.load %arg17[%c0_460, %c304_461] : memref<16x312xbf16, #tpu.memory_space<vmem>>, vector<16x8xbf16>
    tpu.vector_store %arg17[%c0_460, %c304_461], %408 {strides = array<i32>} : memref<16x312xbf16, #tpu.memory_space<vmem>>, vector<16x8xbf16>,
    %c0_462 = arith.constant 0 : index
    %c0_463 = arith.constant 0 : index
    %410 = vector.load %arg17[%c0_462, %c0_463] : memref<16x312xbf16, #tpu.memory_space<vmem>>, vector<16x312xbf16>
    %cst_464 = arith.constant dense<0.000000e+00> : vector<16x24xf32>
    %411 = tpu.matmul %410, %289, %cst_464 {dimension_numbers = #tpu.dot_dimension_numbers<[1], [0], [0], [1], [0, 0, 1, 1], [], []>} : vector<16x312xbf16>, vector<312x24xbf16>, vector<16x24xf32> -> vector<16x24xf32>
    %c1_465 = arith.constant 1 : index
    %c0_466 = arith.constant 0 : index
    %412 = vector.load %arg18[%c1_465, %c0_466] : memref<18x32xf32, #tpu.memory_space<vmem>>, vector<16x32xf32>
    tpu.vector_store %arg18[%c1_465, %c0_466], %285 {strides = array<i32>} : memref<18x32xf32, #tpu.memory_space<vmem>>, vector<16x32xf32>,
    %c0_467 = arith.constant 0 : index
    %c0_468 = arith.constant 0 : index
    %413 = vector.load %arg18[%c0_467, %c0_468] : memref<18x32xf32, #tpu.memory_space<vmem>>, vector<16x32xf32>
    %c1_469 = arith.constant 1 : index
    %c0_470 = arith.constant 0 : index
    %414 = vector.load %arg18[%c1_469, %c0_470] : memref<18x32xf32, #tpu.memory_space<vmem>>, vector<16x32xf32>
    %415 = arith.maximumf %413, %414 : vector<16x32xf32>
    %c2_471 = arith.constant 2 : index
    %c0_472 = arith.constant 0 : index
    %416 = vector.load %arg18[%c2_471, %c0_472] : memref<18x32xf32, #tpu.memory_space<vmem>>, vector<16x32xf32>
    %417 = arith.maximumf %415, %416 : vector<16x32xf32>
    %418 = arith.truncf %417 : vector<16x32xf32> to vector<16x32xbf16>
    %cst_473 = arith.constant dense<0.000000e+00> : vector<16x8xf32>
    %419 = tpu.matmul %418, %290, %cst_473 {dimension_numbers = #tpu.dot_dimension_numbers<[1], [0], [0], [1], [0, 0, 1, 1], [], []>} : vector<16x32xbf16>, vector<32x8xbf16>, vector<16x8xf32> -> vector<16x8xf32>
    %420 = tpu.concatenate %411, %419 in 1 : vector<16x24xf32>, vector<16x8xf32> -> vector<16x32xf32>
    %421 = vector.broadcast %291 : vector<1x32xf32> to vector<16x32xf32>
    %422 = arith.addf %420, %421 : vector<16x32xf32>
    %cst_474 = arith.constant 0.000000e+00 : f32
    %423 = vector.broadcast %cst_474 : f32 to vector<16x32xf32>
    %424 = arith.maximumf %422, %423 : vector<16x32xf32>
    %425 = arith.addf %424, %10 : vector<16x32xf32>
    %c0_475 = arith.constant 0 : index
    %c0_476 = arith.constant 0 : index
    %426 = vector.load %arg14[%c0_475, %c0_476] : memref<1x32xf32, #tpu.memory_space<vmem>>, vector<1x32xf32>
    %427 = vector.broadcast %426 : vector<1x32xf32> to vector<16x32xf32>
    %428 = arith.addf %425, %427 : vector<16x32xf32>
    %cst_477 = arith.constant 0.000000e+00 : f32
    %429 = vector.broadcast %cst_477 : f32 to vector<16x32xf32>
    %430 = arith.maximumf %428, %429 : vector<16x32xf32>
    %c0_478 = arith.constant 0 : index
    %c0_479 = arith.constant 0 : index
    %c0_480 = arith.constant 0 : index
    %431 = vector.load %arg15[%c0_478, %c0_479, %c0_480] : memref<1x16x32xf32, #tpu.memory_space<vmem>>, vector<1x16x32xf32>
    %432 = vector.shape_cast %431 : vector<1x16x32xf32> to vector<16x32xf32>
    %433 = vector.shape_cast %430 : vector<16x32xf32> to vector<1x16x32xf32>
    tpu.vector_store %arg15[%c0_478, %c0_479, %c0_480], %433 {strides = array<i32>} : memref<1x16x32xf32, #tpu.memory_space<vmem>>, vector<1x16x32xf32>,
    return
  }
  func.func @transform_0(%arg0: i32) -> (i32, i32, i32) {
    %c0_i32 = arith.constant 0 : i32
    %c0_i32_0 = arith.constant 0 : i32
    %c0_i32_1 = arith.constant 0 : i32
    return %arg0, %c0_i32, %c0_i32_0 : i32, i32, i32
  }
  func.func @transform_1(%arg0: i32) -> (i32, i32) {
    %c0_i32 = arith.constant 0 : i32
    %c0_i32_0 = arith.constant 0 : i32
    %c0_i32_1 = arith.constant 0 : i32
    return %c0_i32, %c0_i32_0 : i32, i32
  }
  func.func @transform_2(%arg0: i32) -> (i32, i32) {
    %c0_i32 = arith.constant 0 : i32
    %c0_i32_0 = arith.constant 0 : i32
    %c0_i32_1 = arith.constant 0 : i32
    return %c0_i32, %c0_i32_0 : i32, i32
  }
  func.func @transform_3(%arg0: i32) -> (i32, i32) {
    %c0_i32 = arith.constant 0 : i32
    %c0_i32_0 = arith.constant 0 : i32
    %c0_i32_1 = arith.constant 0 : i32
    return %c0_i32, %c0_i32_0 : i32, i32
  }
  func.func @transform_4(%arg0: i32) -> (i32, i32) {
    %c0_i32 = arith.constant 0 : i32
    %c0_i32_0 = arith.constant 0 : i32
    %c0_i32_1 = arith.constant 0 : i32
    return %c0_i32, %c0_i32_0 : i32, i32
  }
  func.func @transform_5(%arg0: i32) -> (i32, i32) {
    %c0_i32 = arith.constant 0 : i32
    %c0_i32_0 = arith.constant 0 : i32
    %c0_i32_1 = arith.constant 0 : i32
    return %c0_i32, %c0_i32_0 : i32, i32
  }
  func.func @transform_6(%arg0: i32) -> (i32, i32) {
    %c0_i32 = arith.constant 0 : i32
    %c0_i32_0 = arith.constant 0 : i32
    %c0_i32_1 = arith.constant 0 : i32
    return %c0_i32, %c0_i32_0 : i32, i32
  }
  func.func @transform_7(%arg0: i32) -> (i32, i32) {
    %c0_i32 = arith.constant 0 : i32
    %c0_i32_0 = arith.constant 0 : i32
    %c0_i32_1 = arith.constant 0 : i32
    return %c0_i32, %c0_i32_0 : i32, i32
  }
  func.func @transform_8(%arg0: i32) -> (i32, i32) {
    %c0_i32 = arith.constant 0 : i32
    %c0_i32_0 = arith.constant 0 : i32
    %c0_i32_1 = arith.constant 0 : i32
    return %c0_i32, %c0_i32_0 : i32, i32
  }
  func.func @transform_9(%arg0: i32) -> (i32, i32) {
    %c0_i32 = arith.constant 0 : i32
    %c0_i32_0 = arith.constant 0 : i32
    %c0_i32_1 = arith.constant 0 : i32
    return %c0_i32, %c0_i32_0 : i32, i32
  }
  func.func @transform_10(%arg0: i32) -> (i32, i32) {
    %c0_i32 = arith.constant 0 : i32
    %c0_i32_0 = arith.constant 0 : i32
    %c0_i32_1 = arith.constant 0 : i32
    return %c0_i32, %c0_i32_0 : i32, i32
  }
  func.func @transform_11(%arg0: i32) -> (i32, i32) {
    %c0_i32 = arith.constant 0 : i32
    %c0_i32_0 = arith.constant 0 : i32
    %c0_i32_1 = arith.constant 0 : i32
    return %c0_i32, %c0_i32_0 : i32, i32
  }
  func.func @transform_12(%arg0: i32) -> (i32, i32) {
    %c0_i32 = arith.constant 0 : i32
    %c0_i32_0 = arith.constant 0 : i32
    %c0_i32_1 = arith.constant 0 : i32
    return %c0_i32, %c0_i32_0 : i32, i32
  }
  func.func @transform_13(%arg0: i32) -> (i32, i32) {
    %c0_i32 = arith.constant 0 : i32
    %c0_i32_0 = arith.constant 0 : i32
    %c0_i32_1 = arith.constant 0 : i32
    return %c0_i32, %c0_i32_0 : i32, i32
  }
  func.func @transform_14(%arg0: i32) -> (i32, i32, i32) {
    %c0_i32 = arith.constant 0 : i32
    %c0_i32_0 = arith.constant 0 : i32
    %c0_i32_1 = arith.constant 0 : i32
    return %arg0, %c0_i32, %c0_i32_0 : i32, i32, i32
  }
}

</mosaic_0001>

<llo_original>
// kernel: _lambda_.1
$region0: #{_lambda_.1}
  #allocation0 [shape = 'u32[]', space=smem, size = 0x4, offset = 0x4, fixed_abs, tag = 'smem constant byte address 0x4 - core index']
  #allocation1 [shape = 'u32[144,128]{1,0:T(1,128)}', space=vmem, size = 0x12000, scoped, tag = 'internal scratch']
  #allocation2 [shape = 'f32[54,8]{1,0:T(8,128)}', space=vmem, size = 0x7000, scoped, tag = 'scratch operand']
  #allocation3 [shape = 'bf16[16,312]{1,0:T(16,128)(2,1)}', space=vmem, size = 0x3000, scoped, tag = 'scratch operand']
  #allocation4 [shape = 'f32[18,32]{1,0:T(8,128)}', space=vmem, size = 0x3000, scoped, tag = 'scratch operand']
  %s0 = inlined_call_operand.vmem [shape: f32[2,16,4], index: 0, kind: input, shape index: {}]
  %s1 = inlined_call_operand.vmem [shape: bf16[4,40], index: 1, kind: input, shape index: {}]
  %s2 = inlined_call_operand.hbm [shape: bf16[312,24], index: 2, kind: input, shape index: {}]
  %s3 = inlined_call_operand.vmem [shape: bf16[4,8], index: 3, kind: input, shape index: {}]
  %s4 = inlined_call_operand.hbm [shape: f32[1,32], index: 4, kind: input, shape index: {}]
  %s5 = inlined_call_operand.vmem [shape: bf16[32,8], index: 5, kind: input, shape index: {}]
  %s6 = inlined_call_operand.hbm [shape: bf16[312,24], index: 6, kind: input, shape index: {}]
  %s7 = inlined_call_operand.vmem [shape: bf16[32,8], index: 7, kind: input, shape index: {}]
  %s8 = inlined_call_operand.hbm [shape: f32[1,32], index: 8, kind: input, shape index: {}]
  %s9 = inlined_call_operand.vmem [shape: bf16[32,8], index: 9, kind: input, shape index: {}]
  %s10 = inlined_call_operand.hbm [shape: bf16[312,24], index: 10, kind: input, shape index: {}]
  %s11 = inlined_call_operand.vmem [shape: bf16[32,8], index: 11, kind: input, shape index: {}]
  %s12 = inlined_call_operand.hbm [shape: f32[1,32], index: 12, kind: input, shape index: {}]
  %s13 = inlined_call_operand.vmem [shape: f32[1,32], index: 13, kind: input, shape index: {}]
  %s14 = inlined_call_operand.hbm [shape: f32[2,16,32], index: 14, kind: output, shape index: {}]
  %s15 = sld [smem:[#allocation0]]
  $region113: #{_lambda_.1} parent=0
    _
  %s17 = ssub.s32 1, %s15
  %s18 = scalar_select 0, %s17, %s15
  $region1: #{_lambda_.1} parent=0
    #allocation5 [shape = 'u8[79872]{0}', space=vmem, size = 0x13800, scoped, tag = 'input window, operand 2, single buffered']
    #allocation6 [shape = 's32[2]{0}', space=sflag, size = 0x8, scoped, tag = 'scoped memory for _lambda_.1']
    #allocation7 [shape = 's32[2]{0}', space=sflag, size = 0x8, scoped, tag = 'scoped memory for _lambda_.1']
    #allocation8 [shape = 'u8[512]{0}', space=vmem, size = 0x400, scoped, tag = 'input window, operand 4, single buffered']
    #allocation9 [shape = 's32[1]{0}', space=sflag, size = 0x4, scoped, tag = 'scoped memory for _lambda_.1']
    #allocation10 [shape = 'u8[79872]{0}', space=vmem, size = 0x13800, scoped, tag = 'input window, operand 6, single buffered']
    #allocation11 [shape = 'u8[512]{0}', space=vmem, size = 0x400, scoped, tag = 'input window, operand 8, single buffered']
    #allocation12 [shape = 's32[1]{0}', space=sflag, size = 0x4, scoped, tag = 'scoped memory for _lambda_.1']
    #allocation13 [shape = 'u8[79872]{0}', space=vmem, size = 0x13800, scoped, tag = 'input window, operand 10, single buffered']
    #allocation14 [shape = 'u8[512]{0}', space=vmem, size = 0x400, scoped, tag = 'input window, operand 12, single buffered']
    #allocation15 [shape = 's32[1]{0}', space=sflag, size = 0x4, scoped, tag = 'scoped memory for _lambda_.1']
    #allocation16 [shape = 'u8[16384]{0}', space=vmem, size = 0x4000, scoped, tag = 'output window, operand 0']
    %19 = vsyncpa [#allocation6], 0
    %20 = vsyncpa [#allocation9], 0
    %21 = vsyncpa [#allocation12], 0
    %22 = vsyncpa [#allocation15], 0
    %23 = vsyncpa [#allocation7], 0
    %s24 = scalar_lea.sflag [#allocation7], 1
    %25 = vsyncpa %s24, 0
    loop: start=0, step=1, limit=4
    $region2: #{_lambda_.1} parent=1 // loop_pre_header
      _
    $region3: #{_lambda_.1} parent=1 // loop_header
      %s27 = sphi 0, %s31
      %p28 = scmp.ge.s32.totalorder %s27, 4
      %s37 = sphi 0, %s39
      %s40 = sphi 0, %s37
      %s41 = sphi 0, %s40
      %s57 = sphi 0, %s41
      %s61 = sphi 0, %s61
      %s63 = sphi 0, %s61
      %s64 = sphi 0, %s63
      %s78 = sphi 0, %s64
      %s82 = sphi 0, %s82
      %s84 = sphi 0, %s82
      %s85 = sphi 0, %s84
      %s99 = sphi 0, %s85
      %s103 = sphi 0, %s103
      %s105 = sphi 0, %s103
      %s106 = sphi 0, %s105
      %s120 = sphi 0, %s106
      %s124 = sphi 0, %s124
      %s126 = sphi 0, %s124
      %s127 = sphi 0, %s126
      %s141 = sphi 0, %s127
      %s145 = sphi 0, %s145
      %s147 = sphi 0, %s145
      %s148 = sphi 0, %s147
      %s162 = sphi 0, %s148
      %s166 = sphi 0, %s166
      %s168 = sphi 0, %s166
      %s169 = sphi 0, %s168
      %s183 = sphi 0, %s169
      %s187 = sphi 0, %s187
      %s189 = sphi 0, %s187
      %s190 = sphi 0, %s189
      %s204 = sphi 0, %s190
      %s208 = sphi 0, %s208
      %s210 = sphi 0, %s208
      %s211 = sphi 0, %s210
      %s225 = sphi 0, %s211
      %s229 = sphi 0, %s229
      %s231 = sphi 0, %s229
      %s232 = sphi 0, %s231
      %s246 = sphi 0, %s232
      %s250 = sphi 0, %s250
      %s252 = sphi 0, %s250
      %s253 = sphi 0, %s252
      %s267 = sphi 0, %s253
      %s271 = sphi 0, %s271
      %s273 = sphi 0, %s271
      %s274 = sphi 0, %s273
      %s288 = sphi 0, %s274
      %s292 = sphi 0, %s292
      %s294 = sphi 0, %s292
      %s295 = sphi 0, %s294
      %s309 = sphi 0, %s295
      %s313 = sphi 0, %s313
      %s315 = sphi 0, %s313
      %s316 = sphi 0, %s315
      %s330 = sphi 0, %s316
      %s336 = sphi 0, %s338
      %s339 = sphi 0, %s336
      %s340 = sphi 0, %s339
      %s356 = sphi 0, %s340
    $region4: #{_lambda_.1} parent=1 // loop_header_branch
      %30 = sbr.rel (%p28) target = $region8
    $region5: #{_lambda_.1} parent=1 // loop_body
      %s32 = ssub.s32 %s27, 1
      %s33 = ssub.s32 %s27, 2
      %s34 = sadd.s32 %s27, 1
      %s35 = ssub.s32 %s27, %s34
      %p36 = scmp.eq.s32.totalorder %s35, 0
      %s38 = sadd.s32 %s37, 1
      %s39 = scalar_select %p36, %s37, %s38
      %p42 = pneg %p36
      %p43 = scmp.eq.s32.totalorder %s27, 1
      %p44 = por %p42, %p43
      %p45 = scmp.ne.s32.totalorder %s37, %s40
      %p46 = scmp.eq.s32.totalorder %s27, 0
      %p47 = por %p45, %p46
      %p48 = scmp.ne.s32.totalorder %s37, %s40
      %p49 = scmp.eq.s32.totalorder %s32, 1
      %p50 = por %p48, %p49
      %p51 = scmp.ne.s32.totalorder %s40, %s41
      %p52 = scmp.eq.s32.totalorder %s32, 0
      %p53 = por %p51, %p52
      %p54 = scmp.ne.s32.totalorder %s40, %s41
      %p55 = scmp.eq.s32.totalorder %s33, 1
      %p56 = por %p54, %p55
      %p58 = scmp.ne.s32.totalorder %s41, %s57
      %p59 = scmp.eq.s32.totalorder %s33, 0
      %p60 = por %p58, %p59
      %s62 = sadd.s32 %s61, 1
      %p65 = scmp.eq.s32.totalorder %s27, 1
      %p66 = scmp.ne.s32.totalorder %s61, %s63
      %p67 = scmp.eq.s32.totalorder %s27, 0
      %p68 = por %p66, %p67
      %p69 = scmp.ne.s32.totalorder %s61, %s63
      %p70 = scmp.eq.s32.totalorder %s32, 1
      %p71 = por %p69, %p70
      %p72 = scmp.ne.s32.totalorder %s63, %s64
      %p73 = scmp.eq.s32.totalorder %s32, 0
      %p74 = por %p72, %p73
      %p75 = scmp.ne.s32.totalorder %s63, %s64
      %p76 = scmp.eq.s32.totalorder %s33, 1
      %p77 = por %p75, %p76
      %p79 = scmp.ne.s32.totalorder %s64, %s78
      %p80 = scmp.eq.s32.totalorder %s33, 0
      %p81 = por %p79, %p80
      %s83 = sadd.s32 %s82, 1
      %p86 = scmp.eq.s32.totalorder %s27, 1
      %p87 = scmp.ne.s32.totalorder %s82, %s84
      %p88 = scmp.eq.s32.totalorder %s27, 0
      %p89 = por %p87, %p88
      %p90 = scmp.ne.s32.totalorder %s82, %s84
      %p91 = scmp.eq.s32.totalorder %s32, 1
      %p92 = por %p90, %p91
      %p93 = scmp.ne.s32.totalorder %s84, %s85
      %p94 = scmp.eq.s32.totalorder %s32, 0
      %p95 = por %p93, %p94
      %p96 = scmp.ne.s32.totalorder %s84, %s85
      %p97 = scmp.eq.s32.totalorder %s33, 1
      %p98 = por %p96, %p97
      %p100 = scmp.ne.s32.totalorder %s85, %s99
      %p101 = scmp.eq.s32.totalorder %s33, 0
      %p102 = por %p100, %p101
      %s104 = sadd.s32 %s103, 1
      %p107 = scmp.eq.s32.totalorder %s27, 1
      %p108 = scmp.ne.s32.totalorder %s103, %s105
      %p109 = scmp.eq.s32.totalorder %s27, 0
      %p110 = por %p108, %p109
      %p111 = scmp.ne.s32.totalorder %s103, %s105
      %p112 = scmp.eq.s32.totalorder %s32, 1
      %p113 = por %p111, %p112
      %p114 = scmp.ne.s32.totalorder %s105, %s106
      %p115 = scmp.eq.s32.totalorder %s32, 0
      %p116 = por %p114, %p115
      %p117 = scmp.ne.s32.totalorder %s105, %s106
      %p118 = scmp.eq.s32.totalorder %s33, 1
      %p119 = por %p117, %p118
      %p121 = scmp.ne.s32.totalorder %s106, %s120
      %p122 = scmp.eq.s32.totalorder %s33, 0
      %p123 = por %p121, %p122
      %s125 = sadd.s32 %s124, 1
      %p128 = scmp.eq.s32.totalorder %s27, 1
      %p129 = scmp.ne.s32.totalorder %s124, %s126
      %p130 = scmp.eq.s32.totalorder %s27, 0
      %p131 = por %p129, %p130
      %p132 = scmp.ne.s32.totalorder %s124, %s126
      %p133 = scmp.eq.s32.totalorder %s32, 1
      %p134 = por %p132, %p133
      %p135 = scmp.ne.s32.totalorder %s126, %s127
      %p136 = scmp.eq.s32.totalorder %s32, 0
      %p137 = por %p135, %p136
      %p138 = scmp.ne.s32.totalorder %s126, %s127
      %p139 = scmp.eq.s32.totalorder %s33, 1
      %p140 = por %p138, %p139
      %p142 = scmp.ne.s32.totalorder %s127, %s141
      %p143 = scmp.eq.s32.totalorder %s33, 0
      %p144 = por %p142, %p143
      %s146 = sadd.s32 %s145, 1
      %p149 = scmp.eq.s32.totalorder %s27, 1
      %p150 = scmp.ne.s32.totalorder %s145, %s147
      %p151 = scmp.eq.s32.totalorder %s27, 0
      %p152 = por %p150, %p151
      %p153 = scmp.ne.s32.totalorder %s145, %s147
      %p154 = scmp.eq.s32.totalorder %s32, 1
      %p155 = por %p153, %p154
      %p156 = scmp.ne.s32.totalorder %s147, %s148
      %p157 = scmp.eq.s32.totalorder %s32, 0
      %p158 = por %p156, %p157
      %p159 = scmp.ne.s32.totalorder %s147, %s148
      %p160 = scmp.eq.s32.totalorder %s33, 1
      %p161 = por %p159, %p160
      %p163 = scmp.ne.s32.totalorder %s148, %s162
      %p164 = scmp.eq.s32.totalorder %s33, 0
      %p165 = por %p163, %p164
      %s167 = sadd.s32 %s166, 1
      %p170 = scmp.eq.s32.totalorder %s27, 1
      %p171 = scmp.ne.s32.totalorder %s166, %s168
      %p172 = scmp.eq.s32.totalorder %s27, 0
      %p173 = por %p171, %p172
      %p174 = scmp.ne.s32.totalorder %s166, %s168
      %p175 = scmp.eq.s32.totalorder %s32, 1
      %p176 = por %p174, %p175
      %p177 = scmp.ne.s32.totalorder %s168, %s169
      %p178 = scmp.eq.s32.totalorder %s32, 0
      %p179 = por %p177, %p178
      %p180 = scmp.ne.s32.totalorder %s168, %s169
      %p181 = scmp.eq.s32.totalorder %s33, 1
      %p182 = por %p180, %p181
      %p184 = scmp.ne.s32.totalorder %s169, %s183
      %p185 = scmp.eq.s32.totalorder %s33, 0
      %p186 = por %p184, %p185
      %s188 = sadd.s32 %s187, 1
      %p191 = scmp.eq.s32.totalorder %s27, 1
      %p192 = scmp.ne.s32.totalorder %s187, %s189
      %p193 = scmp.eq.s32.totalorder %s27, 0
      %p194 = por %p192, %p193
      %p195 = scmp.ne.s32.totalorder %s187, %s189
      %p196 = scmp.eq.s32.totalorder %s32, 1
      %p197 = por %p195, %p196
      %p198 = scmp.ne.s32.totalorder %s189, %s190
      %p199 = scmp.eq.s32.totalorder %s32, 0
      %p200 = por %p198, %p199
      %p201 = scmp.ne.s32.totalorder %s189, %s190
      %p202 = scmp.eq.s32.totalorder %s33, 1
      %p203 = por %p201, %p202
      %p205 = scmp.ne.s32.totalorder %s190, %s204
      %p206 = scmp.eq.s32.totalorder %s33, 0
      %p207 = por %p205, %p206
      %s209 = sadd.s32 %s208, 1
      %p212 = scmp.eq.s32.totalorder %s27, 1
      %p213 = scmp.ne.s32.totalorder %s208, %s210
      %p214 = scmp.eq.s32.totalorder %s27, 0
      %p215 = por %p213, %p214
      %p216 = scmp.ne.s32.totalorder %s208, %s210
      %p217 = scmp.eq.s32.totalorder %s32, 1
      %p218 = por %p216, %p217
      %p219 = scmp.ne.s32.totalorder %s210, %s211
      %p220 = scmp.eq.s32.totalorder %s32, 0
      %p221 = por %p219, %p220
      %p222 = scmp.ne.s32.totalorder %s210, %s211
      %p223 = scmp.eq.s32.totalorder %s33, 1
      %p224 = por %p222, %p223
      %p226 = scmp.ne.s32.totalorder %s211, %s225
      %p227 = scmp.eq.s32.totalorder %s33, 0
      %p228 = por %p226, %p227
      %s230 = sadd.s32 %s229, 1
      %p233 = scmp.eq.s32.totalorder %s27, 1
      %p234 = scmp.ne.s32.totalorder %s229, %s231
      %p235 = scmp.eq.s32.totalorder %s27, 0
      %p236 = por %p234, %p235
      %p237 = scmp.ne.s32.totalorder %s229, %s231
      %p238 = scmp.eq.s32.totalorder %s32, 1
      %p239 = por %p237, %p238
      %p240 = scmp.ne.s32.totalorder %s231, %s232
      %p241 = scmp.eq.s32.totalorder %s32, 0
      %p242 = por %p240, %p241
      %p243 = scmp.ne.s32.totalorder %s231, %s232
      %p244 = scmp.eq.s32.totalorder %s33, 1
      %p245 = por %p243, %p244
      %p247 = scmp.ne.s32.totalorder %s232, %s246
      %p248 = scmp.eq.s32.totalorder %s33, 0
      %p249 = por %p247, %p248
      %s251 = sadd.s32 %s250, 1
      %p254 = scmp.eq.s32.totalorder %s27, 1
      %p255 = scmp.ne.s32.totalorder %s250, %s252
      %p256 = scmp.eq.s32.totalorder %s27, 0
      %p257 = por %p255, %p256
      %p258 = scmp.ne.s32.totalorder %s250, %s252
      %p259 = scmp.eq.s32.totalorder %s32, 1
      %p260 = por %p258, %p259
      %p261 = scmp.ne.s32.totalorder %s252, %s253
      %p262 = scmp.eq.s32.totalorder %s32, 0
      %p263 = por %p261, %p262
      %p264 = scmp.ne.s32.totalorder %s252, %s253
      %p265 = scmp.eq.s32.totalorder %s33, 1
      %p266 = por %p264, %p265
      %p268 = scmp.ne.s32.totalorder %s253, %s267
      %p269 = scmp.eq.s32.totalorder %s33, 0
      %p270 = por %p268, %p269
      %s272 = sadd.s32 %s271, 1
      %p275 = scmp.eq.s32.totalorder %s27, 1
      %p276 = scmp.ne.s32.totalorder %s271, %s273
      %p277 = scmp.eq.s32.totalorder %s27, 0
      %p278 = por %p276, %p277
      %p279 = scmp.ne.s32.totalorder %s271, %s273
      %p280 = scmp.eq.s32.totalorder %s32, 1
      %p281 = por %p279, %p280
      %p282 = scmp.ne.s32.totalorder %s273, %s274
      %p283 = scmp.eq.s32.totalorder %s32, 0
      %p284 = por %p282, %p283
      %p285 = scmp.ne.s32.totalorder %s273, %s274
      %p286 = scmp.eq.s32.totalorder %s33, 1
      %p287 = por %p285, %p286
      %p289 = scmp.ne.s32.totalorder %s274, %s288
      %p290 = scmp.eq.s32.totalorder %s33, 0
      %p291 = por %p289, %p290
      %s293 = sadd.s32 %s292, 1
      %p296 = scmp.eq.s32.totalorder %s27, 1
      %p297 = scmp.ne.s32.totalorder %s292, %s294
      %p298 = scmp.eq.s32.totalorder %s27, 0
      %p299 = por %p297, %p298
      %p300 = scmp.ne.s32.totalorder %s292, %s294
      %p301 = scmp.eq.s32.totalorder %s32, 1
      %p302 = por %p300, %p301
      %p303 = scmp.ne.s32.totalorder %s294, %s295
      %p304 = scmp.eq.s32.totalorder %s32, 0
      %p305 = por %p303, %p304
      %p306 = scmp.ne.s32.totalorder %s294, %s295
      %p307 = scmp.eq.s32.totalorder %s33, 1
      %p308 = por %p306, %p307
      %p310 = scmp.ne.s32.totalorder %s295, %s309
      %p311 = scmp.eq.s32.totalorder %s33, 0
      %p312 = por %p310, %p311
      %s314 = sadd.s32 %s313, 1
      %p317 = scmp.eq.s32.totalorder %s27, 1
      %p318 = scmp.ne.s32.totalorder %s313, %s315
      %p319 = scmp.eq.s32.totalorder %s27, 0
      %p320 = por %p318, %p319
      %p321 = scmp.ne.s32.totalorder %s313, %s315
      %p322 = scmp.eq.s32.totalorder %s32, 1
      %p323 = por %p321, %p322
      %p324 = scmp.ne.s32.totalorder %s315, %s316
      %p325 = scmp.eq.s32.totalorder %s32, 0
      %p326 = por %p324, %p325
      %p327 = scmp.ne.s32.totalorder %s315, %s316
      %p328 = scmp.eq.s32.totalorder %s33, 1
      %p329 = por %p327, %p328
      %p331 = scmp.ne.s32.totalorder %s316, %s330
      %p332 = scmp.eq.s32.totalorder %s33, 0
      %p333 = por %p331, %p332
      %s334 = ssub.s32 %s27, %s34
      %p335 = scmp.eq.s32.totalorder %s334, 0
      %s337 = sadd.s32 %s336, 1
      %s338 = scalar_select %p335, %s336, %s337
      %p341 = pneg %p335
      %p342 = scmp.eq.s32.totalorder %s27, 1
      %p343 = por %p341, %p342
      %p344 = scmp.ne.s32.totalorder %s336, %s339
      %p345 = scmp.eq.s32.totalorder %s27, 0
      %p346 = por %p344, %p345
      %p347 = scmp.ne.s32.totalorder %s336, %s339
      %p348 = scmp.eq.s32.totalorder %s32, 1
      %p349 = por %p347, %p348
      %p350 = scmp.ne.s32.totalorder %s339, %s340
      %p351 = scmp.eq.s32.totalorder %s32, 0
      %p352 = por %p350, %p351
      %p353 = scmp.ne.s32.totalorder %s339, %s340
      %p354 = scmp.eq.s32.totalorder %s33, 1
      %p355 = por %p353, %p354
      %p357 = scmp.ne.s32.totalorder %s340, %s356
      %p358 = scmp.eq.s32.totalorder %s33, 0
      %p359 = por %p357, %p358
      %p360 = scmp.le.s32.totalorder 1, %s27
      %p361 = scmp.lt.s32.totalorder %s27, 3
      %p362 = pnand %p360, %p361
      %p363 = pneg %p362
      // Predicated region
      $region9: #{_lambda_.1} parent=5 // pred_check
        _
      $region10: #{_lambda_.1} parent=5 // pred_check_branch
        %365 = sbr.rel (%p362) target = $region12
      $region11: #{_lambda_.1} parent=5 // pred_region
        %s366 = ssub.s32 %s27, 1
        // Predicated region
        $region13: #{_lambda_.1} parent=11 // pred_check
          %p367 = pneg %p74
        $region14: #{_lambda_.1} parent=11 // pred_check_branch
          %369 = sbr.rel (%p367) target = $region16
        $region15: #{_lambda_.1} parent=11 // pred_region
          _
        $region16: #{_lambda_.1} parent=11 // pred_fallthru
          _
        // Predicated region
        $region17: #{_lambda_.1} parent=11 // pred_check
          %p370 = pneg %p95
        $region18: #{_lambda_.1} parent=11 // pred_check_branch
          %372 = sbr.rel (%p370) target = $region20
        $region19: #{_lambda_.1} parent=11 // pred_region
          %s374 = ssub.s32 2496, 2496
          %375 = vsyncadd [#allocation6], %s374
          %s376 = sshll.u32 [#allocation5], 4
          %s377 = int_to_ptr.vmem [resolvable:$true] %s376
          %382 = dma.hbm_to_vmem [thread:$0]  %s2, 2496, %s377, [#allocation6], 64, 64, 4
        $region20: #{_lambda_.1} parent=11 // pred_fallthru
          _
        // Predicated region
        $region21: #{_lambda_.1} parent=11 // pred_check
          %p383 = pneg %p116
        $region22: #{_lambda_.1} parent=11 // pred_check_branch
          %385 = sbr.rel (%p383) target = $region24
        $region23: #{_lambda_.1} parent=11 // pred_region
          _
        $region24: #{_lambda_.1} parent=11 // pred_fallthru
          _
        // Predicated region
        $region25: #{_lambda_.1} parent=11 // pred_check
          %p386 = pneg %p137
        $region26: #{_lambda_.1} parent=11 // pred_check_branch
          %388 = sbr.rel (%p386) target = $region28
        $region27: #{_lambda_.1} parent=11 // pred_region
          %s390 = ssub.s32 16, 16
          %391 = vsyncadd [#allocation9], %s390
          %s393 = sshll.u32 [#allocation8], 4
          %s394 = int_to_ptr.vmem [resolvable:$true] %s393
          %396 = dma.hbm_to_vmem [thread:$0]  %s4, 16, %s394, [#allocation9]
        $region28: #{_lambda_.1} parent=11 // pred_fallthru
          _
        // Predicated region
        $region29: #{_lambda_.1} parent=11 // pred_check
          %p397 = pneg %p158
        $region30: #{_lambda_.1} parent=11 // pred_check_branch
          %399 = sbr.rel (%p397) target = $region32
        $region31: #{_lambda_.1} parent=11 // pred_region
          _
        $region32: #{_lambda_.1} parent=11 // pred_fallthru
          _
        // Predicated region
        $region33: #{_lambda_.1} parent=11 // pred_check
          %p400 = pneg %p179
        $region34: #{_lambda_.1} parent=11 // pred_check_branch
          %402 = sbr.rel (%p400) target = $region36
        $region35: #{_lambda_.1} parent=11 // pred_region
          %s404 = ssub.s32 2496, 2496
          %405 = vsyncadd [#allocation9], %s404
          %s406 = sshll.u32 [#allocation10], 4
          %s407 = int_to_ptr.vmem [resolvable:$true] %s406
          %412 = dma.hbm_to_vmem [thread:$0]  %s6, 2496, %s407, [#allocation9], 64, 64, 4
        $region36: #{_lambda_.1} parent=11 // pred_fallthru
          _
        // Predicated region
        $region37: #{_lambda_.1} parent=11 // pred_check
          %p413 = pneg %p200
        $region38: #{_lambda_.1} parent=11 // pred_check_branch
          %415 = sbr.rel (%p413) target = $region40
        $region39: #{_lambda_.1} parent=11 // pred_region
          _
        $region40: #{_lambda_.1} parent=11 // pred_fallthru
          _
        // Predicated region
        $region41: #{_lambda_.1} parent=11 // pred_check
          %p416 = pneg %p221
        $region42: #{_lambda_.1} parent=11 // pred_check_branch
          %418 = sbr.rel (%p416) target = $region44
        $region43: #{_lambda_.1} parent=11 // pred_region
          %s420 = ssub.s32 16, 16
          %421 = vsyncadd [#allocation12], %s420
          %s423 = sshll.u32 [#allocation11], 4
          %s424 = int_to_ptr.vmem [resolvable:$true] %s423
          %426 = dma.hbm_to_vmem [thread:$0]  %s8, 16, %s424, [#allocation12]
        $region44: #{_lambda_.1} parent=11 // pred_fallthru
          _
        // Predicated region
        $region45: #{_lambda_.1} parent=11 // pred_check
          %p427 = pneg %p242
        $region46: #{_lambda_.1} parent=11 // pred_check_branch
          %429 = sbr.rel (%p427) target = $region48
        $region47: #{_lambda_.1} parent=11 // pred_region
          _
        $region48: #{_lambda_.1} parent=11 // pred_fallthru
          _
        // Predicated region
        $region49: #{_lambda_.1} parent=11 // pred_check
          %p430 = pneg %p263
        $region50: #{_lambda_.1} parent=11 // pred_check_branch
          %432 = sbr.rel (%p430) target = $region52
        $region51: #{_lambda_.1} parent=11 // pred_region
          %s434 = ssub.s32 2496, 2496
          %435 = vsyncadd [#allocation12], %s434
          %s436 = sshll.u32 [#allocation13], 4
          %s437 = int_to_ptr.vmem [resolvable:$true] %s436
          %442 = dma.hbm_to_vmem [thread:$0]  %s10, 2496, %s437, [#allocation12], 64, 64, 4
        $region52: #{_lambda_.1} parent=11 // pred_fallthru
          _
        // Predicated region
        $region53: #{_lambda_.1} parent=11 // pred_check
          %p443 = pneg %p284
        $region54: #{_lambda_.1} parent=11 // pred_check_branch
          %445 = sbr.rel (%p443) target = $region56
        $region55: #{_lambda_.1} parent=11 // pred_region
          _
        $region56: #{_lambda_.1} parent=11 // pred_fallthru
          _
        // Predicated region
        $region57: #{_lambda_.1} parent=11 // pred_check
          %p446 = pneg %p305
        $region58: #{_lambda_.1} parent=11 // pred_check_branch
          %448 = sbr.rel (%p446) target = $region60
        $region59: #{_lambda_.1} parent=11 // pred_region
          %s450 = ssub.s32 16, 16
          %451 = vsyncadd [#allocation15], %s450
          %s453 = sshll.u32 [#allocation14], 4
          %s454 = int_to_ptr.vmem [resolvable:$true] %s453
          %456 = dma.hbm_to_vmem [thread:$0]  %s12, 16, %s454, [#allocation15]
        $region60: #{_lambda_.1} parent=11 // pred_fallthru
          _
        // Predicated region
        $region61: #{_lambda_.1} parent=11 // pred_check
          %p457 = pneg %p326
        $region62: #{_lambda_.1} parent=11 // pred_check_branch
          %459 = sbr.rel (%p457) target = $region64
        $region63: #{_lambda_.1} parent=11 // pred_region
          _
        $region64: #{_lambda_.1} parent=11 // pred_fallthru
          _
      $region12: #{_lambda_.1} parent=5 // pred_fallthru
        _
      %p460 = scmp.lt.s32.totalorder %s27, 2
      // Predicated region
      $region65: #{_lambda_.1} parent=5 // pred_check
        %p461 = pneg %p460
      $region66: #{_lambda_.1} parent=5 // pred_check_branch
        %463 = sbr.rel (%p461) target = $region68
      $region67: #{_lambda_.1} parent=5 // pred_region
        // Predicated region
        $region69: #{_lambda_.1} parent=67 // pred_check
          %p464 = pneg %p47
        $region70: #{_lambda_.1} parent=67 // pred_check_branch
          %466 = sbr.rel (%p464) target = $region72
        $region71: #{_lambda_.1} parent=67 // pred_region
          %p467 = scmp.lt.s32.totalorder %s27, 1
          %s468 = scalar_select %p467, %s27, 1
          %s469 = smul.addr %s468, 2
          %s470 = smul.addr %s469, 8
          %s471 = scalar_lea.vmem %s0, %s470
        $region72: #{_lambda_.1} parent=67 // pred_fallthru
          _
      $region68: #{_lambda_.1} parent=5 // pred_fallthru
        _
      %p472 = scmp.le.s32.totalorder 1, %s27
      %p473 = scmp.lt.s32.totalorder %s27, 3
      %p474 = pnand %p472, %p473
      %p475 = pneg %p474
      // Predicated region
      $region73: #{_lambda_.1} parent=5 // pred_check
        _
      $region74: #{_lambda_.1} parent=5 // pred_check_branch
        %477 = sbr.rel (%p474) target = $region76
      $region75: #{_lambda_.1} parent=5 // pred_region
        %s478 = ssub.s32 %s27, 1
        // Predicated region
        $region77: #{_lambda_.1} parent=75 // pred_check
          %p479 = pneg %p95
        $region78: #{_lambda_.1} parent=75 // pred_check_branch
          %481 = sbr.rel (%p479) target = $region80
        $region79: #{_lambda_.1} parent=75 // pred_region
          %482 = dma.done [#allocation6], 2496
        $region80: #{_lambda_.1} parent=75 // pred_fallthru
          _
        // Predicated region
        $region81: #{_lambda_.1} parent=75 // pred_check
          %p483 = pneg %p137
        $region82: #{_lambda_.1} parent=75 // pred_check_branch
          %485 = sbr.rel (%p483) target = $region84
        $region83: #{_lambda_.1} parent=75 // pred_region
          %486 = dma.done [#allocation9], 16
        $region84: #{_lambda_.1} parent=75 // pred_fallthru
          _
        // Predicated region
        $region85: #{_lambda_.1} parent=75 // pred_check
          %p487 = pneg %p179
        $region86: #{_lambda_.1} parent=75 // pred_check_branch
          %489 = sbr.rel (%p487) target = $region88
        $region87: #{_lambda_.1} parent=75 // pred_region
          %490 = dma.done [#allocation9], 2496
        $region88: #{_lambda_.1} parent=75 // pred_fallthru
          _
        // Predicated region
        $region89: #{_lambda_.1} parent=75 // pred_check
          %p491 = pneg %p221
        $region90: #{_lambda_.1} parent=75 // pred_check_branch
          %493 = sbr.rel (%p491) target = $region92
        $region91: #{_lambda_.1} parent=75 // pred_region
          %494 = dma.done [#allocation12], 16
        $region92: #{_lambda_.1} parent=75 // pred_fallthru
          _
        // Predicated region
        $region93: #{_lambda_.1} parent=75 // pred_check
          %p495 = pneg %p263
        $region94: #{_lambda_.1} parent=75 // pred_check_branch
          %497 = sbr.rel (%p495) target = $region96
        $region95: #{_lambda_.1} parent=75 // pred_region
          %498 = dma.done [#allocation12], 2496
        $region96: #{_lambda_.1} parent=75 // pred_fallthru
          _
        // Predicated region
        $region97: #{_lambda_.1} parent=75 // pred_check
          %p499 = pneg %p305
        $region98: #{_lambda_.1} parent=75 // pred_check_branch
          %501 = sbr.rel (%p499) target = $region100
        $region99: #{_lambda_.1} parent=75 // pred_region
          %502 = dma.done [#allocation15], 16
        $region100: #{_lambda_.1} parent=75 // pred_fallthru
          _
        %p503 = scmp.lt.s32.totalorder %s32, 1
        %s504 = scalar_select %p503, %s32, 1
        %s505 = smul.addr %s504, 2
        %s506 = smul.addr %s505, 8
        %s507 = scalar_lea.vmem %s0, %s506
        %p508 = pneg %p53
        %p509 = pneg %p50
        %p510 = pneg %p74
        %p511 = pneg %p71
        %p512 = pneg %p95
        %p513 = pneg %p92
        %p514 = pneg %p116
        %p515 = pneg %p113
        %p516 = pneg %p137
        %p517 = pneg %p134
        %p518 = pneg %p158
        %p519 = pneg %p155
        %p520 = pneg %p179
        %p521 = pneg %p176
        %p522 = pneg %p200
        %p523 = pneg %p197
        %p524 = pneg %p221
        %p525 = pneg %p218
        %p526 = pneg %p242
        %p527 = pneg %p239
        %p528 = pneg %p263
        %p529 = pneg %p260
        %p530 = pneg %p284
        %p531 = pneg %p281
        %p532 = pneg %p305
        %p533 = pneg %p302
        %p534 = pneg %p326
        %p535 = pneg %p323
        %p536 = pneg %p352
        %p537 = pneg %p349
        %s538 = sand.u32 %s339, 1
        %s539 = scalar_lea.sflag [#allocation7], %s538
        %s540 = sand.u32 %s339, 1
        %s541 = smul.addr %s540, 16
        %s542 = scalar_lea.vmem [#allocation16], %s541
        %p543 = scmp.lt.s32.totalorder %s32, 1
        %s544 = scalar_select %p543, %s32, 1
        %s545 = smul.addr %s544, 2
        %s546 = smul.addr %s545, 8
        %s547 = scalar_lea.vmem %s0, %s546
        %vm549 = vcmask 64512
        %550 = vst.msk [vmem:[#allocation2] sm:$0xff] %vm549, 0.0
        %551 = vst.msk [vmem:[#allocation2 + $0x8] sm:$0xff] %vm549, 0.0
        %552 = vst.msk [vmem:[#allocation2 + $0x10] sm:$0xff] %vm549, 0.0
        %553 = vst.msk [vmem:[#allocation2 + $0x18] sm:$0xff] %vm549, 0.0
        %554 = vst.msk [vmem:[#allocation2 + $0x20] sm:$0xff] %vm549, 0.0
        %555 = vst.msk [vmem:[#allocation2 + $0x28] sm:$0xff] %vm549, 0.0
        %vm556 = vcmask 62464
        %557 = vst.msk [vmem:[#allocation2 + $0x30] sm:$0x3f] %vm556, 0.0
        %vm558 = vcmask 261120
        %559 = vst.msk [vmem:[#allocation4] sm:$0xff] %vm558, -inf
        %560 = vst.msk [vmem:[#allocation4 + $0x8] sm:$0xff] %vm558, -inf
        %vm561 = vcmask 254976
        %562 = vst.msk [vmem:[#allocation4 + $0x10] sm:$0x3] %vm561, -inf
        %v563 = vld [vmem:[%s547] sm:$0xff]
        %v564 = vld [vmem:[%s547 + $0x8] sm:$0xff]
        %v565 = vpack.c.bf16 %v564, %v563
        %v566 = vld [vmem:[%s1] sm:$0x3]
        %vm567 = vcmask 31744
        %v569 = vsel %vm567, %v565, 0
        %vm571 = vcmask 1041408
        %v573 = vsel %vm571, %v566, 0
        %575 = vmatprep.subr.bf16.mxu0 0
        %576 = vmatpush1.bf16.msra.mxu0 %v573
        %577 = vmatprep.subr.bf16.mxu0 0
        %578 = vmatpush1.bf16.msra.mxu0 0
        %579 = vmatprep.subr.bf16.mxu0 0
        %580 = vmatpush1.bf16.msra.mxu0 0
        %581 = vmatprep.subr.bf16.mxu0 0
        %582 = vmatpush1.bf16.msra.mxu0 0
        %583 = vmatprep.subr.bf16.mxu0 0
        %584 = vmatpush1.bf16.msra.mxu0 0
        %585 = vmatprep.subr.bf16.mxu0 0
        %586 = vmatpush1.bf16.msra.mxu0 0
        %587 = vmatprep.subr.bf16.mxu0 0
        %588 = vmatpush1.bf16.msra.mxu0 0
        %589 = vmatprep.subr.bf16.mxu0 0
        %590 = vmatpush1.bf16.msra.mxu0 0
        %591 = vmatprep.subr.bf16.mxu0 0
        %592 = vmatpush1.bf16.msra.mxu0 0
        %593 = vmatprep.subr.bf16.mxu0 0
        %594 = vmatpush1.bf16.msra.mxu0 0
        %595 = vmatprep.subr.bf16.mxu0 0
        %596 = vmatpush1.bf16.msra.mxu0 0
        %597 = vmatprep.subr.bf16.mxu0 0
        %598 = vmatpush1.bf16.msra.mxu0 0
        %599 = vmatprep.subr.bf16.mxu0 0
        %600 = vmatpush1.bf16.msra.mxu0 0
        %601 = vmatprep.subr.bf16.mxu0 0
        %602 = vmatpush1.bf16.msra.mxu0 0
        %603 = vmatprep.subr.bf16.mxu0 0
        %604 = vmatpush1.bf16.msra.mxu0 0
        %605 = vmatprep.subr.bf16.mxu0 0
        %606 = vmatpush1.bf16.msra.mxu0 0
        %607 = vmatprep.mubr.bf16.mxu0 0
        %608 = vmatmul.mubr.bf16.gmra.mrb[0].mxu0 %v569
        %v609 = vpop.f32.mrb[0].mxu0
        %v610 = vadd.f32 0.0, %v609
        %v611 = vpop.f32.mrb[0].mxu0
        %v612 = vpop.f32.mrb[0].mxu0
        %v613 = vadd.f32 0.0, %v612
        %v614 = vpop.f32.mrb[0].mxu0
        %615 = vdwg.mxu0
        %v616 = vld [vmem:[#allocation5] sm:$0xf]
        %v617 = vld [vmem:[#allocation5 + $0x4] sm:$0xf]
        %v618 = vld [vmem:[#allocation5 + $0x8] sm:$0xf]
        %v619 = vld [vmem:[#allocation5 + $0xc] sm:$0xf]
        %v620 = vld [vmem:[#allocation5 + $0x10] sm:$0xf]
        %v621 = vld [vmem:[#allocation5 + $0x14] sm:$0xf]
        %v622 = vld [vmem:[#allocation5 + $0x18] sm:$0xf]
        %v623 = vld [vmem:[#allocation5 + $0x1c] sm:$0xf]
        %v624 = vld [vmem:[#allocation5 + $0x20] sm:$0xf]
        %v625 = vld [vmem:[#allocation5 + $0x24] sm:$0xf]
        %v626 = vld [vmem:[#allocation5 + $0x28] sm:$0xf]
        %v627 = vld [vmem:[#allocation5 + $0x2c] sm:$0xf]
        %v628 = vld [vmem:[#allocation5 + $0x30] sm:$0xf]
        %v629 = vld [vmem:[#allocation5 + $0x34] sm:$0xf]
        %v630 = vld [vmem:[#allocation5 + $0x38] sm:$0xf]
        %v631 = vld [vmem:[#allocation5 + $0x3c] sm:$0xf]
        %v632 = vld [vmem:[#allocation5 + $0x40] sm:$0xf]
        %v633 = vld [vmem:[#allocation5 + $0x44] sm:$0xf]
        %v634 = vld [vmem:[#allocation5 + $0x48] sm:$0xf]
        %v635 = vld [vmem:[#allocation5 + $0x4c] sm:$0xf]
        %v636 = vld [vmem:[#allocation5 + $0x50] sm:$0xf]
        %v637 = vld [vmem:[#allocation5 + $0x54] sm:$0xf]
        %v638 = vld [vmem:[#allocation5 + $0x58] sm:$0xf]
        %v639 = vld [vmem:[#allocation5 + $0x5c] sm:$0xf]
        %v640 = vld [vmem:[#allocation5 + $0x60] sm:$0xf]
        %v641 = vld [vmem:[#allocation5 + $0x64] sm:$0xf]
        %v642 = vld [vmem:[#allocation5 + $0x68] sm:$0xf]
        %v643 = vld [vmem:[#allocation5 + $0x6c] sm:$0xf]
        %v644 = vld [vmem:[#allocation5 + $0x70] sm:$0xf]
        %v645 = vld [vmem:[#allocation5 + $0x74] sm:$0xf]
        %v646 = vld [vmem:[#allocation5 + $0x78] sm:$0xf]
        %v647 = vld [vmem:[#allocation5 + $0x7c] sm:$0xf]
        %v648 = vld [vmem:[#allocation5 + $0x80] sm:$0xf]
        %v649 = vld [vmem:[#allocation5 + $0x84] sm:$0xf]
        %v650 = vld [vmem:[#allocation5 + $0x88] sm:$0xf]
        %v651 = vld [vmem:[#allocation5 + $0x8c] sm:$0xf]
        %v652 = vld [vmem:[#allocation5 + $0x90] sm:$0xf]
        %v653 = vld [vmem:[#allocation5 + $0x94] sm:$0xf]
        %v654 = vld [vmem:[#allocation5 + $0x98] sm:$0xf]
        %v655 = vld [vmem:[%s3] sm:$0x3]
        %v656 = vld [vmem:[#allocation8] sm:$0x1]
        %657 = vst.msk [vmem:[#allocation2 + $0x13] sm:$0xff] %vm549, %v610
        %658 = vst.msk [vmem:[#allocation2 + $0x1b] sm:$0xff] %vm549, %v613
        %v659 = vld [vmem:[#allocation2] sm:$0xff]
        %v660 = vld [vmem:[#allocation2 + $0x8] sm:$0xff]
        %v661 = vpack.c.bf16 %v660, %v659
        %662 = vst.msk [vmem:[#allocation3] sm:$0xff] %vm549, %v661
        %v663 = vld [vmem:[#allocation2 + $0x1] sm:$0xff]
        %v664 = vld [vmem:[#allocation2 + $0x9] sm:$0xff]
        %v665 = vpack.c.bf16 %v664, %v663
        %667 = vrot.lane.b32.xlu0 %v665, 8
        %v668 = vpop.permute.xlu0 %667
        %vm670 = vcmask 130112
        %671 = vst.msk [vmem:[#allocation3] sm:$0xff] %vm670, %v668
        %v672 = vld [vmem:[#allocation2 + $0x2] sm:$0xff]
        %v673 = vld [vmem:[#allocation2 + $0xa] sm:$0xff]
        %v674 = vpack.c.bf16 %v673, %v672
        %676 = vrot.lane.b32.xlu0 %v674, 16
        %v677 = vpop.permute.xlu0 %676
        %vm679 = vcmask 195712
        %680 = vst.msk [vmem:[#allocation3] sm:$0xff] %vm679, %v677
        %v681 = vld [vmem:[#allocation2 + $0x3] sm:$0xff]
        %v682 = vld [vmem:[#allocation2 + $0xb] sm:$0xff]
        %v683 = vpack.c.bf16 %v682, %v681
        %685 = vrot.lane.b32.xlu0 %v683, 24
        %v686 = vpop.permute.xlu0 %685
        %vm688 = vcmask 261312
        %689 = vst.msk [vmem:[#allocation3] sm:$0xff] %vm688, %v686
        %v690 = vld [vmem:[#allocation2 + $0x4] sm:$0xff]
        %v691 = vld [vmem:[#allocation2 + $0xc] sm:$0xff]
        %v692 = vpack.c.bf16 %v691, %v690
        %694 = vrot.lane.b32.xlu0 %v692, 32
        %v695 = vpop.permute.xlu0 %694
        %vm697 = vcmask 326912
        %698 = vst.msk [vmem:[#allocation3] sm:$0xff] %vm697, %v695
        %v699 = vld [vmem:[#allocation2 + $0x5] sm:$0xff]
        %v700 = vld [vmem:[#allocation2 + $0xd] sm:$0xff]
        %v701 = vpack.c.bf16 %v700, %v699
        %703 = vrot.lane.b32.xlu0 %v701, 40
        %v704 = vpop.permute.xlu0 %703
        %vm706 = vcmask 392512
        %707 = vst.msk [vmem:[#allocation3] sm:$0xff] %vm706, %v704
        %v708 = vld [vmem:[#allocation2 + $0x6] sm:$0xff]
        %v709 = vld [vmem:[#allocation2 + $0xe] sm:$0xff]
        %v710 = vpack.c.bf16 %v709, %v708
        %712 = vrot.lane.b32.xlu0 %v710, 48
        %v713 = vpop.permute.xlu0 %712
        %vm715 = vcmask 458112
        %716 = vst.msk [vmem:[#allocation3] sm:$0xff] %vm715, %v713
        %v717 = vld [vmem:[#allocation2 + $0x7] sm:$0xff]
        %v718 = vld [vmem:[#allocation2 + $0xf] sm:$0xff]
        %v719 = vpack.c.bf16 %v718, %v717
        %721 = vrot.lane.b32.xlu0 %v719, 56
        %v722 = vpop.permute.xlu0 %721
        %vm724 = vcmask 523712
        %725 = vst.msk [vmem:[#allocation3] sm:$0xff] %vm724, %v722
        %v726 = vld [vmem:[#allocation2 + $0x8] sm:$0xff]
        %v727 = vld [vmem:[#allocation2 + $0x10] sm:$0xff]
        %v728 = vpack.c.bf16 %v727, %v726
        %730 = vrot.lane.b32.xlu0 %v728, 64
        %v731 = vpop.permute.xlu0 %730
        %vm733 = vcmask 589312
        %734 = vst.msk [vmem:[#allocation3] sm:$0xff] %vm733, %v731
        %v735 = vld [vmem:[#allocation2 + $0x9] sm:$0xff]
        %v736 = vld [vmem:[#allocation2 + $0x11] sm:$0xff]
        %v737 = vpack.c.bf16 %v736, %v735
        %739 = vrot.lane.b32.xlu0 %v737, 72
        %v740 = vpop.permute.xlu0 %739
        %vm742 = vcmask 654912
        %743 = vst.msk [vmem:[#allocation3] sm:$0xff] %vm742, %v740
        %v744 = vld [vmem:[#allocation2 + $0xa] sm:$0xff]
        %v745 = vld [vmem:[#allocation2 + $0x12] sm:$0xff]
        %v746 = vpack.c.bf16 %v745, %v744
        %748 = vrot.lane.b32.xlu0 %v746, 80
        %v749 = vpop.permute.xlu0 %748
        %vm751 = vcmask 720512
        %752 = vst.msk [vmem:[#allocation3] sm:$0xff] %vm751, %v749
        %v753 = vld [vmem:[#allocation2 + $0xb] sm:$0xff]
        %v754 = vld [vmem:[#allocation2 + $0x13] sm:$0xff]
        %v755 = vpack.c.bf16 %v754, %v753
        %757 = vrot.lane.b32.xlu0 %v755, 88
        %v758 = vpop.permute.xlu0 %757
        %vm760 = vcmask 786112
        %761 = vst.msk [vmem:[#allocation3] sm:$0xff] %vm760, %v758
        %v762 = vld [vmem:[#allocation2 + $0xc] sm:$0xff]
        %v763 = vld [vmem:[#allocation2 + $0x14] sm:$0xff]
        %v764 = vpack.c.bf16 %v763, %v762
        %766 = vrot.lane.b32.xlu0 %v764, 96
        %v767 = vpop.permute.xlu0 %766
        %vm769 = vcmask 851712
        %770 = vst.msk [vmem:[#allocation3] sm:$0xff] %vm769, %v767
        %v771 = vld [vmem:[#allocation2 + $0xd] sm:$0xff]
        %v772 = vld [vmem:[#allocation2 + $0x15] sm:$0xff]
        %v773 = vpack.c.bf16 %v772, %v771
        %775 = vrot.lane.b32.xlu0 %v773, 104
        %v776 = vpop.permute.xlu0 %775
        %vm778 = vcmask 917312
        %779 = vst.msk [vmem:[#allocation3] sm:$0xff] %vm778, %v776
        %v780 = vld [vmem:[#allocation2 + $0xe] sm:$0xff]
        %v781 = vld [vmem:[#allocation2 + $0x16] sm:$0xff]
        %v782 = vpack.c.bf16 %v781, %v780
        %784 = vrot.lane.b32.xlu0 %v782, 112
        %v785 = vpop.permute.xlu0 %784
        %vm787 = vcmask 982912
        %788 = vst.msk [vmem:[#allocation3] sm:$0xff] %vm787, %v785
        %v789 = vld [vmem:[#allocation2 + $0xf] sm:$0xff]
        %v790 = vld [vmem:[#allocation2 + $0x17] sm:$0xff]
        %v791 = vpack.c.bf16 %v790, %v789
        %793 = vrot.lane.b32.xlu0 %v791, 120
        %v794 = vpop.permute.xlu0 %793
        %vm796 = vcmask 1048512
        %797 = vst.msk [vmem:[#allocation3] sm:$0xff] %vm796, %v794
        %v798 = vld [vmem:[#allocation2 + $0x10] sm:$0xff]
        %v799 = vld [vmem:[#allocation2 + $0x18] sm:$0xff]
        %v800 = vpack.c.bf16 %v799, %v798
        %801 = vst.msk [vmem:[#allocation3 + $0x8] sm:$0xff] %vm549, %v800
        %v802 = vld [vmem:[#allocation2 + $0x11] sm:$0xff]
        %v803 = vld [vmem:[#allocation2 + $0x19] sm:$0xff]
        %v804 = vpack.c.bf16 %v803, %v802
        %806 = vrot.lane.b32.xlu0 %v804, 8
        %v807 = vpop.permute.xlu0 %806
        %809 = vst.msk [vmem:[#allocation3 + $0x8] sm:$0xff] %vm670, %v807
        %v810 = vld [vmem:[#allocation2 + $0x12] sm:$0xff]
        %v811 = vld [vmem:[#allocation2 + $0x1a] sm:$0xff]
        %v812 = vpack.c.bf16 %v811, %v810
        %814 = vrot.lane.b32.xlu0 %v812, 16
        %v815 = vpop.permute.xlu0 %814
        %817 = vst.msk [vmem:[#allocation3 + $0x8] sm:$0xff] %vm679, %v815
        %v818 = vld [vmem:[#allocation2 + $0x13] sm:$0xff]
        %v819 = vld [vmem:[#allocation2 + $0x1b] sm:$0xff]
        %v820 = vpack.c.bf16 %v819, %v818
        %822 = vrot.lane.b32.xlu0 %v820, 24
        %v823 = vpop.permute.xlu0 %822
        %825 = vst.msk [vmem:[#allocation3 + $0x8] sm:$0xff] %vm688, %v823
        %v826 = vld [vmem:[#allocation2 + $0x14] sm:$0xff]
        %v827 = vld [vmem:[#allocation2 + $0x1c] sm:$0xff]
        %v828 = vpack.c.bf16 %v827, %v826
        %830 = vrot.lane.b32.xlu0 %v828, 32
        %v831 = vpop.permute.xlu0 %830
        %833 = vst.msk [vmem:[#allocation3 + $0x8] sm:$0xff] %vm697, %v831
        %v834 = vld [vmem:[#allocation2 + $0x15] sm:$0xff]
        %v835 = vld [vmem:[#allocation2 + $0x1d] sm:$0xff]
        %v836 = vpack.c.bf16 %v835, %v834
        %838 = vrot.lane.b32.xlu0 %v836, 40
        %v839 = vpop.permute.xlu0 %838
        %841 = vst.msk [vmem:[#allocation3 + $0x8] sm:$0xff] %vm706, %v839
        %v842 = vld [vmem:[#allocation2 + $0x16] sm:$0xff]
        %v843 = vld [vmem:[#allocation2 + $0x1e] sm:$0xff]
        %v844 = vpack.c.bf16 %v843, %v842
        %846 = vrot.lane.b32.xlu0 %v844, 48
        %v847 = vpop.permute.xlu0 %846
        %849 = vst.msk [vmem:[#allocation3 + $0x8] sm:$0xff] %vm715, %v847
        %v850 = vld [vmem:[#allocation2 + $0x17] sm:$0xff]
        %v851 = vld [vmem:[#allocation2 + $0x1f] sm:$0xff]
        %v852 = vpack.c.bf16 %v851, %v850
        %854 = vrot.lane.b32.xlu0 %v852, 56
        %v855 = vpop.permute.xlu0 %854
        %857 = vst.msk [vmem:[#allocation3 + $0x8] sm:$0xff] %vm724, %v855
        %v858 = vld [vmem:[#allocation2 + $0x18] sm:$0xff]
        %v859 = vld [vmem:[#allocation2 + $0x20] sm:$0xff]
        %v860 = vpack.c.bf16 %v859, %v858
        %862 = vrot.lane.b32.xlu0 %v860, 64
        %v863 = vpop.permute.xlu0 %862
        %865 = vst.msk [vmem:[#allocation3 + $0x8] sm:$0xff] %vm733, %v863
        %v866 = vld [vmem:[#allocation2 + $0x19] sm:$0xff]
        %v867 = vld [vmem:[#allocation2 + $0x21] sm:$0xff]
        %v868 = vpack.c.bf16 %v867, %v866
        %870 = vrot.lane.b32.xlu0 %v868, 72
        %v871 = vpop.permute.xlu0 %870
        %873 = vst.msk [vmem:[#allocation3 + $0x8] sm:$0xff] %vm742, %v871
        %v874 = vld [vmem:[#allocation2 + $0x1a] sm:$0xff]
        %v875 = vld [vmem:[#allocation2 + $0x22] sm:$0xff]
        %v876 = vpack.c.bf16 %v875, %v874
        %878 = vrot.lane.b32.xlu0 %v876, 80
        %v879 = vpop.permute.xlu0 %878
        %881 = vst.msk [vmem:[#allocation3 + $0x8] sm:$0xff] %vm751, %v879
        %v882 = vld [vmem:[#allocation2 + $0x1b] sm:$0xff]
        %v883 = vld [vmem:[#allocation2 + $0x23] sm:$0xff]
        %v884 = vpack.c.bf16 %v883, %v882
        %886 = vrot.lane.b32.xlu0 %v884, 88
        %v887 = vpop.permute.xlu0 %886
        %889 = vst.msk [vmem:[#allocation3 + $0x8] sm:$0xff] %vm760, %v887
        %v890 = vld [vmem:[#allocation2 + $0x1c] sm:$0xff]
        %v891 = vld [vmem:[#allocation2 + $0x24] sm:$0xff]
        %v892 = vpack.c.bf16 %v891, %v890
        %894 = vrot.lane.b32.xlu0 %v892, 96
        %v895 = vpop.permute.xlu0 %894
        %897 = vst.msk [vmem:[#allocation3 + $0x8] sm:$0xff] %vm769, %v895
        %v898 = vld [vmem:[#allocation2 + $0x1d] sm:$0xff]
        %v899 = vld [vmem:[#allocation2 + $0x25] sm:$0xff]
        %v900 = vpack.c.bf16 %v899, %v898
        %902 = vrot.lane.b32.xlu0 %v900, 104
        %v903 = vpop.permute.xlu0 %902
        %905 = vst.msk [vmem:[#allocation3 + $0x8] sm:$0xff] %vm778, %v903
        %v906 = vld [vmem:[#allocation2 + $0x1e] sm:$0xff]
        %v907 = vld [vmem:[#allocation2 + $0x26] sm:$0xff]
        %v908 = vpack.c.bf16 %v907, %v906
        %910 = vrot.lane.b32.xlu0 %v908, 112
        %v911 = vpop.permute.xlu0 %910
        %913 = vst.msk [vmem:[#allocation3 + $0x8] sm:$0xff] %vm787, %v911
        %v914 = vld [vmem:[#allocation2 + $0x1f] sm:$0xff]
        %v915 = vld [vmem:[#allocation2 + $0x27] sm:$0xff]
        %v916 = vpack.c.bf16 %v915, %v914
        %918 = vrot.lane.b32.xlu0 %v916, 120
        %v919 = vpop.permute.xlu0 %918
        %921 = vst.msk [vmem:[#allocation3 + $0x8] sm:$0xff] %vm796, %v919
        %v922 = vld [vmem:[#allocation2 + $0x20] sm:$0xff]
        %v923 = vld [vmem:[#allocation2 + $0x28] sm:$0xff]
        %v924 = vpack.c.bf16 %v923, %v922
        %925 = vst.msk [vmem:[#allocation3 + $0x10] sm:$0xff] %vm549, %v924
        %v926 = vld [vmem:[#allocation2 + $0x21] sm:$0xff]
        %v927 = vld [vmem:[#allocation2 + $0x29] sm:$0xff]
        %v928 = vpack.c.bf16 %v927, %v926
        %930 = vrot.lane.b32.xlu0 %v928, 8
        %v931 = vpop.permute.xlu0 %930
        %933 = vst.msk [vmem:[#allocation3 + $0x10] sm:$0xff] %vm670, %v931
        %v934 = vld [vmem:[#allocation2 + $0x22] sm:$0xff]
        %v935 = vld [vmem:[#allocation2 + $0x2a] sm:$0xff]
        %v936 = vpack.c.bf16 %v935, %v934
        %938 = vrot.lane.b32.xlu0 %v936, 16
        %v939 = vpop.permute.xlu0 %938
        %941 = vst.msk [vmem:[#allocation3 + $0x10] sm:$0xff] %vm679, %v939
        %v942 = vld [vmem:[#allocation2 + $0x23] sm:$0xff]
        %v943 = vld [vmem:[#allocation2 + $0x2b] sm:$0xff]
        %v944 = vpack.c.bf16 %v943, %v942
        %946 = vrot.lane.b32.xlu0 %v944, 24
        %v947 = vpop.permute.xlu0 %946
        %949 = vst.msk [vmem:[#allocation3 + $0x10] sm:$0xff] %vm688, %v947
        %v950 = vld [vmem:[#allocation2 + $0x24] sm:$0xff]
        %v951 = vld [vmem:[#allocation2 + $0x2c] sm:$0xff]
        %v952 = vpack.c.bf16 %v951, %v950
        %954 = vrot.lane.b32.xlu0 %v952, 32
        %v955 = vpop.permute.xlu0 %954
        %957 = vst.msk [vmem:[#allocation3 + $0x10] sm:$0xff] %vm697, %v955
        %v958 = vld [vmem:[#allocation2 + $0x25] sm:$0xff]
        %v959 = vld [vmem:[#allocation2 + $0x2d] sm:$0xff]
        %v960 = vpack.c.bf16 %v959, %v958
        %962 = vrot.lane.b32.xlu0 %v960, 40
        %v963 = vpop.permute.xlu0 %962
        %965 = vst.msk [vmem:[#allocation3 + $0x10] sm:$0xff] %vm706, %v963
        %v966 = vld [vmem:[#allocation2 + $0x26] sm:$0xff]
        %v967 = vld [vmem:[#allocation2 + $0x2e] sm:$0xff]
        %v968 = vpack.c.bf16 %v967, %v966
        %970 = vrot.lane.b32.xlu0 %v968, 48
        %v971 = vpop.permute.xlu0 %970
        %973 = vst.msk [vmem:[#allocation3 + $0x10] sm:$0xff] %vm715, %v971
        %v974 = vld [vmem:[#allocation3] sm:$0xff]
        %v975 = vld [vmem:[#allocation3 + $0x8] sm:$0xff]
        %v976 = vld [vmem:[#allocation3 + $0x10] sm:$0xff]
        %v1016 = vunpack.c.l.b16 %v616
        %v1017 = vunpack.c.l.b16 %v617
        %v1018 = vunpack.c.l.b16 %v618
        %v1019 = vunpack.c.l.b16 %v619
        %v1020 = vunpack.c.l.b16 %v620
        %v1021 = vunpack.c.l.b16 %v621
        %v1022 = vunpack.c.l.b16 %v622
        %v1023 = vunpack.c.l.b16 %v623
        %v1024 = vunpack.c.l.b16 %v624
        %v1025 = vunpack.c.l.b16 %v625
        %v1026 = vunpack.c.l.b16 %v626
        %v1027 = vunpack.c.l.b16 %v627
        %v1028 = vunpack.c.l.b16 %v628
        %v1029 = vunpack.c.l.b16 %v629
        %v1030 = vunpack.c.l.b16 %v630
        %v1031 = vunpack.c.l.b16 %v631
        %v1032 = vunpack.c.l.b16 %v632
        %v1033 = vunpack.c.l.b16 %v633
        %v1034 = vunpack.c.l.b16 %v634
        %v1035 = vunpack.c.l.b16 %v635
        %v1036 = vunpack.c.l.b16 %v636
        %v1037 = vunpack.c.l.b16 %v637
        %v1038 = vunpack.c.l.b16 %v638
        %v1039 = vunpack.c.l.b16 %v639
        %v1040 = vunpack.c.l.b16 %v640
        %v1041 = vunpack.c.l.b16 %v641
        %v1042 = vunpack.c.l.b16 %v642
        %v1043 = vunpack.c.l.b16 %v643
        %v1044 = vunpack.c.l.b16 %v644
        %v1045 = vunpack.c.l.b16 %v645
        %v1046 = vunpack.c.l.b16 %v646
        %v1047 = vunpack.c.l.b16 %v647
        %v1048 = vunpack.c.l.b16 %v648
        %v1049 = vunpack.c.l.b16 %v649
        %v1050 = vunpack.c.l.b16 %v650
        %v1051 = vunpack.c.l.b16 %v651
        %v1052 = vunpack.c.l.b16 %v652
        %v1053 = vunpack.c.l.b16 %v653
        %v1054 = vunpack.c.l.b16 %v654
        %v1055 = vpack.c.b16 %v1017, %v1016
        %v1056 = vpack.c.b16 %v1019, %v1018
        %v1057 = vpack.c.b16 %v1021, %v1020
        %v1058 = vpack.c.b16 %v1023, %v1022
        %v1059 = vpack.c.b16 %v1025, %v1024
        %v1060 = vpack.c.b16 %v1027, %v1026
        %v1061 = vpack.c.b16 %v1029, %v1028
        %v1062 = vpack.c.b16 %v1031, %v1030
        %v1063 = vpack.c.b16 %v1033, %v1032
        %v1064 = vpack.c.b16 %v1035, %v1034
        %v1065 = vpack.c.b16 %v1037, %v1036
        %v1066 = vpack.c.b16 %v1039, %v1038
        %v1067 = vpack.c.b16 %v1041, %v1040
        %v1068 = vpack.c.b16 %v1043, %v1042
        %v1069 = vpack.c.b16 %v1045, %v1044
        %v1070 = vpack.c.b16 %v1047, %v1046
        %v1071 = vpack.c.b16 %v1049, %v1048
        %v1072 = vpack.c.b16 %v1051, %v1050
        %v1073 = vpack.c.b16 %v1053, %v1052
        %v1074 = vpack.c.b16 %v1054, %v1054
        %vm1094 = vcmask 457728
        %v1096 = vsel %vm1094, %v976, 0
        %vm1098 = vcmask 1043456
        %v1100 = vsel %vm1098, %v1074, 0
        %1102 = vmatprep.subr.bf16.mxu0 0
        %1103 = vmatpush1.bf16.msra.mxu0 %v1055
        %1104 = vmatprep.subr.bf16.mxu0 0
        %1105 = vmatpush1.bf16.msra.mxu0 %v1056
        %1106 = vmatprep.subr.bf16.mxu0 0
        %1107 = vmatpush1.bf16.msra.mxu0 %v1057
        %1108 = vmatprep.subr.bf16.mxu0 0
        %1109 = vmatpush1.bf16.msra.mxu0 %v1058
        %1110 = vmatprep.subr.bf16.mxu0 0
        %1111 = vmatpush1.bf16.msra.mxu0 %v1059
        %1112 = vmatprep.subr.bf16.mxu0 0
        %1113 = vmatpush1.bf16.msra.mxu0 %v1060
        %1114 = vmatprep.subr.bf16.mxu0 0
        %1115 = vmatpush1.bf16.msra.mxu0 %v1061
        %1116 = vmatprep.subr.bf16.mxu0 0
        %1117 = vmatpush1.bf16.msra.mxu0 %v1062
        %1118 = vmatprep.subr.bf16.mxu0 0
        %1119 = vmatpush1.bf16.msra.mxu0 %v1063
        %1120 = vmatprep.subr.bf16.mxu0 0
        %1121 = vmatpush1.bf16.msra.mxu0 %v1064
        %1122 = vmatprep.subr.bf16.mxu0 0
        %1123 = vmatpush1.bf16.msra.mxu0 %v1065
        %1124 = vmatprep.subr.bf16.mxu0 0
        %1125 = vmatpush1.bf16.msra.mxu0 %v1066
        %1126 = vmatprep.subr.bf16.mxu0 0
        %1127 = vmatpush1.bf16.msra.mxu0 %v1067
        %1128 = vmatprep.subr.bf16.mxu0 0
        %1129 = vmatpush1.bf16.msra.mxu0 %v1068
        %1130 = vmatprep.subr.bf16.mxu0 0
        %1131 = vmatpush1.bf16.msra.mxu0 %v1069
        %1132 = vmatprep.subr.bf16.mxu0 0
        %1133 = vmatpush1.bf16.msra.mxu0 %v1070
        %1134 = vmatprep.mubr.bf16.mxu0 %v975
        %1135 = vmatmul.mubr.bf16.gmra.mrb[0].mxu0 %v974
        %v1136 = vpop.f32.mrb[0].mxu0
        %v1137 = vadd.f32 0.0, %v1136
        %v1138 = vpop.f32.mrb[0].mxu0
        %v1139 = vpop.f32.mrb[0].mxu0
        %v1140 = vadd.f32 0.0, %v1139
        %v1141 = vpop.f32.mrb[0].mxu0
        %1142 = vdwg.mxu0
        %1143 = vmatprep.subr.bf16.mxu0 0
        %1144 = vmatpush1.bf16.msra.mxu0 %v1071
        %1145 = vmatprep.subr.bf16.mxu0 0
        %1146 = vmatpush1.bf16.msra.mxu0 %v1072
        %1147 = vmatprep.subr.bf16.mxu0 0
        %1148 = vmatpush1.bf16.msra.mxu0 %v1073
        %1149 = vmatprep.subr.bf16.mxu0 0
        %1150 = vmatpush1.bf16.msra.mxu0 %v1100
        %1151 = vmatprep.subr.bf16.mxu0 0
        %1152 = vmatpush1.bf16.msra.mxu0 0
        %1153 = vmatprep.subr.bf16.mxu0 0
        %1154 = vmatpush1.bf16.msra.mxu0 0
        %1155 = vmatprep.subr.bf16.mxu0 0
        %1156 = vmatpush1.bf16.msra.mxu0 0
        %1157 = vmatprep.subr.bf16.mxu0 0
        %1158 = vmatpush1.bf16.msra.mxu0 0
        %1159 = vmatprep.subr.bf16.mxu0 0
        %1160 = vmatpush1.bf16.msra.mxu0 0
        %1161 = vmatprep.subr.bf16.mxu0 0
        %1162 = vmatpush1.bf16.msra.mxu0 0
        %1163 = vmatprep.subr.bf16.mxu0 0
        %1164 = vmatpush1.bf16.msra.mxu0 0
        %1165 = vmatprep.subr.bf16.mxu0 0
        %1166 = vmatpush1.bf16.msra.mxu0 0
        %1167 = vmatprep.subr.bf16.mxu0 0
        %1168 = vmatpush1.bf16.msra.mxu0 0
        %1169 = vmatprep.subr.bf16.mxu0 0
        %1170 = vmatpush1.bf16.msra.mxu0 0
        %1171 = vmatprep.subr.bf16.mxu0 0
        %1172 = vmatpush1.bf16.msra.mxu0 0
        %1173 = vmatprep.subr.bf16.mxu0 0
        %1174 = vmatpush1.bf16.msra.mxu0 0
        %1175 = vmatprep.mubr.bf16.mxu0 0
        %1176 = vmatmul.mubr.bf16.gmra.mrb[0].mxu0 %v1096
        %v1177 = vpop.f32.mrb[0].mxu0
        %v1178 = vadd.f32 %v1137, %v1177
        %v1179 = vpop.f32.mrb[0].mxu0
        %v1180 = vpop.f32.mrb[0].mxu0
        %v1181 = vadd.f32 %v1140, %v1180
        %v1182 = vpop.f32.mrb[0].mxu0
        %1183 = vdwg.mxu0
        %1184 = vst.msk [vmem:[#allocation4 + $0x1] sm:$0xff] %vm567, %v563
        %1185 = vst.msk [vmem:[#allocation4 + $0x9] sm:$0xff] %vm567, %v564
        %v1186 = vld [vmem:[#allocation4] sm:$0xff]
        %v1187 = vld [vmem:[#allocation4 + $0x8] sm:$0xff]
        %v1188 = vld [vmem:[#allocation4 + $0x1] sm:$0xff]
        %v1189 = vld [vmem:[#allocation4 + $0x9] sm:$0xff]
        %v1190 = vmax.f32 %v1186, %v1188
        %v1191 = vmax.f32 %v1187, %v1189
        %v1192 = vld [vmem:[#allocation4 + $0x2] sm:$0xff]
        %v1193 = vld [vmem:[#allocation4 + $0xa] sm:$0xff]
        %v1194 = vmax.f32 %v1190, %v1192
        %v1195 = vmax.f32 %v1191, %v1193
        %v1196 = vpack.c.bf16 %v1195, %v1194
        %v1198 = vsel %vm567, %v1196, 0
        %v1201 = vsel %vm571, %v655, 0
        %1203 = vmatprep.subr.bf16.mxu0 0
        %1204 = vmatpush1.bf16.msra.mxu0 %v1201
        %1205 = vmatprep.subr.bf16.mxu0 0
        %1206 = vmatpush1.bf16.msra.mxu0 0
        %1207 = vmatprep.subr.bf16.mxu0 0
        %1208 = vmatpush1.bf16.msra.mxu0 0
        %1209 = vmatprep.subr.bf16.mxu0 0
        %1210 = vmatpush1.bf16.msra.mxu0 0
        %1211 = vmatprep.subr.bf16.mxu0 0
        %1212 = vmatpush1.bf16.msra.mxu0 0
        %1213 = vmatprep.subr.bf16.mxu0 0
        %1214 = vmatpush1.bf16.msra.mxu0 0
        %1215 = vmatprep.subr.bf16.mxu0 0
        %1216 = vmatpush1.bf16.msra.mxu0 0
        %1217 = vmatprep.subr.bf16.mxu0 0
        %1218 = vmatpush1.bf16.msra.mxu0 0
        %1219 = vmatprep.subr.bf16.mxu0 0
        %1220 = vmatpush1.bf16.msra.mxu0 0
        %1221 = vmatprep.subr.bf16.mxu0 0
        %1222 = vmatpush1.bf16.msra.mxu0 0
        %1223 = vmatprep.subr.bf16.mxu0 0
        %1224 = vmatpush1.bf16.msra.mxu0 0
        %1225 = vmatprep.subr.bf16.mxu0 0
        %1226 = vmatpush1.bf16.msra.mxu0 0
        %1227 = vmatprep.subr.bf16.mxu0 0
        %1228 = vmatpush1.bf16.msra.mxu0 0
        %1229 = vmatprep.subr.bf16.mxu0 0
        %1230 = vmatpush1.bf16.msra.mxu0 0
        %1231 = vmatprep.subr.bf16.mxu0 0
        %1232 = vmatpush1.bf16.msra.mxu0 0
        %1233 = vmatprep.subr.bf16.mxu0 0
        %1234 = vmatpush1.bf16.msra.mxu0 0
        %1235 = vmatprep.mubr.bf16.mxu0 0
        %1236 = vmatmul.mubr.bf16.gmra.mrb[0].mxu0 %v1198
        %v1237 = vpop.f32.mrb[0].mxu0
        %v1238 = vadd.f32 0.0, %v1237
        %v1239 = vpop.f32.mrb[0].mxu0
        %v1240 = vpop.f32.mrb[0].mxu0
        %v1241 = vadd.f32 0.0, %v1240
        %v1242 = vpop.f32.mrb[0].mxu0
        %1243 = vdwg.mxu0
        %1246 = vrot.lane.b32.xlu0 %v1238, 24
        %v1247 = vpop.permute.xlu0 %1246
        %1248 = vrot.lane.b32.xlu0 %v1241, 24
        %v1249 = vpop.permute.xlu0 %1248
        %vm1252 = vcmask 195584
        %v1253 = vsel %vm1252, %v1178, %v1247
        %v1254 = vsel %vm1252, %v1181, %v1249
        %v1256 = vlaneseq
        %v1257 = vshrl.u32 %v1256, 7
        %v1258 = vsub.s32 0, %v1257
        %v1259 = vrot.slane %v656, %v1258
        %v1261 = vadd.f32 %v1253, %v1259
        %v1262 = vadd.f32 %v1254, %v1259
        %v1263 = vmax.f32 %v1261, 0.0
        %v1264 = vmax.f32 %v1262, 0.0
        %v1265 = vpack.c.bf16 %v1264, %v1263
        %v1266 = vld [vmem:[%s5] sm:$0xf]
        %v1267 = vld [vmem:[%s5 + $0x4] sm:$0xf]
        %v1268 = vld [vmem:[%s5 + $0x8] sm:$0xf]
        %v1269 = vld [vmem:[%s5 + $0xc] sm:$0xf]
        %v1274 = vunpack.c.l.b16 %v1266
        %v1275 = vunpack.c.l.b16 %v1267
        %v1276 = vunpack.c.l.b16 %v1268
        %v1277 = vunpack.c.l.b16 %v1269
        %v1278 = vpack.c.b16 %v1275, %v1274
        %v1279 = vpack.c.b16 %v1277, %v1276
        %v1283 = vsel %vm558, %v1265, 0
        %1285 = vmatprep.subr.bf16.mxu0 0
        %1286 = vmatpush1.bf16.msra.mxu0 %v1278
        %1287 = vmatprep.subr.bf16.mxu0 0
        %1288 = vmatpush1.bf16.msra.mxu0 %v1279
        %1289 = vmatprep.subr.bf16.mxu0 0
        %1290 = vmatpush1.bf16.msra.mxu0 0
        %1291 = vmatprep.subr.bf16.mxu0 0
        %1292 = vmatpush1.bf16.msra.mxu0 0
        %1293 = vmatprep.subr.bf16.mxu0 0
        %1294 = vmatpush1.bf16.msra.mxu0 0
        %1295 = vmatprep.subr.bf16.mxu0 0
        %1296 = vmatpush1.bf16.msra.mxu0 0
        %1297 = vmatprep.subr.bf16.mxu0 0
        %1298 = vmatpush1.bf16.msra.mxu0 0
        %1299 = vmatprep.subr.bf16.mxu0 0
        %1300 = vmatpush1.bf16.msra.mxu0 0
        %1301 = vmatprep.subr.bf16.mxu0 0
        %1302 = vmatpush1.bf16.msra.mxu0 0
        %1303 = vmatprep.subr.bf16.mxu0 0
        %1304 = vmatpush1.bf16.msra.mxu0 0
        %1305 = vmatprep.subr.bf16.mxu0 0
        %1306 = vmatpush1.bf16.msra.mxu0 0
        %1307 = vmatprep.subr.bf16.mxu0 0
        %1308 = vmatpush1.bf16.msra.mxu0 0
        %1309 = vmatprep.subr.bf16.mxu0 0
        %1310 = vmatpush1.bf16.msra.mxu0 0
        %1311 = vmatprep.subr.bf16.mxu0 0
        %1312 = vmatpush1.bf16.msra.mxu0 0
        %1313 = vmatprep.subr.bf16.mxu0 0
        %1314 = vmatpush1.bf16.msra.mxu0 0
        %1315 = vmatprep.subr.bf16.mxu0 0
        %1316 = vmatpush1.bf16.msra.mxu0 0
        %1317 = vmatprep.mubr.bf16.mxu0 0
        %1318 = vmatmul.mubr.bf16.gmra.mrb[0].mxu0 %v1283
        %v1319 = vpop.f32.mrb[0].mxu0
        %v1320 = vadd.f32 0.0, %v1319
        %v1321 = vpop.f32.mrb[0].mxu0
        %v1322 = vpop.f32.mrb[0].mxu0
        %v1323 = vadd.f32 0.0, %v1322
        %v1324 = vpop.f32.mrb[0].mxu0
        %1325 = vdwg.mxu0
        %v1326 = vld [vmem:[#allocation10] sm:$0xf]
        %v1327 = vld [vmem:[#allocation10 + $0x4] sm:$0xf]
        %v1328 = vld [vmem:[#allocation10 + $0x8] sm:$0xf]
        %v1329 = vld [vmem:[#allocation10 + $0xc] sm:$0xf]
        %v1330 = vld [vmem:[#allocation10 + $0x10] sm:$0xf]
        %v1331 = vld [vmem:[#allocation10 + $0x14] sm:$0xf]
        %v1332 = vld [vmem:[#allocation10 + $0x18] sm:$0xf]
        %v1333 = vld [vmem:[#allocation10 + $0x1c] sm:$0xf]
        %v1334 = vld [vmem:[#allocation10 + $0x20] sm:$0xf]
        %v1335 = vld [vmem:[#allocation10 + $0x24] sm:$0xf]
        %v1336 = vld [vmem:[#allocation10 + $0x28] sm:$0xf]
        %v1337 = vld [vmem:[#allocation10 + $0x2c] sm:$0xf]
        %v1338 = vld [vmem:[#allocation10 + $0x30] sm:$0xf]
        %v1339 = vld [vmem:[#allocation10 + $0x34] sm:$0xf]
        %v1340 = vld [vmem:[#allocation10 + $0x38] sm:$0xf]
        %v1341 = vld [vmem:[#allocation10 + $0x3c] sm:$0xf]
        %v1342 = vld [vmem:[#allocation10 + $0x40] sm:$0xf]
        %v1343 = vld [vmem:[#allocation10 + $0x44] sm:$0xf]
        %v1344 = vld [vmem:[#allocation10 + $0x48] sm:$0xf]
        %v1345 = vld [vmem:[#allocation10 + $0x4c] sm:$0xf]
        %v1346 = vld [vmem:[#allocation10 + $0x50] sm:$0xf]
        %v1347 = vld [vmem:[#allocation10 + $0x54] sm:$0xf]
        %v1348 = vld [vmem:[#allocation10 + $0x58] sm:$0xf]
        %v1349 = vld [vmem:[#allocation10 + $0x5c] sm:$0xf]
        %v1350 = vld [vmem:[#allocation10 + $0x60] sm:$0xf]
        %v1351 = vld [vmem:[#allocation10 + $0x64] sm:$0xf]
        %v1352 = vld [vmem:[#allocation10 + $0x68] sm:$0xf]
        %v1353 = vld [vmem:[#allocation10 + $0x6c] sm:$0xf]
        %v1354 = vld [vmem:[#allocation10 + $0x70] sm:$0xf]
        %v1355 = vld [vmem:[#allocation10 + $0x74] sm:$0xf]
        %v1356 = vld [vmem:[#allocation10 + $0x78] sm:$0xf]
        %v1357 = vld [vmem:[#allocation10 + $0x7c] sm:$0xf]
        %v1358 = vld [vmem:[#allocation10 + $0x80] sm:$0xf]
        %v1359 = vld [vmem:[#allocation10 + $0x84] sm:$0xf]
        %v1360 = vld [vmem:[#allocation10 + $0x88] sm:$0xf]
        %v1361 = vld [vmem:[#allocation10 + $0x8c] sm:$0xf]
        %v1362 = vld [vmem:[#allocation10 + $0x90] sm:$0xf]
        %v1363 = vld [vmem:[#allocation10 + $0x94] sm:$0xf]
        %v1364 = vld [vmem:[#allocation10 + $0x98] sm:$0xf]
        %v1365 = vld [vmem:[%s7] sm:$0xf]
        %v1366 = vld [vmem:[%s7 + $0x4] sm:$0xf]
        %v1367 = vld [vmem:[%s7 + $0x8] sm:$0xf]
        %v1368 = vld [vmem:[%s7 + $0xc] sm:$0xf]
        %v1369 = vld [vmem:[#allocation11] sm:$0x1]
        %1370 = vst.msk [vmem:[#allocation2 + $0x13] sm:$0xff] %vm549, %v1320
        %1371 = vst.msk [vmem:[#allocation2 + $0x1b] sm:$0xff] %vm549, %v1323
        %v1372 = vld [vmem:[#allocation2] sm:$0xff]
        %v1373 = vld [vmem:[#allocation2 + $0x8] sm:$0xff]
        %v1374 = vpack.c.bf16 %v1373, %v1372
        %1375 = vst.msk [vmem:[#allocation3] sm:$0xff] %vm549, %v1374
        %v1376 = vld [vmem:[#allocation2 + $0x1] sm:$0xff]
        %v1377 = vld [vmem:[#allocation2 + $0x9] sm:$0xff]
        %v1378 = vpack.c.bf16 %v1377, %v1376
        %1380 = vrot.lane.b32.xlu0 %v1378, 8
        %v1381 = vpop.permute.xlu0 %1380
        %1383 = vst.msk [vmem:[#allocation3] sm:$0xff] %vm670, %v1381
        %v1384 = vld [vmem:[#allocation2 + $0x2] sm:$0xff]
        %v1385 = vld [vmem:[#allocation2 + $0xa] sm:$0xff]
        %v1386 = vpack.c.bf16 %v1385, %v1384
        %1388 = vrot.lane.b32.xlu0 %v1386, 16
        %v1389 = vpop.permute.xlu0 %1388
        %1391 = vst.msk [vmem:[#allocation3] sm:$0xff] %vm679, %v1389
        %v1392 = vld [vmem:[#allocation2 + $0x3] sm:$0xff]
        %v1393 = vld [vmem:[#allocation2 + $0xb] sm:$0xff]
        %v1394 = vpack.c.bf16 %v1393, %v1392
        %1396 = vrot.lane.b32.xlu0 %v1394, 24
        %v1397 = vpop.permute.xlu0 %1396
        %1399 = vst.msk [vmem:[#allocation3] sm:$0xff] %vm688, %v1397
        %v1400 = vld [vmem:[#allocation2 + $0x4] sm:$0xff]
        %v1401 = vld [vmem:[#allocation2 + $0xc] sm:$0xff]
        %v1402 = vpack.c.bf16 %v1401, %v1400
        %1404 = vrot.lane.b32.xlu0 %v1402, 32
        %v1405 = vpop.permute.xlu0 %1404
        %1407 = vst.msk [vmem:[#allocation3] sm:$0xff] %vm697, %v1405
        %v1408 = vld [vmem:[#allocation2 + $0x5] sm:$0xff]
        %v1409 = vld [vmem:[#allocation2 + $0xd] sm:$0xff]
        %v1410 = vpack.c.bf16 %v1409, %v1408
        %1412 = vrot.lane.b32.xlu0 %v1410, 40
        %v1413 = vpop.permute.xlu0 %1412
        %1415 = vst.msk [vmem:[#allocation3] sm:$0xff] %vm706, %v1413
        %v1416 = vld [vmem:[#allocation2 + $0x6] sm:$0xff]
        %v1417 = vld [vmem:[#allocation2 + $0xe] sm:$0xff]
        %v1418 = vpack.c.bf16 %v1417, %v1416
        %1420 = vrot.lane.b32.xlu0 %v1418, 48
        %v1421 = vpop.permute.xlu0 %1420
        %1423 = vst.msk [vmem:[#allocation3] sm:$0xff] %vm715, %v1421
        %v1424 = vld [vmem:[#allocation2 + $0x7] sm:$0xff]
        %v1425 = vld [vmem:[#allocation2 + $0xf] sm:$0xff]
        %v1426 = vpack.c.bf16 %v1425, %v1424
        %1428 = vrot.lane.b32.xlu0 %v1426, 56
        %v1429 = vpop.permute.xlu0 %1428
        %1431 = vst.msk [vmem:[#allocation3] sm:$0xff] %vm724, %v1429
        %v1432 = vld [vmem:[#allocation2 + $0x8] sm:$0xff]
        %v1433 = vld [vmem:[#allocation2 + $0x10] sm:$0xff]
        %v1434 = vpack.c.bf16 %v1433, %v1432
        %1436 = vrot.lane.b32.xlu0 %v1434, 64
        %v1437 = vpop.permute.xlu0 %1436
        %1439 = vst.msk [vmem:[#allocation3] sm:$0xff] %vm733, %v1437
        %v1440 = vld [vmem:[#allocation2 + $0x9] sm:$0xff]
        %v1441 = vld [vmem:[#allocation2 + $0x11] sm:$0xff]
        %v1442 = vpack.c.bf16 %v1441, %v1440
        %1444 = vrot.lane.b32.xlu0 %v1442, 72
        %v1445 = vpop.permute.xlu0 %1444
        %1447 = vst.msk [vmem:[#allocation3] sm:$0xff] %vm742, %v1445
        %v1448 = vld [vmem:[#allocation2 + $0xa] sm:$0xff]
        %v1449 = vld [vmem:[#allocation2 + $0x12] sm:$0xff]
        %v1450 = vpack.c.bf16 %v1449, %v1448
        %1452 = vrot.lane.b32.xlu0 %v1450, 80
        %v1453 = vpop.permute.xlu0 %1452
        %1455 = vst.msk [vmem:[#allocation3] sm:$0xff] %vm751, %v1453
        %v1456 = vld [vmem:[#allocation2 + $0xb] sm:$0xff]
        %v1457 = vld [vmem:[#allocation2 + $0x13] sm:$0xff]
        %v1458 = vpack.c.bf16 %v1457, %v1456
        %1460 = vrot.lane.b32.xlu0 %v1458, 88
        %v1461 = vpop.permute.xlu0 %1460
        %1463 = vst.msk [vmem:[#allocation3] sm:$0xff] %vm760, %v1461
        %v1464 = vld [vmem:[#allocation2 + $0xc] sm:$0xff]
        %v1465 = vld [vmem:[#allocation2 + $0x14] sm:$0xff]
        %v1466 = vpack.c.bf16 %v1465, %v1464
        %1468 = vrot.lane.b32.xlu0 %v1466, 96
        %v1469 = vpop.permute.xlu0 %1468
        %1471 = vst.msk [vmem:[#allocation3] sm:$0xff] %vm769, %v1469
        %v1472 = vld [vmem:[#allocation2 + $0xd] sm:$0xff]
        %v1473 = vld [vmem:[#allocation2 + $0x15] sm:$0xff]
        %v1474 = vpack.c.bf16 %v1473, %v1472
        %1476 = vrot.lane.b32.xlu0 %v1474, 104
        %v1477 = vpop.permute.xlu0 %1476
        %1479 = vst.msk [vmem:[#allocation3] sm:$0xff] %vm778, %v1477
        %v1480 = vld [vmem:[#allocation2 + $0xe] sm:$0xff]
        %v1481 = vld [vmem:[#allocation2 + $0x16] sm:$0xff]
        %v1482 = vpack.c.bf16 %v1481, %v1480
        %1484 = vrot.lane.b32.xlu0 %v1482, 112
        %v1485 = vpop.permute.xlu0 %1484
        %1487 = vst.msk [vmem:[#allocation3] sm:$0xff] %vm787, %v1485
        %v1488 = vld [vmem:[#allocation2 + $0xf] sm:$0xff]
        %v1489 = vld [vmem:[#allocation2 + $0x17] sm:$0xff]
        %v1490 = vpack.c.bf16 %v1489, %v1488
        %1492 = vrot.lane.b32.xlu0 %v1490, 120
        %v1493 = vpop.permute.xlu0 %1492
        %1495 = vst.msk [vmem:[#allocation3] sm:$0xff] %vm796, %v1493
        %v1496 = vld [vmem:[#allocation2 + $0x10] sm:$0xff]
        %v1497 = vld [vmem:[#allocation2 + $0x18] sm:$0xff]
        %v1498 = vpack.c.bf16 %v1497, %v1496
        %1499 = vst.msk [vmem:[#allocation3 + $0x8] sm:$0xff] %vm549, %v1498
        %v1500 = vld [vmem:[#allocation2 + $0x11] sm:$0xff]
        %v1501 = vld [vmem:[#allocation2 + $0x19] sm:$0xff]
        %v1502 = vpack.c.bf16 %v1501, %v1500
        %1504 = vrot.lane.b32.xlu0 %v1502, 8
        %v1505 = vpop.permute.xlu0 %1504
        %1507 = vst.msk [vmem:[#allocation3 + $0x8] sm:$0xff] %vm670, %v1505
        %v1508 = vld [vmem:[#allocation2 + $0x12] sm:$0xff]
        %v1509 = vld [vmem:[#allocation2 + $0x1a] sm:$0xff]
        %v1510 = vpack.c.bf16 %v1509, %v1508
        %1512 = vrot.lane.b32.xlu0 %v1510, 16
        %v1513 = vpop.permute.xlu0 %1512
        %1515 = vst.msk [vmem:[#allocation3 + $0x8] sm:$0xff] %vm679, %v1513
        %v1516 = vld [vmem:[#allocation2 + $0x13] sm:$0xff]
        %v1517 = vld [vmem:[#allocation2 + $0x1b] sm:$0xff]
        %v1518 = vpack.c.bf16 %v1517, %v1516
        %1520 = vrot.lane.b32.xlu0 %v1518, 24
        %v1521 = vpop.permute.xlu0 %1520
        %1523 = vst.msk [vmem:[#allocation3 + $0x8] sm:$0xff] %vm688, %v1521
        %v1524 = vld [vmem:[#allocation2 + $0x14] sm:$0xff]
        %v1525 = vld [vmem:[#allocation2 + $0x1c] sm:$0xff]
        %v1526 = vpack.c.bf16 %v1525, %v1524
        %1528 = vrot.lane.b32.xlu0 %v1526, 32
        %v1529 = vpop.permute.xlu0 %1528
        %1531 = vst.msk [vmem:[#allocation3 + $0x8] sm:$0xff] %vm697, %v1529
        %v1532 = vld [vmem:[#allocation2 + $0x15] sm:$0xff]
        %v1533 = vld [vmem:[#allocation2 + $0x1d] sm:$0xff]
        %v1534 = vpack.c.bf16 %v1533, %v1532
        %1536 = vrot.lane.b32.xlu0 %v1534, 40
        %v1537 = vpop.permute.xlu0 %1536
        %1539 = vst.msk [vmem:[#allocation3 + $0x8] sm:$0xff] %vm706, %v1537
        %v1540 = vld [vmem:[#allocation2 + $0x16] sm:$0xff]
        %v1541 = vld [vmem:[#allocation2 + $0x1e] sm:$0xff]
        %v1542 = vpack.c.bf16 %v1541, %v1540
        %1544 = vrot.lane.b32.xlu0 %v1542, 48
        %v1545 = vpop.permute.xlu0 %1544
        %1547 = vst.msk [vmem:[#allocation3 + $0x8] sm:$0xff] %vm715, %v1545
        %v1548 = vld [vmem:[#allocation2 + $0x17] sm:$0xff]
        %v1549 = vld [vmem:[#allocation2 + $0x1f] sm:$0xff]
        %v1550 = vpack.c.bf16 %v1549, %v1548
        %1552 = vrot.lane.b32.xlu0 %v1550, 56
        %v1553 = vpop.permute.xlu0 %1552
        %1555 = vst.msk [vmem:[#allocation3 + $0x8] sm:$0xff] %vm724, %v1553
        %v1556 = vld [vmem:[#allocation2 + $0x18] sm:$0xff]
        %v1557 = vld [vmem:[#allocation2 + $0x20] sm:$0xff]
        %v1558 = vpack.c.bf16 %v1557, %v1556
        %1560 = vrot.lane.b32.xlu0 %v1558, 64
        %v1561 = vpop.permute.xlu0 %1560
        %1563 = vst.msk [vmem:[#allocation3 + $0x8] sm:$0xff] %vm733, %v1561
        %v1564 = vld [vmem:[#allocation2 + $0x19] sm:$0xff]
        %v1565 = vld [vmem:[#allocation2 + $0x21] sm:$0xff]
        %v1566 = vpack.c.bf16 %v1565, %v1564
        %1568 = vrot.lane.b32.xlu0 %v1566, 72
        %v1569 = vpop.permute.xlu0 %1568
        %1571 = vst.msk [vmem:[#allocation3 + $0x8] sm:$0xff] %vm742, %v1569
        %v1572 = vld [vmem:[#allocation2 + $0x1a] sm:$0xff]
        %v1573 = vld [vmem:[#allocation2 + $0x22] sm:$0xff]
        %v1574 = vpack.c.bf16 %v1573, %v1572
        %1576 = vrot.lane.b32.xlu0 %v1574, 80
        %v1577 = vpop.permute.xlu0 %1576
        %1579 = vst.msk [vmem:[#allocation3 + $0x8] sm:$0xff] %vm751, %v1577
        %v1580 = vld [vmem:[#allocation2 + $0x1b] sm:$0xff]
        %v1581 = vld [vmem:[#allocation2 + $0x23] sm:$0xff]
        %v1582 = vpack.c.bf16 %v1581, %v1580
        %1584 = vrot.lane.b32.xlu0 %v1582, 88
        %v1585 = vpop.permute.xlu0 %1584
        %1587 = vst.msk [vmem:[#allocation3 + $0x8] sm:$0xff] %vm760, %v1585
        %v1588 = vld [vmem:[#allocation2 + $0x1c] sm:$0xff]
        %v1589 = vld [vmem:[#allocation2 + $0x24] sm:$0xff]
        %v1590 = vpack.c.bf16 %v1589, %v1588
        %1592 = vrot.lane.b32.xlu0 %v1590, 96
        %v1593 = vpop.permute.xlu0 %1592
        %1595 = vst.msk [vmem:[#allocation3 + $0x8] sm:$0xff] %vm769, %v1593
        %v1596 = vld [vmem:[#allocation2 + $0x1d] sm:$0xff]
        %v1597 = vld [vmem:[#allocation2 + $0x25] sm:$0xff]
        %v1598 = vpack.c.bf16 %v1597, %v1596
        %1600 = vrot.lane.b32.xlu0 %v1598, 104
        %v1601 = vpop.permute.xlu0 %1600
        %1603 = vst.msk [vmem:[#allocation3 + $0x8] sm:$0xff] %vm778, %v1601
        %v1604 = vld [vmem:[#allocation2 + $0x1e] sm:$0xff]
        %v1605 = vld [vmem:[#allocation2 + $0x26] sm:$0xff]
        %v1606 = vpack.c.bf16 %v1605, %v1604
        %1608 = vrot.lane.b32.xlu0 %v1606, 112
        %v1609 = vpop.permute.xlu0 %1608
        %1611 = vst.msk [vmem:[#allocation3 + $0x8] sm:$0xff] %vm787, %v1609
        %v1612 = vld [vmem:[#allocation2 + $0x1f] sm:$0xff]
        %v1613 = vld [vmem:[#allocation2 + $0x27] sm:$0xff]
        %v1614 = vpack.c.bf16 %v1613, %v1612
        %1616 = vrot.lane.b32.xlu0 %v1614, 120
        %v1617 = vpop.permute.xlu0 %1616
        %1619 = vst.msk [vmem:[#allocation3 + $0x8] sm:$0xff] %vm796, %v1617
        %v1620 = vld [vmem:[#allocation2 + $0x20] sm:$0xff]
        %v1621 = vld [vmem:[#allocation2 + $0x28] sm:$0xff]
        %v1622 = vpack.c.bf16 %v1621, %v1620
        %1623 = vst.msk [vmem:[#allocation3 + $0x10] sm:$0xff] %vm549, %v1622
        %v1624 = vld [vmem:[#allocation2 + $0x21] sm:$0xff]
        %v1625 = vld [vmem:[#allocation2 + $0x29] sm:$0xff]
        %v1626 = vpack.c.bf16 %v1625, %v1624
        %1628 = vrot.lane.b32.xlu0 %v1626, 8
        %v1629 = vpop.permute.xlu0 %1628
        %1631 = vst.msk [vmem:[#allocation3 + $0x10] sm:$0xff] %vm670, %v1629
        %v1632 = vld [vmem:[#allocation2 + $0x22] sm:$0xff]
        %v1633 = vld [vmem:[#allocation2 + $0x2a] sm:$0xff]
        %v1634 = vpack.c.bf16 %v1633, %v1632
        %1636 = vrot.lane.b32.xlu0 %v1634, 16
        %v1637 = vpop.permute.xlu0 %1636
        %1639 = vst.msk [vmem:[#allocation3 + $0x10] sm:$0xff] %vm679, %v1637
        %v1640 = vld [vmem:[#allocation2 + $0x23] sm:$0xff]
        %v1641 = vld [vmem:[#allocation2 + $0x2b] sm:$0xff]
        %v1642 = vpack.c.bf16 %v1641, %v1640
        %1644 = vrot.lane.b32.xlu0 %v1642, 24
        %v1645 = vpop.permute.xlu0 %1644
        %1647 = vst.msk [vmem:[#allocation3 + $0x10] sm:$0xff] %vm688, %v1645
        %v1648 = vld [vmem:[#allocation2 + $0x24] sm:$0xff]
        %v1649 = vld [vmem:[#allocation2 + $0x2c] sm:$0xff]
        %v1650 = vpack.c.bf16 %v1649, %v1648
        %1652 = vrot.lane.b32.xlu0 %v1650, 32
        %v1653 = vpop.permute.xlu0 %1652
        %1655 = vst.msk [vmem:[#allocation3 + $0x10] sm:$0xff] %vm697, %v1653
        %v1656 = vld [vmem:[#allocation2 + $0x25] sm:$0xff]
        %v1657 = vld [vmem:[#allocation2 + $0x2d] sm:$0xff]
        %v1658 = vpack.c.bf16 %v1657, %v1656
        %1660 = vrot.lane.b32.xlu0 %v1658, 40
        %v1661 = vpop.permute.xlu0 %1660
        %1663 = vst.msk [vmem:[#allocation3 + $0x10] sm:$0xff] %vm706, %v1661
        %v1664 = vld [vmem:[#allocation2 + $0x26] sm:$0xff]
        %v1665 = vld [vmem:[#allocation2 + $0x2e] sm:$0xff]
        %v1666 = vpack.c.bf16 %v1665, %v1664
        %1668 = vrot.lane.b32.xlu0 %v1666, 48
        %v1669 = vpop.permute.xlu0 %1668
        %1671 = vst.msk [vmem:[#allocation3 + $0x10] sm:$0xff] %vm715, %v1669
        %v1672 = vld [vmem:[#allocation3] sm:$0xff]
        %v1673 = vld [vmem:[#allocation3 + $0x8] sm:$0xff]
        %v1674 = vld [vmem:[#allocation3 + $0x10] sm:$0xff]
        %v1714 = vunpack.c.l.b16 %v1326
        %v1715 = vunpack.c.l.b16 %v1327
        %v1716 = vunpack.c.l.b16 %v1328
        %v1717 = vunpack.c.l.b16 %v1329
        %v1718 = vunpack.c.l.b16 %v1330
        %v1719 = vunpack.c.l.b16 %v1331
        %v1720 = vunpack.c.l.b16 %v1332
        %v1721 = vunpack.c.l.b16 %v1333
        %v1722 = vunpack.c.l.b16 %v1334
        %v1723 = vunpack.c.l.b16 %v1335
        %v1724 = vunpack.c.l.b16 %v1336
        %v1725 = vunpack.c.l.b16 %v1337
        %v1726 = vunpack.c.l.b16 %v1338
        %v1727 = vunpack.c.l.b16 %v1339
        %v1728 = vunpack.c.l.b16 %v1340
        %v1729 = vunpack.c.l.b16 %v1341
        %v1730 = vunpack.c.l.b16 %v1342
        %v1731 = vunpack.c.l.b16 %v1343
        %v1732 = vunpack.c.l.b16 %v1344
        %v1733 = vunpack.c.l.b16 %v1345
        %v1734 = vunpack.c.l.b16 %v1346
        %v1735 = vunpack.c.l.b16 %v1347
        %v1736 = vunpack.c.l.b16 %v1348
        %v1737 = vunpack.c.l.b16 %v1349
        %v1738 = vunpack.c.l.b16 %v1350
        %v1739 = vunpack.c.l.b16 %v1351
        %v1740 = vunpack.c.l.b16 %v1352
        %v1741 = vunpack.c.l.b16 %v1353
        %v1742 = vunpack.c.l.b16 %v1354
        %v1743 = vunpack.c.l.b16 %v1355
        %v1744 = vunpack.c.l.b16 %v1356
        %v1745 = vunpack.c.l.b16 %v1357
        %v1746 = vunpack.c.l.b16 %v1358
        %v1747 = vunpack.c.l.b16 %v1359
        %v1748 = vunpack.c.l.b16 %v1360
        %v1749 = vunpack.c.l.b16 %v1361
        %v1750 = vunpack.c.l.b16 %v1362
        %v1751 = vunpack.c.l.b16 %v1363
        %v1752 = vunpack.c.l.b16 %v1364
        %v1753 = vpack.c.b16 %v1715, %v1714
        %v1754 = vpack.c.b16 %v1717, %v1716
        %v1755 = vpack.c.b16 %v1719, %v1718
        %v1756 = vpack.c.b16 %v1721, %v1720
        %v1757 = vpack.c.b16 %v1723, %v1722
        %v1758 = vpack.c.b16 %v1725, %v1724
        %v1759 = vpack.c.b16 %v1727, %v1726
        %v1760 = vpack.c.b16 %v1729, %v1728
        %v1761 = vpack.c.b16 %v1731, %v1730
        %v1762 = vpack.c.b16 %v1733, %v1732
        %v1763 = vpack.c.b16 %v1735, %v1734
        %v1764 = vpack.c.b16 %v1737, %v1736
        %v1765 = vpack.c.b16 %v1739, %v1738
        %v1766 = vpack.c.b16 %v1741, %v1740
        %v1767 = vpack.c.b16 %v1743, %v1742
        %v1768 = vpack.c.b16 %v1745, %v1744
        %v1769 = vpack.c.b16 %v1747, %v1746
        %v1770 = vpack.c.b16 %v1749, %v1748
        %v1771 = vpack.c.b16 %v1751, %v1750
        %v1772 = vpack.c.b16 %v1752, %v1752
        %v1793 = vsel %vm1094, %v1674, 0
        %v1796 = vsel %vm1098, %v1772, 0
        %1798 = vmatprep.subr.bf16.mxu0 0
        %1799 = vmatpush1.bf16.msra.mxu0 %v1753
        %1800 = vmatprep.subr.bf16.mxu0 0
        %1801 = vmatpush1.bf16.msra.mxu0 %v1754
        %1802 = vmatprep.subr.bf16.mxu0 0
        %1803 = vmatpush1.bf16.msra.mxu0 %v1755
        %1804 = vmatprep.subr.bf16.mxu0 0
        %1805 = vmatpush1.bf16.msra.mxu0 %v1756
        %1806 = vmatprep.subr.bf16.mxu0 0
        %1807 = vmatpush1.bf16.msra.mxu0 %v1757
        %1808 = vmatprep.subr.bf16.mxu0 0
        %1809 = vmatpush1.bf16.msra.mxu0 %v1758
        %1810 = vmatprep.subr.bf16.mxu0 0
        %1811 = vmatpush1.bf16.msra.mxu0 %v1759
        %1812 = vmatprep.subr.bf16.mxu0 0
        %1813 = vmatpush1.bf16.msra.mxu0 %v1760
        %1814 = vmatprep.subr.bf16.mxu0 0
        %1815 = vmatpush1.bf16.msra.mxu0 %v1761
        %1816 = vmatprep.subr.bf16.mxu0 0
        %1817 = vmatpush1.bf16.msra.mxu0 %v1762
        %1818 = vmatprep.subr.bf16.mxu0 0
        %1819 = vmatpush1.bf16.msra.mxu0 %v1763
        %1820 = vmatprep.subr.bf16.mxu0 0
        %1821 = vmatpush1.bf16.msra.mxu0 %v1764
        %1822 = vmatprep.subr.bf16.mxu0 0
        %1823 = vmatpush1.bf16.msra.mxu0 %v1765
        %1824 = vmatprep.subr.bf16.mxu0 0
        %1825 = vmatpush1.bf16.msra.mxu0 %v1766
        %1826 = vmatprep.subr.bf16.mxu0 0
        %1827 = vmatpush1.bf16.msra.mxu0 %v1767
        %1828 = vmatprep.subr.bf16.mxu0 0
        %1829 = vmatpush1.bf16.msra.mxu0 %v1768
        %1830 = vmatprep.mubr.bf16.mxu0 %v1673
        %1831 = vmatmul.mubr.bf16.gmra.mrb[0].mxu0 %v1672
        %v1832 = vpop.f32.mrb[0].mxu0
        %v1833 = vadd.f32 0.0, %v1832
        %v1834 = vpop.f32.mrb[0].mxu0
        %v1835 = vpop.f32.mrb[0].mxu0
        %v1836 = vadd.f32 0.0, %v1835
        %v1837 = vpop.f32.mrb[0].mxu0
        %1838 = vdwg.mxu0
        %1839 = vmatprep.subr.bf16.mxu0 0
        %1840 = vmatpush1.bf16.msra.mxu0 %v1769
        %1841 = vmatprep.subr.bf16.mxu0 0
        %1842 = vmatpush1.bf16.msra.mxu0 %v1770
        %1843 = vmatprep.subr.bf16.mxu0 0
        %1844 = vmatpush1.bf16.msra.mxu0 %v1771
        %1845 = vmatprep.subr.bf16.mxu0 0
        %1846 = vmatpush1.bf16.msra.mxu0 %v1796
        %1847 = vmatprep.subr.bf16.mxu0 0
        %1848 = vmatpush1.bf16.msra.mxu0 0
        %1849 = vmatprep.subr.bf16.mxu0 0
        %1850 = vmatpush1.bf16.msra.mxu0 0
        %1851 = vmatprep.subr.bf16.mxu0 0
        %1852 = vmatpush1.bf16.msra.mxu0 0
        %1853 = vmatprep.subr.bf16.mxu0 0
        %1854 = vmatpush1.bf16.msra.mxu0 0
        %1855 = vmatprep.subr.bf16.mxu0 0
        %1856 = vmatpush1.bf16.msra.mxu0 0
        %1857 = vmatprep.subr.bf16.mxu0 0
        %1858 = vmatpush1.bf16.msra.mxu0 0
        %1859 = vmatprep.subr.bf16.mxu0 0
        %1860 = vmatpush1.bf16.msra.mxu0 0
        %1861 = vmatprep.subr.bf16.mxu0 0
        %1862 = vmatpush1.bf16.msra.mxu0 0
        %1863 = vmatprep.subr.bf16.mxu0 0
        %1864 = vmatpush1.bf16.msra.mxu0 0
        %1865 = vmatprep.subr.bf16.mxu0 0
        %1866 = vmatpush1.bf16.msra.mxu0 0
        %1867 = vmatprep.subr.bf16.mxu0 0
        %1868 = vmatpush1.bf16.msra.mxu0 0
        %1869 = vmatprep.subr.bf16.mxu0 0
        %1870 = vmatpush1.bf16.msra.mxu0 0
        %1871 = vmatprep.mubr.bf16.mxu0 0
        %1872 = vmatmul.mubr.bf16.gmra.mrb[0].mxu0 %v1793
        %v1873 = vpop.f32.mrb[0].mxu0
        %v1874 = vadd.f32 %v1833, %v1873
        %v1875 = vpop.f32.mrb[0].mxu0
        %v1876 = vpop.f32.mrb[0].mxu0
        %v1877 = vadd.f32 %v1836, %v1876
        %v1878 = vpop.f32.mrb[0].mxu0
        %1879 = vdwg.mxu0
        %1880 = vst.msk [vmem:[#allocation4 + $0x1] sm:$0xff] %vm558, %v1263
        %1881 = vst.msk [vmem:[#allocation4 + $0x9] sm:$0xff] %vm558, %v1264
        %v1882 = vld [vmem:[#allocation4] sm:$0xff]
        %v1883 = vld [vmem:[#allocation4 + $0x8] sm:$0xff]
        %v1884 = vld [vmem:[#allocation4 + $0x1] sm:$0xff]
        %v1885 = vld [vmem:[#allocation4 + $0x9] sm:$0xff]
        %v1886 = vmax.f32 %v1882, %v1884
        %v1887 = vmax.f32 %v1883, %v1885
        %v1888 = vld [vmem:[#allocation4 + $0x2] sm:$0xff]
        %v1889 = vld [vmem:[#allocation4 + $0xa] sm:$0xff]
        %v1890 = vmax.f32 %v1886, %v1888
        %v1891 = vmax.f32 %v1887, %v1889
        %v1892 = vpack.c.bf16 %v1891, %v1890
        %v1897 = vunpack.c.l.b16 %v1365
        %v1898 = vunpack.c.l.b16 %v1366
        %v1899 = vunpack.c.l.b16 %v1367
        %v1900 = vunpack.c.l.b16 %v1368
        %v1901 = vpack.c.b16 %v1898, %v1897
        %v1902 = vpack.c.b16 %v1900, %v1899
        %v1906 = vsel %vm558, %v1892, 0
        %1908 = vmatprep.subr.bf16.mxu0 0
        %1909 = vmatpush1.bf16.msra.mxu0 %v1901
        %1910 = vmatprep.subr.bf16.mxu0 0
        %1911 = vmatpush1.bf16.msra.mxu0 %v1902
        %1912 = vmatprep.subr.bf16.mxu0 0
        %1913 = vmatpush1.bf16.msra.mxu0 0
        %1914 = vmatprep.subr.bf16.mxu0 0
        %1915 = vmatpush1.bf16.msra.mxu0 0
        %1916 = vmatprep.subr.bf16.mxu0 0
        %1917 = vmatpush1.bf16.msra.mxu0 0
        %1918 = vmatprep.subr.bf16.mxu0 0
        %1919 = vmatpush1.bf16.msra.mxu0 0
        %1920 = vmatprep.subr.bf16.mxu0 0
        %1921 = vmatpush1.bf16.msra.mxu0 0
        %1922 = vmatprep.subr.bf16.mxu0 0
        %1923 = vmatpush1.bf16.msra.mxu0 0
        %1924 = vmatprep.subr.bf16.mxu0 0
        %1925 = vmatpush1.bf16.msra.mxu0 0
        %1926 = vmatprep.subr.bf16.mxu0 0
        %1927 = vmatpush1.bf16.msra.mxu0 0
        %1928 = vmatprep.subr.bf16.mxu0 0
        %1929 = vmatpush1.bf16.msra.mxu0 0
        %1930 = vmatprep.subr.bf16.mxu0 0
        %1931 = vmatpush1.bf16.msra.mxu0 0
        %1932 = vmatprep.subr.bf16.mxu0 0
        %1933 = vmatpush1.bf16.msra.mxu0 0
        %1934 = vmatprep.subr.bf16.mxu0 0
        %1935 = vmatpush1.bf16.msra.mxu0 0
        %1936 = vmatprep.subr.bf16.mxu0 0
        %1937 = vmatpush1.bf16.msra.mxu0 0
        %1938 = vmatprep.subr.bf16.mxu0 0
        %1939 = vmatpush1.bf16.msra.mxu0 0
        %1940 = vmatprep.mubr.bf16.mxu0 0
        %1941 = vmatmul.mubr.bf16.gmra.mrb[0].mxu0 %v1906
        %v1942 = vpop.f32.mrb[0].mxu0
        %v1943 = vadd.f32 0.0, %v1942
        %v1944 = vpop.f32.mrb[0].mxu0
        %v1945 = vpop.f32.mrb[0].mxu0
        %v1946 = vadd.f32 0.0, %v1945
        %v1947 = vpop.f32.mrb[0].mxu0
        %1948 = vdwg.mxu0
        %1951 = vrot.lane.b32.xlu0 %v1943, 24
        %v1952 = vpop.permute.xlu0 %1951
        %1953 = vrot.lane.b32.xlu0 %v1946, 24
        %v1954 = vpop.permute.xlu0 %1953
        %v1957 = vsel %vm1252, %v1874, %v1952
        %v1958 = vsel %vm1252, %v1877, %v1954
        %v1960 = vlaneseq
        %v1961 = vshrl.u32 %v1960, 7
        %v1962 = vsub.s32 0, %v1961
        %v1963 = vrot.slane %v1369, %v1962
        %v1965 = vadd.f32 %v1957, %v1963
        %v1966 = vadd.f32 %v1958, %v1963
        %v1967 = vmax.f32 %v1965, 0.0
        %v1968 = vmax.f32 %v1966, 0.0
        %v1969 = vpack.c.bf16 %v1968, %v1967
        %v1970 = vld [vmem:[%s9] sm:$0xf]
        %v1971 = vld [vmem:[%s9 + $0x4] sm:$0xf]
        %v1972 = vld [vmem:[%s9 + $0x8] sm:$0xf]
        %v1973 = vld [vmem:[%s9 + $0xc] sm:$0xf]
        %v1978 = vunpack.c.l.b16 %v1970
        %v1979 = vunpack.c.l.b16 %v1971
        %v1980 = vunpack.c.l.b16 %v1972
        %v1981 = vunpack.c.l.b16 %v1973
        %v1982 = vpack.c.b16 %v1979, %v1978
        %v1983 = vpack.c.b16 %v1981, %v1980
        %v1987 = vsel %vm558, %v1969, 0
        %1989 = vmatprep.subr.bf16.mxu0 0
        %1990 = vmatpush1.bf16.msra.mxu0 %v1982
        %1991 = vmatprep.subr.bf16.mxu0 0
        %1992 = vmatpush1.bf16.msra.mxu0 %v1983
        %1993 = vmatprep.subr.bf16.mxu0 0
        %1994 = vmatpush1.bf16.msra.mxu0 0
        %1995 = vmatprep.subr.bf16.mxu0 0
        %1996 = vmatpush1.bf16.msra.mxu0 0
        %1997 = vmatprep.subr.bf16.mxu0 0
        %1998 = vmatpush1.bf16.msra.mxu0 0
        %1999 = vmatprep.subr.bf16.mxu0 0
        %2000 = vmatpush1.bf16.msra.mxu0 0
        %2001 = vmatprep.subr.bf16.mxu0 0
        %2002 = vmatpush1.bf16.msra.mxu0 0
        %2003 = vmatprep.subr.bf16.mxu0 0
        %2004 = vmatpush1.bf16.msra.mxu0 0
        %2005 = vmatprep.subr.bf16.mxu0 0
        %2006 = vmatpush1.bf16.msra.mxu0 0
        %2007 = vmatprep.subr.bf16.mxu0 0
        %2008 = vmatpush1.bf16.msra.mxu0 0
        %2009 = vmatprep.subr.bf16.mxu0 0
        %2010 = vmatpush1.bf16.msra.mxu0 0
        %2011 = vmatprep.subr.bf16.mxu0 0
        %2012 = vmatpush1.bf16.msra.mxu0 0
        %2013 = vmatprep.subr.bf16.mxu0 0
        %2014 = vmatpush1.bf16.msra.mxu0 0
        %2015 = vmatprep.subr.bf16.mxu0 0
        %2016 = vmatpush1.bf16.msra.mxu0 0
        %2017 = vmatprep.subr.bf16.mxu0 0
        %2018 = vmatpush1.bf16.msra.mxu0 0
        %2019 = vmatprep.subr.bf16.mxu0 0
        %2020 = vmatpush1.bf16.msra.mxu0 0
        %2021 = vmatprep.mubr.bf16.mxu0 0
        %2022 = vmatmul.mubr.bf16.gmra.mrb[0].mxu0 %v1987
        %v2023 = vpop.f32.mrb[0].mxu0
        %v2024 = vadd.f32 0.0, %v2023
        %v2025 = vpop.f32.mrb[0].mxu0
        %v2026 = vpop.f32.mrb[0].mxu0
        %v2027 = vadd.f32 0.0, %v2026
        %v2028 = vpop.f32.mrb[0].mxu0
        %2029 = vdwg.mxu0
        %v2030 = vld [vmem:[#allocation13] sm:$0xf]
        %v2031 = vld [vmem:[#allocation13 + $0x4] sm:$0xf]
        %v2032 = vld [vmem:[#allocation13 + $0x8] sm:$0xf]
        %v2033 = vld [vmem:[#allocation13 + $0xc] sm:$0xf]
        %v2034 = vld [vmem:[#allocation13 + $0x10] sm:$0xf]
        %v2035 = vld [vmem:[#allocation13 + $0x14] sm:$0xf]
        %v2036 = vld [vmem:[#allocation13 + $0x18] sm:$0xf]
        %v2037 = vld [vmem:[#allocation13 + $0x1c] sm:$0xf]
        %v2038 = vld [vmem:[#allocation13 + $0x20] sm:$0xf]
        %v2039 = vld [vmem:[#allocation13 + $0x24] sm:$0xf]
        %v2040 = vld [vmem:[#allocation13 + $0x28] sm:$0xf]
        %v2041 = vld [vmem:[#allocation13 + $0x2c] sm:$0xf]
        %v2042 = vld [vmem:[#allocation13 + $0x30] sm:$0xf]
        %v2043 = vld [vmem:[#allocation13 + $0x34] sm:$0xf]
        %v2044 = vld [vmem:[#allocation13 + $0x38] sm:$0xf]
        %v2045 = vld [vmem:[#allocation13 + $0x3c] sm:$0xf]
        %v2046 = vld [vmem:[#allocation13 + $0x40] sm:$0xf]
        %v2047 = vld [vmem:[#allocation13 + $0x44] sm:$0xf]
        %v2048 = vld [vmem:[#allocation13 + $0x48] sm:$0xf]
        %v2049 = vld [vmem:[#allocation13 + $0x4c] sm:$0xf]
        %v2050 = vld [vmem:[#allocation13 + $0x50] sm:$0xf]
        %v2051 = vld [vmem:[#allocation13 + $0x54] sm:$0xf]
        %v2052 = vld [vmem:[#allocation13 + $0x58] sm:$0xf]
        %v2053 = vld [vmem:[#allocation13 + $0x5c] sm:$0xf]
        %v2054 = vld [vmem:[#allocation13 + $0x60] sm:$0xf]
        %v2055 = vld [vmem:[#allocation13 + $0x64] sm:$0xf]
        %v2056 = vld [vmem:[#allocation13 + $0x68] sm:$0xf]
        %v2057 = vld [vmem:[#allocation13 + $0x6c] sm:$0xf]
        %v2058 = vld [vmem:[#allocation13 + $0x70] sm:$0xf]
        %v2059 = vld [vmem:[#allocation13 + $0x74] sm:$0xf]
        %v2060 = vld [vmem:[#allocation13 + $0x78] sm:$0xf]
        %v2061 = vld [vmem:[#allocation13 + $0x7c] sm:$0xf]
        %v2062 = vld [vmem:[#allocation13 + $0x80] sm:$0xf]
        %v2063 = vld [vmem:[#allocation13 + $0x84] sm:$0xf]
        %v2064 = vld [vmem:[#allocation13 + $0x88] sm:$0xf]
        %v2065 = vld [vmem:[#allocation13 + $0x8c] sm:$0xf]
        %v2066 = vld [vmem:[#allocation13 + $0x90] sm:$0xf]
        %v2067 = vld [vmem:[#allocation13 + $0x94] sm:$0xf]
        %v2068 = vld [vmem:[#allocation13 + $0x98] sm:$0xf]
        %v2069 = vld [vmem:[%s11] sm:$0xf]
        %v2070 = vld [vmem:[%s11 + $0x4] sm:$0xf]
        %v2071 = vld [vmem:[%s11 + $0x8] sm:$0xf]
        %v2072 = vld [vmem:[%s11 + $0xc] sm:$0xf]
        %v2073 = vld [vmem:[#allocation14] sm:$0x1]
        %2074 = vst.msk [vmem:[#allocation2 + $0x13] sm:$0xff] %vm549, %v2024
        %2075 = vst.msk [vmem:[#allocation2 + $0x1b] sm:$0xff] %vm549, %v2027
        %v2076 = vld [vmem:[#allocation2] sm:$0xff]
        %v2077 = vld [vmem:[#allocation2 + $0x8] sm:$0xff]
        %v2078 = vpack.c.bf16 %v2077, %v2076
        %2079 = vst.msk [vmem:[#allocation3] sm:$0xff] %vm549, %v2078
        %v2080 = vld [vmem:[#allocation2 + $0x1] sm:$0xff]
        %v2081 = vld [vmem:[#allocation2 + $0x9] sm:$0xff]
        %v2082 = vpack.c.bf16 %v2081, %v2080
        %2084 = vrot.lane.b32.xlu0 %v2082, 8
        %v2085 = vpop.permute.xlu0 %2084
        %2087 = vst.msk [vmem:[#allocation3] sm:$0xff] %vm670, %v2085
        %v2088 = vld [vmem:[#allocation2 + $0x2] sm:$0xff]
        %v2089 = vld [vmem:[#allocation2 + $0xa] sm:$0xff]
        %v2090 = vpack.c.bf16 %v2089, %v2088
        %2092 = vrot.lane.b32.xlu0 %v2090, 16
        %v2093 = vpop.permute.xlu0 %2092
        %2095 = vst.msk [vmem:[#allocation3] sm:$0xff] %vm679, %v2093
        %v2096 = vld [vmem:[#allocation2 + $0x3] sm:$0xff]
        %v2097 = vld [vmem:[#allocation2 + $0xb] sm:$0xff]
        %v2098 = vpack.c.bf16 %v2097, %v2096
        %2100 = vrot.lane.b32.xlu0 %v2098, 24
        %v2101 = vpop.permute.xlu0 %2100
        %2103 = vst.msk [vmem:[#allocation3] sm:$0xff] %vm688, %v2101
        %v2104 = vld [vmem:[#allocation2 + $0x4] sm:$0xff]
        %v2105 = vld [vmem:[#allocation2 + $0xc] sm:$0xff]
        %v2106 = vpack.c.bf16 %v2105, %v2104
        %2108 = vrot.lane.b32.xlu0 %v2106, 32
        %v2109 = vpop.permute.xlu0 %2108
        %2111 = vst.msk [vmem:[#allocation3] sm:$0xff] %vm697, %v2109
        %v2112 = vld [vmem:[#allocation2 + $0x5] sm:$0xff]
        %v2113 = vld [vmem:[#allocation2 + $0xd] sm:$0xff]
        %v2114 = vpack.c.bf16 %v2113, %v2112
        %2116 = vrot.lane.b32.xlu0 %v2114, 40
        %v2117 = vpop.permute.xlu0 %2116
        %2119 = vst.msk [vmem:[#allocation3] sm:$0xff] %vm706, %v2117
        %v2120 = vld [vmem:[#allocation2 + $0x6] sm:$0xff]
        %v2121 = vld [vmem:[#allocation2 + $0xe] sm:$0xff]
        %v2122 = vpack.c.bf16 %v2121, %v2120
        %2124 = vrot.lane.b32.xlu0 %v2122, 48
        %v2125 = vpop.permute.xlu0 %2124
        %2127 = vst.msk [vmem:[#allocation3] sm:$0xff] %vm715, %v2125
        %v2128 = vld [vmem:[#allocation2 + $0x7] sm:$0xff]
        %v2129 = vld [vmem:[#allocation2 + $0xf] sm:$0xff]
        %v2130 = vpack.c.bf16 %v2129, %v2128
        %2132 = vrot.lane.b32.xlu0 %v2130, 56
        %v2133 = vpop.permute.xlu0 %2132
        %2135 = vst.msk [vmem:[#allocation3] sm:$0xff] %vm724, %v2133
        %v2136 = vld [vmem:[#allocation2 + $0x8] sm:$0xff]
        %v2137 = vld [vmem:[#allocation2 + $0x10] sm:$0xff]
        %v2138 = vpack.c.bf16 %v2137, %v2136
        %2140 = vrot.lane.b32.xlu0 %v2138, 64
        %v2141 = vpop.permute.xlu0 %2140
        %2143 = vst.msk [vmem:[#allocation3] sm:$0xff] %vm733, %v2141
        %v2144 = vld [vmem:[#allocation2 + $0x9] sm:$0xff]
        %v2145 = vld [vmem:[#allocation2 + $0x11] sm:$0xff]
        %v2146 = vpack.c.bf16 %v2145, %v2144
        %2148 = vrot.lane.b32.xlu0 %v2146, 72
        %v2149 = vpop.permute.xlu0 %2148
        %2151 = vst.msk [vmem:[#allocation3] sm:$0xff] %vm742, %v2149
        %v2152 = vld [vmem:[#allocation2 + $0xa] sm:$0xff]
        %v2153 = vld [vmem:[#allocation2 + $0x12] sm:$0xff]
        %v2154 = vpack.c.bf16 %v2153, %v2152
        %2156 = vrot.lane.b32.xlu0 %v2154, 80
        %v2157 = vpop.permute.xlu0 %2156
        %2159 = vst.msk [vmem:[#allocation3] sm:$0xff] %vm751, %v2157
        %v2160 = vld [vmem:[#allocation2 + $0xb] sm:$0xff]
        %v2161 = vld [vmem:[#allocation2 + $0x13] sm:$0xff]
        %v2162 = vpack.c.bf16 %v2161, %v2160
        %2164 = vrot.lane.b32.xlu0 %v2162, 88
        %v2165 = vpop.permute.xlu0 %2164
        %2167 = vst.msk [vmem:[#allocation3] sm:$0xff] %vm760, %v2165
        %v2168 = vld [vmem:[#allocation2 + $0xc] sm:$0xff]
        %v2169 = vld [vmem:[#allocation2 + $0x14] sm:$0xff]
        %v2170 = vpack.c.bf16 %v2169, %v2168
        %2172 = vrot.lane.b32.xlu0 %v2170, 96
        %v2173 = vpop.permute.xlu0 %2172
        %2175 = vst.msk [vmem:[#allocation3] sm:$0xff] %vm769, %v2173
        %v2176 = vld [vmem:[#allocation2 + $0xd] sm:$0xff]
        %v2177 = vld [vmem:[#allocation2 + $0x15] sm:$0xff]
        %v2178 = vpack.c.bf16 %v2177, %v2176
        %2180 = vrot.lane.b32.xlu0 %v2178, 104
        %v2181 = vpop.permute.xlu0 %2180
        %2183 = vst.msk [vmem:[#allocation3] sm:$0xff] %vm778, %v2181
        %v2184 = vld [vmem:[#allocation2 + $0xe] sm:$0xff]
        %v2185 = vld [vmem:[#allocation2 + $0x16] sm:$0xff]
        %v2186 = vpack.c.bf16 %v2185, %v2184
        %2188 = vrot.lane.b32.xlu0 %v2186, 112
        %v2189 = vpop.permute.xlu0 %2188
        %2191 = vst.msk [vmem:[#allocation3] sm:$0xff] %vm787, %v2189
        %v2192 = vld [vmem:[#allocation2 + $0xf] sm:$0xff]
        %v2193 = vld [vmem:[#allocation2 + $0x17] sm:$0xff]
        %v2194 = vpack.c.bf16 %v2193, %v2192
        %2196 = vrot.lane.b32.xlu0 %v2194, 120
        %v2197 = vpop.permute.xlu0 %2196
        %2199 = vst.msk [vmem:[#allocation3] sm:$0xff] %vm796, %v2197
        %v2200 = vld [vmem:[#allocation2 + $0x10] sm:$0xff]
        %v2201 = vld [vmem:[#allocation2 + $0x18] sm:$0xff]
        %v2202 = vpack.c.bf16 %v2201, %v2200
        %2203 = vst.msk [vmem:[#allocation3 + $0x8] sm:$0xff] %vm549, %v2202
        %v2204 = vld [vmem:[#allocation2 + $0x11] sm:$0xff]
        %v2205 = vld [vmem:[#allocation2 + $0x19] sm:$0xff]
        %v2206 = vpack.c.bf16 %v2205, %v2204
        %2208 = vrot.lane.b32.xlu0 %v2206, 8
        %v2209 = vpop.permute.xlu0 %2208
        %2211 = vst.msk [vmem:[#allocation3 + $0x8] sm:$0xff] %vm670, %v2209
        %v2212 = vld [vmem:[#allocation2 + $0x12] sm:$0xff]
        %v2213 = vld [vmem:[#allocation2 + $0x1a] sm:$0xff]
        %v2214 = vpack.c.bf16 %v2213, %v2212
        %2216 = vrot.lane.b32.xlu0 %v2214, 16
        %v2217 = vpop.permute.xlu0 %2216
        %2219 = vst.msk [vmem:[#allocation3 + $0x8] sm:$0xff] %vm679, %v2217
        %v2220 = vld [vmem:[#allocation2 + $0x13] sm:$0xff]
        %v2221 = vld [vmem:[#allocation2 + $0x1b] sm:$0xff]
        %v2222 = vpack.c.bf16 %v2221, %v2220
        %2224 = vrot.lane.b32.xlu0 %v2222, 24
        %v2225 = vpop.permute.xlu0 %2224
        %2227 = vst.msk [vmem:[#allocation3 + $0x8] sm:$0xff] %vm688, %v2225
        %v2228 = vld [vmem:[#allocation2 + $0x14] sm:$0xff]
        %v2229 = vld [vmem:[#allocation2 + $0x1c] sm:$0xff]
        %v2230 = vpack.c.bf16 %v2229, %v2228
        %2232 = vrot.lane.b32.xlu0 %v2230, 32
        %v2233 = vpop.permute.xlu0 %2232
        %2235 = vst.msk [vmem:[#allocation3 + $0x8] sm:$0xff] %vm697, %v2233
        %v2236 = vld [vmem:[#allocation2 + $0x15] sm:$0xff]
        %v2237 = vld [vmem:[#allocation2 + $0x1d] sm:$0xff]
        %v2238 = vpack.c.bf16 %v2237, %v2236
        %2240 = vrot.lane.b32.xlu0 %v2238, 40
        %v2241 = vpop.permute.xlu0 %2240
        %2243 = vst.msk [vmem:[#allocation3 + $0x8] sm:$0xff] %vm706, %v2241
        %v2244 = vld [vmem:[#allocation2 + $0x16] sm:$0xff]
        %v2245 = vld [vmem:[#allocation2 + $0x1e] sm:$0xff]
        %v2246 = vpack.c.bf16 %v2245, %v2244
        %2248 = vrot.lane.b32.xlu0 %v2246, 48
        %v2249 = vpop.permute.xlu0 %2248
        %2251 = vst.msk [vmem:[#allocation3 + $0x8] sm:$0xff] %vm715, %v2249
        %v2252 = vld [vmem:[#allocation2 + $0x17] sm:$0xff]
        %v2253 = vld [vmem:[#allocation2 + $0x1f] sm:$0xff]
        %v2254 = vpack.c.bf16 %v2253, %v2252
        %2256 = vrot.lane.b32.xlu0 %v2254, 56
        %v2257 = vpop.permute.xlu0 %2256
        %2259 = vst.msk [vmem:[#allocation3 + $0x8] sm:$0xff] %vm724, %v2257
        %v2260 = vld [vmem:[#allocation2 + $0x18] sm:$0xff]
        %v2261 = vld [vmem:[#allocation2 + $0x20] sm:$0xff]
        %v2262 = vpack.c.bf16 %v2261, %v2260
        %2264 = vrot.lane.b32.xlu0 %v2262, 64
        %v2265 = vpop.permute.xlu0 %2264
        %2267 = vst.msk [vmem:[#allocation3 + $0x8] sm:$0xff] %vm733, %v2265
        %v2268 = vld [vmem:[#allocation2 + $0x19] sm:$0xff]
        %v2269 = vld [vmem:[#allocation2 + $0x21] sm:$0xff]
        %v2270 = vpack.c.bf16 %v2269, %v2268
        %2272 = vrot.lane.b32.xlu0 %v2270, 72
        %v2273 = vpop.permute.xlu0 %2272
        %2275 = vst.msk [vmem:[#allocation3 + $0x8] sm:$0xff] %vm742, %v2273
        %v2276 = vld [vmem:[#allocation2 + $0x1a] sm:$0xff]
        %v2277 = vld [vmem:[#allocation2 + $0x22] sm:$0xff]
        %v2278 = vpack.c.bf16 %v2277, %v2276
        %2280 = vrot.lane.b32.xlu0 %v2278, 80
        %v2281 = vpop.permute.xlu0 %2280
        %2283 = vst.msk [vmem:[#allocation3 + $0x8] sm:$0xff] %vm751, %v2281
        %v2284 = vld [vmem:[#allocation2 + $0x1b] sm:$0xff]
        %v2285 = vld [vmem:[#allocation2 + $0x23] sm:$0xff]
        %v2286 = vpack.c.bf16 %v2285, %v2284
        %2288 = vrot.lane.b32.xlu0 %v2286, 88
        %v2289 = vpop.permute.xlu0 %2288
        %2291 = vst.msk [vmem:[#allocation3 + $0x8] sm:$0xff] %vm760, %v2289
        %v2292 = vld [vmem:[#allocation2 + $0x1c] sm:$0xff]
        %v2293 = vld [vmem:[#allocation2 + $0x24] sm:$0xff]
        %v2294 = vpack.c.bf16 %v2293, %v2292
        %2296 = vrot.lane.b32.xlu0 %v2294, 96
        %v2297 = vpop.permute.xlu0 %2296
        %2299 = vst.msk [vmem:[#allocation3 + $0x8] sm:$0xff] %vm769, %v2297
        %v2300 = vld [vmem:[#allocation2 + $0x1d] sm:$0xff]
        %v2301 = vld [vmem:[#allocation2 + $0x25] sm:$0xff]
        %v2302 = vpack.c.bf16 %v2301, %v2300
        %2304 = vrot.lane.b32.xlu0 %v2302, 104
        %v2305 = vpop.permute.xlu0 %2304
        %2307 = vst.msk [vmem:[#allocation3 + $0x8] sm:$0xff] %vm778, %v2305
        %v2308 = vld [vmem:[#allocation2 + $0x1e] sm:$0xff]
        %v2309 = vld [vmem:[#allocation2 + $0x26] sm:$0xff]
        %v2310 = vpack.c.bf16 %v2309, %v2308
        %2312 = vrot.lane.b32.xlu0 %v2310, 112
        %v2313 = vpop.permute.xlu0 %2312
        %2315 = vst.msk [vmem:[#allocation3 + $0x8] sm:$0xff] %vm787, %v2313
        %v2316 = vld [vmem:[#allocation2 + $0x1f] sm:$0xff]
        %v2317 = vld [vmem:[#allocation2 + $0x27] sm:$0xff]
        %v2318 = vpack.c.bf16 %v2317, %v2316
        %2320 = vrot.lane.b32.xlu0 %v2318, 120
        %v2321 = vpop.permute.xlu0 %2320
        %2323 = vst.msk [vmem:[#allocation3 + $0x8] sm:$0xff] %vm796, %v2321
        %v2324 = vld [vmem:[#allocation2 + $0x20] sm:$0xff]
        %v2325 = vld [vmem:[#allocation2 + $0x28] sm:$0xff]
        %v2326 = vpack.c.bf16 %v2325, %v2324
        %2327 = vst.msk [vmem:[#allocation3 + $0x10] sm:$0xff] %vm549, %v2326
        %v2328 = vld [vmem:[#allocation2 + $0x21] sm:$0xff]
        %v2329 = vld [vmem:[#allocation2 + $0x29] sm:$0xff]
        %v2330 = vpack.c.bf16 %v2329, %v2328
        %2332 = vrot.lane.b32.xlu0 %v2330, 8
        %v2333 = vpop.permute.xlu0 %2332
        %2335 = vst.msk [vmem:[#allocation3 + $0x10] sm:$0xff] %vm670, %v2333
        %v2336 = vld [vmem:[#allocation2 + $0x22] sm:$0xff]
        %v2337 = vld [vmem:[#allocation2 + $0x2a] sm:$0xff]
        %v2338 = vpack.c.bf16 %v2337, %v2336
        %2340 = vrot.lane.b32.xlu0 %v2338, 16
        %v2341 = vpop.permute.xlu0 %2340
        %2343 = vst.msk [vmem:[#allocation3 + $0x10] sm:$0xff] %vm679, %v2341
        %v2344 = vld [vmem:[#allocation2 + $0x23] sm:$0xff]
        %v2345 = vld [vmem:[#allocation2 + $0x2b] sm:$0xff]
        %v2346 = vpack.c.bf16 %v2345, %v2344
        %2348 = vrot.lane.b32.xlu0 %v2346, 24
        %v2349 = vpop.permute.xlu0 %2348
        %2351 = vst.msk [vmem:[#allocation3 + $0x10] sm:$0xff] %vm688, %v2349
        %v2352 = vld [vmem:[#allocation2 + $0x24] sm:$0xff]
        %v2353 = vld [vmem:[#allocation2 + $0x2c] sm:$0xff]
        %v2354 = vpack.c.bf16 %v2353, %v2352
        %2356 = vrot.lane.b32.xlu0 %v2354, 32
        %v2357 = vpop.permute.xlu0 %2356
        %2359 = vst.msk [vmem:[#allocation3 + $0x10] sm:$0xff] %vm697, %v2357
        %v2360 = vld [vmem:[#allocation2 + $0x25] sm:$0xff]
        %v2361 = vld [vmem:[#allocation2 + $0x2d] sm:$0xff]
        %v2362 = vpack.c.bf16 %v2361, %v2360
        %2364 = vrot.lane.b32.xlu0 %v2362, 40
        %v2365 = vpop.permute.xlu0 %2364
        %2367 = vst.msk [vmem:[#allocation3 + $0x10] sm:$0xff] %vm706, %v2365
        %v2368 = vld [vmem:[#allocation2 + $0x26] sm:$0xff]
        %v2369 = vld [vmem:[#allocation2 + $0x2e] sm:$0xff]
        %v2370 = vpack.c.bf16 %v2369, %v2368
        %2372 = vrot.lane.b32.xlu0 %v2370, 48
        %v2373 = vpop.permute.xlu0 %2372
        %2375 = vst.msk [vmem:[#allocation3 + $0x10] sm:$0xff] %vm715, %v2373
        %v2376 = vld [vmem:[#allocation3] sm:$0xff]
        %v2377 = vld [vmem:[#allocation3 + $0x8] sm:$0xff]
        %v2378 = vld [vmem:[#allocation3 + $0x10] sm:$0xff]
        %v2418 = vunpack.c.l.b16 %v2030
        %v2419 = vunpack.c.l.b16 %v2031
        %v2420 = vunpack.c.l.b16 %v2032
        %v2421 = vunpack.c.l.b16 %v2033
        %v2422 = vunpack.c.l.b16 %v2034
        %v2423 = vunpack.c.l.b16 %v2035
        %v2424 = vunpack.c.l.b16 %v2036
        %v2425 = vunpack.c.l.b16 %v2037
        %v2426 = vunpack.c.l.b16 %v2038
        %v2427 = vunpack.c.l.b16 %v2039
        %v2428 = vunpack.c.l.b16 %v2040
        %v2429 = vunpack.c.l.b16 %v2041
        %v2430 = vunpack.c.l.b16 %v2042
        %v2431 = vunpack.c.l.b16 %v2043
        %v2432 = vunpack.c.l.b16 %v2044
        %v2433 = vunpack.c.l.b16 %v2045
        %v2434 = vunpack.c.l.b16 %v2046
        %v2435 = vunpack.c.l.b16 %v2047
        %v2436 = vunpack.c.l.b16 %v2048
        %v2437 = vunpack.c.l.b16 %v2049
        %v2438 = vunpack.c.l.b16 %v2050
        %v2439 = vunpack.c.l.b16 %v2051
        %v2440 = vunpack.c.l.b16 %v2052
        %v2441 = vunpack.c.l.b16 %v2053
        %v2442 = vunpack.c.l.b16 %v2054
        %v2443 = vunpack.c.l.b16 %v2055
        %v2444 = vunpack.c.l.b16 %v2056
        %v2445 = vunpack.c.l.b16 %v2057
        %v2446 = vunpack.c.l.b16 %v2058
        %v2447 = vunpack.c.l.b16 %v2059
        %v2448 = vunpack.c.l.b16 %v2060
        %v2449 = vunpack.c.l.b16 %v2061
        %v2450 = vunpack.c.l.b16 %v2062
        %v2451 = vunpack.c.l.b16 %v2063
        %v2452 = vunpack.c.l.b16 %v2064
        %v2453 = vunpack.c.l.b16 %v2065
        %v2454 = vunpack.c.l.b16 %v2066
        %v2455 = vunpack.c.l.b16 %v2067
        %v2456 = vunpack.c.l.b16 %v2068
        %v2457 = vpack.c.b16 %v2419, %v2418
        %v2458 = vpack.c.b16 %v2421, %v2420
        %v2459 = vpack.c.b16 %v2423, %v2422
        %v2460 = vpack.c.b16 %v2425, %v2424
        %v2461 = vpack.c.b16 %v2427, %v2426
        %v2462 = vpack.c.b16 %v2429, %v2428
        %v2463 = vpack.c.b16 %v2431, %v2430
        %v2464 = vpack.c.b16 %v2433, %v2432
        %v2465 = vpack.c.b16 %v2435, %v2434
        %v2466 = vpack.c.b16 %v2437, %v2436
        %v2467 = vpack.c.b16 %v2439, %v2438
        %v2468 = vpack.c.b16 %v2441, %v2440
        %v2469 = vpack.c.b16 %v2443, %v2442
        %v2470 = vpack.c.b16 %v2445, %v2444
        %v2471 = vpack.c.b16 %v2447, %v2446
        %v2472 = vpack.c.b16 %v2449, %v2448
        %v2473 = vpack.c.b16 %v2451, %v2450
        %v2474 = vpack.c.b16 %v2453, %v2452
        %v2475 = vpack.c.b16 %v2455, %v2454
        %v2476 = vpack.c.b16 %v2456, %v2456
        %v2497 = vsel %vm1094, %v2378, 0
        %v2500 = vsel %vm1098, %v2476, 0
        %2502 = vmatprep.subr.bf16.mxu0 0
        %2503 = vmatpush1.bf16.msra.mxu0 %v2457
        %2504 = vmatprep.subr.bf16.mxu0 0
        %2505 = vmatpush1.bf16.msra.mxu0 %v2458
        %2506 = vmatprep.subr.bf16.mxu0 0
        %2507 = vmatpush1.bf16.msra.mxu0 %v2459
        %2508 = vmatprep.subr.bf16.mxu0 0
        %2509 = vmatpush1.bf16.msra.mxu0 %v2460
        %2510 = vmatprep.subr.bf16.mxu0 0
        %2511 = vmatpush1.bf16.msra.mxu0 %v2461
        %2512 = vmatprep.subr.bf16.mxu0 0
        %2513 = vmatpush1.bf16.msra.mxu0 %v2462
        %2514 = vmatprep.subr.bf16.mxu0 0
        %2515 = vmatpush1.bf16.msra.mxu0 %v2463
        %2516 = vmatprep.subr.bf16.mxu0 0
        %2517 = vmatpush1.bf16.msra.mxu0 %v2464
        %2518 = vmatprep.subr.bf16.mxu0 0
        %2519 = vmatpush1.bf16.msra.mxu0 %v2465
        %2520 = vmatprep.subr.bf16.mxu0 0
        %2521 = vmatpush1.bf16.msra.mxu0 %v2466
        %2522 = vmatprep.subr.bf16.mxu0 0
        %2523 = vmatpush1.bf16.msra.mxu0 %v2467
        %2524 = vmatprep.subr.bf16.mxu0 0
        %2525 = vmatpush1.bf16.msra.mxu0 %v2468
        %2526 = vmatprep.subr.bf16.mxu0 0
        %2527 = vmatpush1.bf16.msra.mxu0 %v2469
        %2528 = vmatprep.subr.bf16.mxu0 0
        %2529 = vmatpush1.bf16.msra.mxu0 %v2470
        %2530 = vmatprep.subr.bf16.mxu0 0
        %2531 = vmatpush1.bf16.msra.mxu0 %v2471
        %2532 = vmatprep.subr.bf16.mxu0 0
        %2533 = vmatpush1.bf16.msra.mxu0 %v2472
        %2534 = vmatprep.mubr.bf16.mxu0 %v2377
        %2535 = vmatmul.mubr.bf16.gmra.mrb[0].mxu0 %v2376
        %v2536 = vpop.f32.mrb[0].mxu0
        %v2537 = vadd.f32 0.0, %v2536
        %v2538 = vpop.f32.mrb[0].mxu0
        %v2539 = vpop.f32.mrb[0].mxu0
        %v2540 = vadd.f32 0.0, %v2539
        %v2541 = vpop.f32.mrb[0].mxu0
        %2542 = vdwg.mxu0
        %2543 = vmatprep.subr.bf16.mxu0 0
        %2544 = vmatpush1.bf16.msra.mxu0 %v2473
        %2545 = vmatprep.subr.bf16.mxu0 0
        %2546 = vmatpush1.bf16.msra.mxu0 %v2474
        %2547 = vmatprep.subr.bf16.mxu0 0
        %2548 = vmatpush1.bf16.msra.mxu0 %v2475
        %2549 = vmatprep.subr.bf16.mxu0 0
        %2550 = vmatpush1.bf16.msra.mxu0 %v2500
        %2551 = vmatprep.subr.bf16.mxu0 0
        %2552 = vmatpush1.bf16.msra.mxu0 0
        %2553 = vmatprep.subr.bf16.mxu0 0
        %2554 = vmatpush1.bf16.msra.mxu0 0
        %2555 = vmatprep.subr.bf16.mxu0 0
        %2556 = vmatpush1.bf16.msra.mxu0 0
        %2557 = vmatprep.subr.bf16.mxu0 0
        %2558 = vmatpush1.bf16.msra.mxu0 0
        %2559 = vmatprep.subr.bf16.mxu0 0
        %2560 = vmatpush1.bf16.msra.mxu0 0
        %2561 = vmatprep.subr.bf16.mxu0 0
        %2562 = vmatpush1.bf16.msra.mxu0 0
        %2563 = vmatprep.subr.bf16.mxu0 0
        %2564 = vmatpush1.bf16.msra.mxu0 0
        %2565 = vmatprep.subr.bf16.mxu0 0
        %2566 = vmatpush1.bf16.msra.mxu0 0
        %2567 = vmatprep.subr.bf16.mxu0 0
        %2568 = vmatpush1.bf16.msra.mxu0 0
        %2569 = vmatprep.subr.bf16.mxu0 0
        %2570 = vmatpush1.bf16.msra.mxu0 0
        %2571 = vmatprep.subr.bf16.mxu0 0
        %2572 = vmatpush1.bf16.msra.mxu0 0
        %2573 = vmatprep.subr.bf16.mxu0 0
        %2574 = vmatpush1.bf16.msra.mxu0 0
        %2575 = vmatprep.mubr.bf16.mxu0 0
        %2576 = vmatmul.mubr.bf16.gmra.mrb[0].mxu0 %v2497
        %v2577 = vpop.f32.mrb[0].mxu0
        %v2578 = vadd.f32 %v2537, %v2577
        %v2579 = vpop.f32.mrb[0].mxu0
        %v2580 = vpop.f32.mrb[0].mxu0
        %v2581 = vadd.f32 %v2540, %v2580
        %v2582 = vpop.f32.mrb[0].mxu0
        %2583 = vdwg.mxu0
        %2584 = vst.msk [vmem:[#allocation4 + $0x1] sm:$0xff] %vm558, %v1967
        %2585 = vst.msk [vmem:[#allocation4 + $0x9] sm:$0xff] %vm558, %v1968
        %v2586 = vld [vmem:[#allocation4] sm:$0xff]
        %v2587 = vld [vmem:[#allocation4 + $0x8] sm:$0xff]
        %v2588 = vld [vmem:[#allocation4 + $0x1] sm:$0xff]
        %v2589 = vld [vmem:[#allocation4 + $0x9] sm:$0xff]
        %v2590 = vmax.f32 %v2586, %v2588
        %v2591 = vmax.f32 %v2587, %v2589
        %v2592 = vld [vmem:[#allocation4 + $0x2] sm:$0xff]
        %v2593 = vld [vmem:[#allocation4 + $0xa] sm:$0xff]
        %v2594 = vmax.f32 %v2590, %v2592
        %v2595 = vmax.f32 %v2591, %v2593
        %v2596 = vpack.c.bf16 %v2595, %v2594
        %v2601 = vunpack.c.l.b16 %v2069
        %v2602 = vunpack.c.l.b16 %v2070
        %v2603 = vunpack.c.l.b16 %v2071
        %v2604 = vunpack.c.l.b16 %v2072
        %v2605 = vpack.c.b16 %v2602, %v2601
        %v2606 = vpack.c.b16 %v2604, %v2603
        %v2610 = vsel %vm558, %v2596, 0
        %2612 = vmatprep.subr.bf16.mxu0 0
        %2613 = vmatpush1.bf16.msra.mxu0 %v2605
        %2614 = vmatprep.subr.bf16.mxu0 0
        %2615 = vmatpush1.bf16.msra.mxu0 %v2606
        %2616 = vmatprep.subr.bf16.mxu0 0
        %2617 = vmatpush1.bf16.msra.mxu0 0
        %2618 = vmatprep.subr.bf16.mxu0 0
        %2619 = vmatpush1.bf16.msra.mxu0 0
        %2620 = vmatprep.subr.bf16.mxu0 0
        %2621 = vmatpush1.bf16.msra.mxu0 0
        %2622 = vmatprep.subr.bf16.mxu0 0
        %2623 = vmatpush1.bf16.msra.mxu0 0
        %2624 = vmatprep.subr.bf16.mxu0 0
        %2625 = vmatpush1.bf16.msra.mxu0 0
        %2626 = vmatprep.subr.bf16.mxu0 0
        %2627 = vmatpush1.bf16.msra.mxu0 0
        %2628 = vmatprep.subr.bf16.mxu0 0
        %2629 = vmatpush1.bf16.msra.mxu0 0
        %2630 = vmatprep.subr.bf16.mxu0 0
        %2631 = vmatpush1.bf16.msra.mxu0 0
        %2632 = vmatprep.subr.bf16.mxu0 0
        %2633 = vmatpush1.bf16.msra.mxu0 0
        %2634 = vmatprep.subr.bf16.mxu0 0
        %2635 = vmatpush1.bf16.msra.mxu0 0
        %2636 = vmatprep.subr.bf16.mxu0 0
        %2637 = vmatpush1.bf16.msra.mxu0 0
        %2638 = vmatprep.subr.bf16.mxu0 0
        %2639 = vmatpush1.bf16.msra.mxu0 0
        %2640 = vmatprep.subr.bf16.mxu0 0
        %2641 = vmatpush1.bf16.msra.mxu0 0
        %2642 = vmatprep.subr.bf16.mxu0 0
        %2643 = vmatpush1.bf16.msra.mxu0 0
        %2644 = vmatprep.mubr.bf16.mxu0 0
        %2645 = vmatmul.mubr.bf16.gmra.mrb[0].mxu0 %v2610
        %v2646 = vpop.f32.mrb[0].mxu0
        %v2647 = vadd.f32 0.0, %v2646
        %v2648 = vpop.f32.mrb[0].mxu0
        %v2649 = vpop.f32.mrb[0].mxu0
        %v2650 = vadd.f32 0.0, %v2649
        %v2651 = vpop.f32.mrb[0].mxu0
        %2652 = vdwg.mxu0
        %2655 = vrot.lane.b32.xlu0 %v2647, 24
        %v2656 = vpop.permute.xlu0 %2655
        %2657 = vrot.lane.b32.xlu0 %v2650, 24
        %v2658 = vpop.permute.xlu0 %2657
        %v2661 = vsel %vm1252, %v2578, %v2656
        %v2662 = vsel %vm1252, %v2581, %v2658
        %v2664 = vlaneseq
        %v2665 = vshrl.u32 %v2664, 7
        %v2666 = vsub.s32 0, %v2665
        %v2667 = vrot.slane %v2073, %v2666
        %v2669 = vadd.f32 %v2661, %v2667
        %v2670 = vadd.f32 %v2662, %v2667
        %v2671 = vmax.f32 %v2669, 0.0
        %v2672 = vmax.f32 %v2670, 0.0
        %2675 = vrot.lane.b32.xlu0 %v610, 120
        %v2676 = vpop.permute.xlu0 %2675
        %2677 = vrot.lane.b32.xlu0 %v613, 120
        %v2678 = vpop.permute.xlu0 %2677
        %v2681 = vadd.f32 %v2671, %v2676
        %v2682 = vadd.f32 %v2672, %v2678
        %v2683 = vld [vmem:[%s13] sm:$0x1]
        %v2685 = vlaneseq
        %v2686 = vshrl.u32 %v2685, 7
        %v2687 = vsub.s32 0, %v2686
        %v2688 = vrot.slane %v2683, %v2687
        %v2690 = vadd.f32 %v2681, %v2688
        %v2691 = vadd.f32 %v2682, %v2688
        %v2692 = vmax.f32 %v2690, 0.0
        %v2693 = vmax.f32 %v2691, 0.0
        %2694 = vst.msk [vmem:[%s542] sm:$0xff] %vm558, %v2692
        %2695 = vst.msk [vmem:[%s542 + $0x8] sm:$0xff] %vm558, %v2693
        %s2696 = sand.u32 %s339, 1
        %s2697 = scalar_lea.sflag [#allocation7], %s2696
        %s2698 = sand.u32 %s339, 1
        %s2699 = smul.addr %s2698, 16
        %s2700 = scalar_lea.vmem [#allocation16], %s2699
        // Predicated region
        $region101: #{_lambda_.1} parent=75 // pred_check
          %p2701 = pneg %p349
        $region102: #{_lambda_.1} parent=75 // pred_check_branch
          %2703 = sbr.rel (%p2701) target = $region104
        $region103: #{_lambda_.1} parent=75 // pred_region
          %s2705 = ssub.s32 256, 256
          %2706 = vsyncadd %s2697, %s2705
          %s2707 = smul.addr %s32, 2
          %s2708 = smul.addr %s2707, 128
          %s2709 = scalar_lea.hbm %s14, %s2708
          %s2710 = sshll.u32 %s2700, 4
          %s2711 = int_to_ptr.vmem [resolvable:$true] %s2710
          %2716 = dma.vmem_to_hbm [thread:$0]  %s2711, 256, %s2709, %s2697, 128, 128, 8
        $region104: #{_lambda_.1} parent=75 // pred_fallthru
          _
      $region76: #{_lambda_.1} parent=5 // pred_fallthru
        _
      %p2717 = scmp.le.s32.totalorder 2, %s27
      // Predicated region
      $region105: #{_lambda_.1} parent=5 // pred_check
        %p2718 = pneg %p2717
      $region106: #{_lambda_.1} parent=5 // pred_check_branch
        %2720 = sbr.rel (%p2718) target = $region108
      $region107: #{_lambda_.1} parent=5 // pred_region
        %s2721 = ssub.s32 %s27, 2
        // Predicated region
        $region109: #{_lambda_.1} parent=107 // pred_check
          %p2722 = pneg %p355
        $region110: #{_lambda_.1} parent=107 // pred_check_branch
          %2724 = sbr.rel (%p2722) target = $region112
        $region111: #{_lambda_.1} parent=107 // pred_region
          %s2725 = sand.u32 %s340, 1
          %s2726 = scalar_lea.sflag [#allocation7], %s2725
          %s2727 = sand.u32 %s340, 1
          %s2728 = smul.addr %s2727, 16
          %s2729 = scalar_lea.vmem [#allocation16], %s2728
          %2730 = dma.done %s2726, 256
        $region112: #{_lambda_.1} parent=107 // pred_fallthru
          _
      $region108: #{_lambda_.1} parent=5 // pred_fallthru
        _
    $region6: #{_lambda_.1} parent=1 // loop_footer
      %s31 = sadd.s32 1, %s27
    $region7: #{_lambda_.1} parent=1 // loop_footer_branch
      %26 = sbr.rel target = $region3
    $region8: #{_lambda_.1} parent=1 // loop_exit
      _
    %2731 = vsyncpa [#allocation6], 1
    %s2732 = scalar_lea.sflag [#allocation6], 1
    %2733 = vsyncpa %s2732, 1
    %2734 = vsyncpa [#allocation9], 1
    %2735 = vsyncpa [#allocation12], 1
    %2736 = vsyncpa [#allocation15], 1
    %2737 = vsyncpa [#allocation7], 1
    %s2738 = scalar_lea.sflag [#allocation7], 1
    %2739 = vsyncpa %s2738, 1

</llo_original>
